<compile_context>
chip_gen: v5e
topology: v5e:2x2
jax: 0.10.0
libtpu: 0.0.40
codegen_flags: <defaults>
</compile_context>

<pallas_src>
import jax
import jax.numpy as jnp
from jax import lax
from jax.experimental import pallas as pl
from jax.experimental.pallas import tpu as pltpu


def _gc_kernel(idx_ref, alpha_ref, emb1_hbm, emb2_hbm,
               w1_ref, b1_ref, w2_ref, b2_ref,
               adj_ref, v1_buf, v2_buf, sem):
    n = v1_buf.shape[0]
    alpha = alpha_ref[0, 0]                      # SMEM scalar

    # ---- Row gather: DMA only the N selected embedding rows HBM -> VMEM. ----
    # Static trip count (N known at trace time); all 2N row-DMAs are issued
    # before any wait so they overlap each other.
    copies = []
    for i in range(n):
        row = idx_ref[i]                         # SMEM scalar read (dynamic row id)
        c1 = pltpu.make_async_copy(emb1_hbm.at[pl.ds(row, 1), :],
                                   v1_buf.at[pl.ds(i, 1), :],
                                   sem.at[0, i])
        c2 = pltpu.make_async_copy(emb2_hbm.at[pl.ds(row, 1), :],
                                   v2_buf.at[pl.ds(i, 1), :],
                                   sem.at[1, i])
        c1.start()
        c2.start()
        copies.append(c1)
        copies.append(c2)
    for c in copies:
        c.wait()

    v1 = v1_buf[...]                             # (N, emb_dim) f32
    v2 = v2_buf[...]

    # Linear layers with PyTorch (out_features, in_features) weight layout:
    # contract dim 1 of activations with dim 1 of weights (no transposes).
    # (Verified intent: at emb_dim <= 128 any RHS layout fixup is at most one
    #  cheap 128x128 XLU transpose; pre-transpose weights if dims ever grow.)
    dn = (((1,), (1,)), ((), ()))
    n1 = jnp.tanh(alpha * (lax.dot_general(v1, w1_ref[...], dn,
                                           preferred_element_type=jnp.float32)
                           + b1_ref[...]))
    n2 = jnp.tanh(alpha * (lax.dot_general(v2, w2_ref[...], dn,
                                           preferred_element_type=jnp.float32)
                           + b2_ref[...]))

    # Skew-symmetric similarity: compute S = n1 @ n2^T once, reuse S^T (XLU).
    s = lax.dot_general(n1, n2, dn, preferred_element_type=jnp.float32)  # (N, N)
    a = s - s.T

    adj_ref[...] = jnp.maximum(jnp.tanh(alpha * a), 0.0)


def gc_module_forward(idx, emb1, emb2, w1, b1, w2, b2, alpha):
    """idx: (N,) int. emb*: (num_nodes, emb_dim). w*: (out, in) PyTorch layout. b*: (out,)."""
    n = int(idx.shape[0])
    num_nodes, emb_dim = emb1.shape
    out_f = int(w1.shape[0])
    assert w1.shape[0] == w2.shape[0], "lin1_out_features must equal lin2_out_features"
    assert w1.shape[1] == emb_dim and w2.shape[1] == emb1.shape[1]

    # Cheap metadata-only prep (no per-call weight transpose, no gather in XLA).
    idx1d = idx.astype(jnp.int32)
    alpha_arr = jnp.full((1, 1), alpha, dtype=jnp.float32)
    b1_r = b1.reshape(1, -1).astype(jnp.float32)
    b2_r = b2.reshape(1, -1).astype(jnp.float32)

    # Explicit scoped-VMEM budget: resident buffers + generous headroom for the
    # compiler's temporaries / pipelining, clamped to stay portable across
    # v5e (16 MiB default) / v6e / v7x (32 MiB default, 64 MiB physical).
    resident_bytes = 4 * (2 * n * emb_dim                       # v1/v2 scratch
                          + int(w1.size) + int(w2.size)
                          + int(b1.size) + int(b2.size)
                          + 2 * n * out_f                       # n1/n2
                          + 3 * n * n)                          # s, s^T, adj
    vmem_limit = int(min(max(8 * resident_bytes, 4 << 20), 64 << 20))

    vmem = lambda: pl.BlockSpec(memory_space=pltpu.MemorySpace.VMEM)
    smem = lambda: pl.BlockSpec(memory_space=pltpu.MemorySpace.SMEM)
    hbm = lambda: pl.BlockSpec(memory_space=pl.ANY)

    adj = pl.pallas_call(
        _gc_kernel,
        out_shape=jax.ShapeDtypeStruct((n, n), jnp.float32),
        in_specs=[
            smem(),   # idx   (N,)        int32, scalar-indexed in kernel
            smem(),   # alpha (1,1)
            hbm(),    # emb1  (num_nodes, emb_dim) stays in HBM; rows DMA'd
            hbm(),    # emb2  (num_nodes, emb_dim)
            vmem(),   # w1    (out, in)
            vmem(),   # b1    (1, out)
            vmem(),   # w2    (out, in)
            vmem(),   # b2    (1, out)
        ],
        out_specs=vmem(),
        scratch_shapes=[
            pltpu.VMEM((n, emb_dim), jnp.float32),   # gathered emb1 rows
            pltpu.VMEM((n, emb_dim), jnp.float32),   # gathered emb2 rows
            pltpu.SemaphoreType.DMA((2, n)),         # per-row DMA semaphores
        ],
        compiler_params=pltpu.CompilerParams(vmem_limit_bytes=vmem_limit),
    )(idx1d, alpha_arr, emb1, emb2, w1, b1_r, w2, b2_r)
    return adj


def _reference(idx, emb1, emb2, w1, b1, w2, b2, alpha):
    v1 = jnp.take(emb1, idx, axis=0)
    v2 = jnp.take(emb2, idx, axis=0)
    n1 = jnp.tanh(alpha * (v1 @ w1.T + b1))
    n2 = jnp.tanh(alpha * (v2 @ w2.T + b2))
    a = n1 @ n2.T - n2 @ n1.T
    return jnp.maximum(jnp.tanh(alpha * a), 0.0)


if __name__ == "__main__":
    # Small, module-consistent shapes (num_nodes != N to exercise the gather,
    # out_features != emb_dim to exercise non-square linears).
    num_nodes = 24
    emb_dim = 32
    lin_in = emb_dim
    lin_out = 48
    n_sel = 16
    alpha = 3.0

    key = jax.random.PRNGKey(0)
    k_e1, k_e2, k_w1, k_b1, k_w2, k_b2, k_idx = jax.random.split(key, 7)

    emb1 = jax.random.normal(k_e1, (num_nodes, emb_dim), jnp.float32)
    emb2 = jax.random.normal(k_e2, (num_nodes, emb_dim), jnp.float32)
    # nn.Linear weight layout: (out_features, in_features)
    w1 = jax.random.normal(k_w1, (lin_out, lin_in), jnp.float32) * 0.1
    b1 = jax.random.normal(k_b1, (lin_out,), jnp.float32) * 0.1
    w2 = jax.random.normal(k_w2, (lin_out, lin_in), jnp.float32) * 0.1
    b2 = jax.random.normal(k_b2, (lin_out,), jnp.float32) * 0.1

    idx = jax.random.randint(k_idx, (n_sel,), 0, num_nodes, dtype=jnp.int32)

    adj = gc_module_forward(idx, emb1, emb2, w1, b1, w2, b2, alpha)
    adj = jax.block_until_ready(adj)

    ref = _reference(idx, emb1, emb2, w1, b1, w2, b2, alpha)
    assert adj.shape == (n_sel, n_sel)
    assert jnp.allclose(adj, ref, atol=1e-5, rtol=1e-5), "mismatch vs reference"

    print("KERNEL_OK")
</pallas_src>

<mosaic_0001>
module attributes {stable_mosaic.version = 11 : i64} {
  func.func @_gc_kernel(%arg0: memref<16xi32, #tpu.memory_space<smem>>, %arg1: memref<1x1xf32, #tpu.memory_space<smem>>, %arg2: memref<24x32xf32, #tpu.memory_space<any>>, %arg3: memref<24x32xf32, #tpu.memory_space<any>>, %arg4: memref<48x32xf32, #tpu.memory_space<vmem>>, %arg5: memref<1x48xf32, #tpu.memory_space<vmem>>, %arg6: memref<48x32xf32, #tpu.memory_space<vmem>>, %arg7: memref<1x48xf32, #tpu.memory_space<vmem>>, %arg8: memref<16x16xf32, #tpu.memory_space<vmem>>, %arg9: memref<16x32xf32, #tpu.memory_space<vmem>>, %arg10: memref<16x32xf32, #tpu.memory_space<vmem>>, %arg11: memref<2x16x!tpu.dma_semaphore, #tpu.memory_space<semaphore_mem>>) attributes {dimension_semantics = [], scalar_prefetch = 0 : i64, scratch_operands = 3 : i64, tpu.core_type = #tpu.core_type<tc>} {
    %c0 = arith.constant 0 : index
    %c0_0 = arith.constant 0 : index
    %0 = memref.load %arg1[%c0, %c0_0] : memref<1x1xf32, #tpu.memory_space<smem>>
    %c0_1 = arith.constant 0 : index
    %1 = memref.load %arg0[%c0_1] : memref<16xi32, #tpu.memory_space<smem>>
    %c0_i32 = arith.constant 0 : i32
    %c0_i32_2 = arith.constant 0 : i32
    %c0_i32_3 = arith.constant 0 : i32
    %2 = tpu.memref_slice %arg2[%1, %c0_i32_3] : memref<24x32xf32, #tpu.memory_space<any>> -> memref<1x32xf32, #tpu.memory_space<any>>
    %c0_i32_4 = arith.constant 0 : i32
    %c0_i32_5 = arith.constant 0 : i32
    %3 = tpu.memref_slice %arg9[%c0_i32_4, %c0_i32_5] : memref<16x32xf32, #tpu.memory_space<vmem>> -> memref<1x32xf32, #tpu.memory_space<vmem>>
    %4 = tpu.memref_slice %arg11[%c0_i32, %c0_i32_2] : memref<2x16x!tpu.dma_semaphore, #tpu.memory_space<semaphore_mem>> -> memref<1x1x!tpu.dma_semaphore, #tpu.memory_space<semaphore_mem>>
    %5 = tpu.memref_squeeze %4 : memref<1x1x!tpu.dma_semaphore, #tpu.memory_space<semaphore_mem>> -> memref<!tpu.dma_semaphore, #tpu.memory_space<semaphore_mem>>
    tpu.enqueue_dma source(%2 : memref<1x32xf32, #tpu.memory_space<any>>) target(%3 : memref<1x32xf32, #tpu.memory_space<vmem>>) target_semaphore(%5 : memref<!tpu.dma_semaphore, #tpu.memory_space<semaphore_mem>>)
    %c1_i32 = arith.constant 1 : i32
    %c0_i32_6 = arith.constant 0 : i32
    %c0_i32_7 = arith.constant 0 : i32
    %6 = tpu.memref_slice %arg3[%1, %c0_i32_7] : memref<24x32xf32, #tpu.memory_space<any>> -> memref<1x32xf32, #tpu.memory_space<any>>
    %c0_i32_8 = arith.constant 0 : i32
    %c0_i32_9 = arith.constant 0 : i32
    %7 = tpu.memref_slice %arg10[%c0_i32_8, %c0_i32_9] : memref<16x32xf32, #tpu.memory_space<vmem>> -> memref<1x32xf32, #tpu.memory_space<vmem>>
    %8 = tpu.memref_slice %arg11[%c1_i32, %c0_i32_6] : memref<2x16x!tpu.dma_semaphore, #tpu.memory_space<semaphore_mem>> -> memref<1x1x!tpu.dma_semaphore, #tpu.memory_space<semaphore_mem>>
    %9 = tpu.memref_squeeze %8 : memref<1x1x!tpu.dma_semaphore, #tpu.memory_space<semaphore_mem>> -> memref<!tpu.dma_semaphore, #tpu.memory_space<semaphore_mem>>
    tpu.enqueue_dma source(%6 : memref<1x32xf32, #tpu.memory_space<any>>) target(%7 : memref<1x32xf32, #tpu.memory_space<vmem>>) target_semaphore(%9 : memref<!tpu.dma_semaphore, #tpu.memory_space<semaphore_mem>>)
    %c1 = arith.constant 1 : index
    %10 = memref.load %arg0[%c1] : memref<16xi32, #tpu.memory_space<smem>>
    %c0_i32_10 = arith.constant 0 : i32
    %c1_i32_11 = arith.constant 1 : i32
    %c0_i32_12 = arith.constant 0 : i32
    %11 = tpu.memref_slice %arg2[%10, %c0_i32_12] : memref<24x32xf32, #tpu.memory_space<any>> -> memref<1x32xf32, #tpu.memory_space<any>>
    %c1_i32_13 = arith.constant 1 : i32
    %c0_i32_14 = arith.constant 0 : i32
    %12 = tpu.memref_slice %arg9[%c1_i32_13, %c0_i32_14] : memref<16x32xf32, #tpu.memory_space<vmem>> -> memref<1x32xf32, #tpu.memory_space<vmem>>
    %13 = tpu.memref_slice %arg11[%c0_i32_10, %c1_i32_11] : memref<2x16x!tpu.dma_semaphore, #tpu.memory_space<semaphore_mem>> -> memref<1x1x!tpu.dma_semaphore, #tpu.memory_space<semaphore_mem>>
    %14 = tpu.memref_squeeze %13 : memref<1x1x!tpu.dma_semaphore, #tpu.memory_space<semaphore_mem>> -> memref<!tpu.dma_semaphore, #tpu.memory_space<semaphore_mem>>
    tpu.enqueue_dma source(%11 : memref<1x32xf32, #tpu.memory_space<any>>) target(%12 : memref<1x32xf32, #tpu.memory_space<vmem>>) target_semaphore(%14 : memref<!tpu.dma_semaphore, #tpu.memory_space<semaphore_mem>>)
    %c1_i32_15 = arith.constant 1 : i32
    %c1_i32_16 = arith.constant 1 : i32
    %c0_i32_17 = arith.constant 0 : i32
    %15 = tpu.memref_slice %arg3[%10, %c0_i32_17] : memref<24x32xf32, #tpu.memory_space<any>> -> memref<1x32xf32, #tpu.memory_space<any>>
    %c1_i32_18 = arith.constant 1 : i32
    %c0_i32_19 = arith.constant 0 : i32
    %16 = tpu.memref_slice %arg10[%c1_i32_18, %c0_i32_19] : memref<16x32xf32, #tpu.memory_space<vmem>> -> memref<1x32xf32, #tpu.memory_space<vmem>>
    %17 = tpu.memref_slice %arg11[%c1_i32_15, %c1_i32_16] : memref<2x16x!tpu.dma_semaphore, #tpu.memory_space<semaphore_mem>> -> memref<1x1x!tpu.dma_semaphore, #tpu.memory_space<semaphore_mem>>
    %18 = tpu.memref_squeeze %17 : memref<1x1x!tpu.dma_semaphore, #tpu.memory_space<semaphore_mem>> -> memref<!tpu.dma_semaphore, #tpu.memory_space<semaphore_mem>>
    tpu.enqueue_dma source(%15 : memref<1x32xf32, #tpu.memory_space<any>>) target(%16 : memref<1x32xf32, #tpu.memory_space<vmem>>) target_semaphore(%18 : memref<!tpu.dma_semaphore, #tpu.memory_space<semaphore_mem>>)
    %c2 = arith.constant 2 : index
    %19 = memref.load %arg0[%c2] : memref<16xi32, #tpu.memory_space<smem>>
    %c0_i32_20 = arith.constant 0 : i32
    %c2_i32 = arith.constant 2 : i32
    %c0_i32_21 = arith.constant 0 : i32
    %20 = tpu.memref_slice %arg2[%19, %c0_i32_21] : memref<24x32xf32, #tpu.memory_space<any>> -> memref<1x32xf32, #tpu.memory_space<any>>
    %c2_i32_22 = arith.constant 2 : i32
    %c0_i32_23 = arith.constant 0 : i32
    %21 = tpu.memref_slice %arg9[%c2_i32_22, %c0_i32_23] : memref<16x32xf32, #tpu.memory_space<vmem>> -> memref<1x32xf32, #tpu.memory_space<vmem>>
    %22 = tpu.memref_slice %arg11[%c0_i32_20, %c2_i32] : memref<2x16x!tpu.dma_semaphore, #tpu.memory_space<semaphore_mem>> -> memref<1x1x!tpu.dma_semaphore, #tpu.memory_space<semaphore_mem>>
    %23 = tpu.memref_squeeze %22 : memref<1x1x!tpu.dma_semaphore, #tpu.memory_space<semaphore_mem>> -> memref<!tpu.dma_semaphore, #tpu.memory_space<semaphore_mem>>
    tpu.enqueue_dma source(%20 : memref<1x32xf32, #tpu.memory_space<any>>) target(%21 : memref<1x32xf32, #tpu.memory_space<vmem>>) target_semaphore(%23 : memref<!tpu.dma_semaphore, #tpu.memory_space<semaphore_mem>>)
    %c1_i32_24 = arith.constant 1 : i32
    %c2_i32_25 = arith.constant 2 : i32
    %c0_i32_26 = arith.constant 0 : i32
    %24 = tpu.memref_slice %arg3[%19, %c0_i32_26] : memref<24x32xf32, #tpu.memory_space<any>> -> memref<1x32xf32, #tpu.memory_space<any>>
    %c2_i32_27 = arith.constant 2 : i32
    %c0_i32_28 = arith.constant 0 : i32
    %25 = tpu.memref_slice %arg10[%c2_i32_27, %c0_i32_28] : memref<16x32xf32, #tpu.memory_space<vmem>> -> memref<1x32xf32, #tpu.memory_space<vmem>>
    %26 = tpu.memref_slice %arg11[%c1_i32_24, %c2_i32_25] : memref<2x16x!tpu.dma_semaphore, #tpu.memory_space<semaphore_mem>> -> memref<1x1x!tpu.dma_semaphore, #tpu.memory_space<semaphore_mem>>
    %27 = tpu.memref_squeeze %26 : memref<1x1x!tpu.dma_semaphore, #tpu.memory_space<semaphore_mem>> -> memref<!tpu.dma_semaphore, #tpu.memory_space<semaphore_mem>>
    tpu.enqueue_dma source(%24 : memref<1x32xf32, #tpu.memory_space<any>>) target(%25 : memref<1x32xf32, #tpu.memory_space<vmem>>) target_semaphore(%27 : memref<!tpu.dma_semaphore, #tpu.memory_space<semaphore_mem>>)
    %c3 = arith.constant 3 : index
    %28 = memref.load %arg0[%c3] : memref<16xi32, #tpu.memory_space<smem>>
    %c0_i32_29 = arith.constant 0 : i32
    %c3_i32 = arith.constant 3 : i32
    %c0_i32_30 = arith.constant 0 : i32
    %29 = tpu.memref_slice %arg2[%28, %c0_i32_30] : memref<24x32xf32, #tpu.memory_space<any>> -> memref<1x32xf32, #tpu.memory_space<any>>
    %c3_i32_31 = arith.constant 3 : i32
    %c0_i32_32 = arith.constant 0 : i32
    %30 = tpu.memref_slice %arg9[%c3_i32_31, %c0_i32_32] : memref<16x32xf32, #tpu.memory_space<vmem>> -> memref<1x32xf32, #tpu.memory_space<vmem>>
    %31 = tpu.memref_slice %arg11[%c0_i32_29, %c3_i32] : memref<2x16x!tpu.dma_semaphore, #tpu.memory_space<semaphore_mem>> -> memref<1x1x!tpu.dma_semaphore, #tpu.memory_space<semaphore_mem>>
    %32 = tpu.memref_squeeze %31 : memref<1x1x!tpu.dma_semaphore, #tpu.memory_space<semaphore_mem>> -> memref<!tpu.dma_semaphore, #tpu.memory_space<semaphore_mem>>
    tpu.enqueue_dma source(%29 : memref<1x32xf32, #tpu.memory_space<any>>) target(%30 : memref<1x32xf32, #tpu.memory_space<vmem>>) target_semaphore(%32 : memref<!tpu.dma_semaphore, #tpu.memory_space<semaphore_mem>>)
    %c1_i32_33 = arith.constant 1 : i32
    %c3_i32_34 = arith.constant 3 : i32
    %c0_i32_35 = arith.constant 0 : i32
    %33 = tpu.memref_slice %arg3[%28, %c0_i32_35] : memref<24x32xf32, #tpu.memory_space<any>> -> memref<1x32xf32, #tpu.memory_space<any>>
    %c3_i32_36 = arith.constant 3 : i32
    %c0_i32_37 = arith.constant 0 : i32
    %34 = tpu.memref_slice %arg10[%c3_i32_36, %c0_i32_37] : memref<16x32xf32, #tpu.memory_space<vmem>> -> memref<1x32xf32, #tpu.memory_space<vmem>>
    %35 = tpu.memref_slice %arg11[%c1_i32_33, %c3_i32_34] : memref<2x16x!tpu.dma_semaphore, #tpu.memory_space<semaphore_mem>> -> memref<1x1x!tpu.dma_semaphore, #tpu.memory_space<semaphore_mem>>
    %36 = tpu.memref_squeeze %35 : memref<1x1x!tpu.dma_semaphore, #tpu.memory_space<semaphore_mem>> -> memref<!tpu.dma_semaphore, #tpu.memory_space<semaphore_mem>>
    tpu.enqueue_dma source(%33 : memref<1x32xf32, #tpu.memory_space<any>>) target(%34 : memref<1x32xf32, #tpu.memory_space<vmem>>) target_semaphore(%36 : memref<!tpu.dma_semaphore, #tpu.memory_space<semaphore_mem>>)
    %c4 = arith.constant 4 : index
    %37 = memref.load %arg0[%c4] : memref<16xi32, #tpu.memory_space<smem>>
    %c0_i32_38 = arith.constant 0 : i32
    %c4_i32 = arith.constant 4 : i32
    %c0_i32_39 = arith.constant 0 : i32
    %38 = tpu.memref_slice %arg2[%37, %c0_i32_39] : memref<24x32xf32, #tpu.memory_space<any>> -> memref<1x32xf32, #tpu.memory_space<any>>
    %c4_i32_40 = arith.constant 4 : i32
    %c0_i32_41 = arith.constant 0 : i32
    %39 = tpu.memref_slice %arg9[%c4_i32_40, %c0_i32_41] : memref<16x32xf32, #tpu.memory_space<vmem>> -> memref<1x32xf32, #tpu.memory_space<vmem>>
    %40 = tpu.memref_slice %arg11[%c0_i32_38, %c4_i32] : memref<2x16x!tpu.dma_semaphore, #tpu.memory_space<semaphore_mem>> -> memref<1x1x!tpu.dma_semaphore, #tpu.memory_space<semaphore_mem>>
    %41 = tpu.memref_squeeze %40 : memref<1x1x!tpu.dma_semaphore, #tpu.memory_space<semaphore_mem>> -> memref<!tpu.dma_semaphore, #tpu.memory_space<semaphore_mem>>
    tpu.enqueue_dma source(%38 : memref<1x32xf32, #tpu.memory_space<any>>) target(%39 : memref<1x32xf32, #tpu.memory_space<vmem>>) target_semaphore(%41 : memref<!tpu.dma_semaphore, #tpu.memory_space<semaphore_mem>>)
    %c1_i32_42 = arith.constant 1 : i32
    %c4_i32_43 = arith.constant 4 : i32
    %c0_i32_44 = arith.constant 0 : i32
    %42 = tpu.memref_slice %arg3[%37, %c0_i32_44] : memref<24x32xf32, #tpu.memory_space<any>> -> memref<1x32xf32, #tpu.memory_space<any>>
    %c4_i32_45 = arith.constant 4 : i32
    %c0_i32_46 = arith.constant 0 : i32
    %43 = tpu.memref_slice %arg10[%c4_i32_45, %c0_i32_46] : memref<16x32xf32, #tpu.memory_space<vmem>> -> memref<1x32xf32, #tpu.memory_space<vmem>>
    %44 = tpu.memref_slice %arg11[%c1_i32_42, %c4_i32_43] : memref<2x16x!tpu.dma_semaphore, #tpu.memory_space<semaphore_mem>> -> memref<1x1x!tpu.dma_semaphore, #tpu.memory_space<semaphore_mem>>
    %45 = tpu.memref_squeeze %44 : memref<1x1x!tpu.dma_semaphore, #tpu.memory_space<semaphore_mem>> -> memref<!tpu.dma_semaphore, #tpu.memory_space<semaphore_mem>>
    tpu.enqueue_dma source(%42 : memref<1x32xf32, #tpu.memory_space<any>>) target(%43 : memref<1x32xf32, #tpu.memory_space<vmem>>) target_semaphore(%45 : memref<!tpu.dma_semaphore, #tpu.memory_space<semaphore_mem>>)
    %c5 = arith.constant 5 : index
    %46 = memref.load %arg0[%c5] : memref<16xi32, #tpu.memory_space<smem>>
    %c0_i32_47 = arith.constant 0 : i32
    %c5_i32 = arith.constant 5 : i32
    %c0_i32_48 = arith.constant 0 : i32
    %47 = tpu.memref_slice %arg2[%46, %c0_i32_48] : memref<24x32xf32, #tpu.memory_space<any>> -> memref<1x32xf32, #tpu.memory_space<any>>
    %c5_i32_49 = arith.constant 5 : i32
    %c0_i32_50 = arith.constant 0 : i32
    %48 = tpu.memref_slice %arg9[%c5_i32_49, %c0_i32_50] : memref<16x32xf32, #tpu.memory_space<vmem>> -> memref<1x32xf32, #tpu.memory_space<vmem>>
    %49 = tpu.memref_slice %arg11[%c0_i32_47, %c5_i32] : memref<2x16x!tpu.dma_semaphore, #tpu.memory_space<semaphore_mem>> -> memref<1x1x!tpu.dma_semaphore, #tpu.memory_space<semaphore_mem>>
    %50 = tpu.memref_squeeze %49 : memref<1x1x!tpu.dma_semaphore, #tpu.memory_space<semaphore_mem>> -> memref<!tpu.dma_semaphore, #tpu.memory_space<semaphore_mem>>
    tpu.enqueue_dma source(%47 : memref<1x32xf32, #tpu.memory_space<any>>) target(%48 : memref<1x32xf32, #tpu.memory_space<vmem>>) target_semaphore(%50 : memref<!tpu.dma_semaphore, #tpu.memory_space<semaphore_mem>>)
    %c1_i32_51 = arith.constant 1 : i32
    %c5_i32_52 = arith.constant 5 : i32
    %c0_i32_53 = arith.constant 0 : i32
    %51 = tpu.memref_slice %arg3[%46, %c0_i32_53] : memref<24x32xf32, #tpu.memory_space<any>> -> memref<1x32xf32, #tpu.memory_space<any>>
    %c5_i32_54 = arith.constant 5 : i32
    %c0_i32_55 = arith.constant 0 : i32
    %52 = tpu.memref_slice %arg10[%c5_i32_54, %c0_i32_55] : memref<16x32xf32, #tpu.memory_space<vmem>> -> memref<1x32xf32, #tpu.memory_space<vmem>>
    %53 = tpu.memref_slice %arg11[%c1_i32_51, %c5_i32_52] : memref<2x16x!tpu.dma_semaphore, #tpu.memory_space<semaphore_mem>> -> memref<1x1x!tpu.dma_semaphore, #tpu.memory_space<semaphore_mem>>
    %54 = tpu.memref_squeeze %53 : memref<1x1x!tpu.dma_semaphore, #tpu.memory_space<semaphore_mem>> -> memref<!tpu.dma_semaphore, #tpu.memory_space<semaphore_mem>>
    tpu.enqueue_dma source(%51 : memref<1x32xf32, #tpu.memory_space<any>>) target(%52 : memref<1x32xf32, #tpu.memory_space<vmem>>) target_semaphore(%54 : memref<!tpu.dma_semaphore, #tpu.memory_space<semaphore_mem>>)
    %c6 = arith.constant 6 : index
    %55 = memref.load %arg0[%c6] : memref<16xi32, #tpu.memory_space<smem>>
    %c0_i32_56 = arith.constant 0 : i32
    %c6_i32 = arith.constant 6 : i32
    %c0_i32_57 = arith.constant 0 : i32
    %56 = tpu.memref_slice %arg2[%55, %c0_i32_57] : memref<24x32xf32, #tpu.memory_space<any>> -> memref<1x32xf32, #tpu.memory_space<any>>
    %c6_i32_58 = arith.constant 6 : i32
    %c0_i32_59 = arith.constant 0 : i32
    %57 = tpu.memref_slice %arg9[%c6_i32_58, %c0_i32_59] : memref<16x32xf32, #tpu.memory_space<vmem>> -> memref<1x32xf32, #tpu.memory_space<vmem>>
    %58 = tpu.memref_slice %arg11[%c0_i32_56, %c6_i32] : memref<2x16x!tpu.dma_semaphore, #tpu.memory_space<semaphore_mem>> -> memref<1x1x!tpu.dma_semaphore, #tpu.memory_space<semaphore_mem>>
    %59 = tpu.memref_squeeze %58 : memref<1x1x!tpu.dma_semaphore, #tpu.memory_space<semaphore_mem>> -> memref<!tpu.dma_semaphore, #tpu.memory_space<semaphore_mem>>
    tpu.enqueue_dma source(%56 : memref<1x32xf32, #tpu.memory_space<any>>) target(%57 : memref<1x32xf32, #tpu.memory_space<vmem>>) target_semaphore(%59 : memref<!tpu.dma_semaphore, #tpu.memory_space<semaphore_mem>>)
    %c1_i32_60 = arith.constant 1 : i32
    %c6_i32_61 = arith.constant 6 : i32
    %c0_i32_62 = arith.constant 0 : i32
    %60 = tpu.memref_slice %arg3[%55, %c0_i32_62] : memref<24x32xf32, #tpu.memory_space<any>> -> memref<1x32xf32, #tpu.memory_space<any>>
    %c6_i32_63 = arith.constant 6 : i32
    %c0_i32_64 = arith.constant 0 : i32
    %61 = tpu.memref_slice %arg10[%c6_i32_63, %c0_i32_64] : memref<16x32xf32, #tpu.memory_space<vmem>> -> memref<1x32xf32, #tpu.memory_space<vmem>>
    %62 = tpu.memref_slice %arg11[%c1_i32_60, %c6_i32_61] : memref<2x16x!tpu.dma_semaphore, #tpu.memory_space<semaphore_mem>> -> memref<1x1x!tpu.dma_semaphore, #tpu.memory_space<semaphore_mem>>
    %63 = tpu.memref_squeeze %62 : memref<1x1x!tpu.dma_semaphore, #tpu.memory_space<semaphore_mem>> -> memref<!tpu.dma_semaphore, #tpu.memory_space<semaphore_mem>>
    tpu.enqueue_dma source(%60 : memref<1x32xf32, #tpu.memory_space<any>>) target(%61 : memref<1x32xf32, #tpu.memory_space<vmem>>) target_semaphore(%63 : memref<!tpu.dma_semaphore, #tpu.memory_space<semaphore_mem>>)
    %c7 = arith.constant 7 : index
    %64 = memref.load %arg0[%c7] : memref<16xi32, #tpu.memory_space<smem>>
    %c0_i32_65 = arith.constant 0 : i32
    %c7_i32 = arith.constant 7 : i32
    %c0_i32_66 = arith.constant 0 : i32
    %65 = tpu.memref_slice %arg2[%64, %c0_i32_66] : memref<24x32xf32, #tpu.memory_space<any>> -> memref<1x32xf32, #tpu.memory_space<any>>
    %c7_i32_67 = arith.constant 7 : i32
    %c0_i32_68 = arith.constant 0 : i32
    %66 = tpu.memref_slice %arg9[%c7_i32_67, %c0_i32_68] : memref<16x32xf32, #tpu.memory_space<vmem>> -> memref<1x32xf32, #tpu.memory_space<vmem>>
    %67 = tpu.memref_slice %arg11[%c0_i32_65, %c7_i32] : memref<2x16x!tpu.dma_semaphore, #tpu.memory_space<semaphore_mem>> -> memref<1x1x!tpu.dma_semaphore, #tpu.memory_space<semaphore_mem>>
    %68 = tpu.memref_squeeze %67 : memref<1x1x!tpu.dma_semaphore, #tpu.memory_space<semaphore_mem>> -> memref<!tpu.dma_semaphore, #tpu.memory_space<semaphore_mem>>
    tpu.enqueue_dma source(%65 : memref<1x32xf32, #tpu.memory_space<any>>) target(%66 : memref<1x32xf32, #tpu.memory_space<vmem>>) target_semaphore(%68 : memref<!tpu.dma_semaphore, #tpu.memory_space<semaphore_mem>>)
    %c1_i32_69 = arith.constant 1 : i32
    %c7_i32_70 = arith.constant 7 : i32
    %c0_i32_71 = arith.constant 0 : i32
    %69 = tpu.memref_slice %arg3[%64, %c0_i32_71] : memref<24x32xf32, #tpu.memory_space<any>> -> memref<1x32xf32, #tpu.memory_space<any>>
    %c7_i32_72 = arith.constant 7 : i32
    %c0_i32_73 = arith.constant 0 : i32
    %70 = tpu.memref_slice %arg10[%c7_i32_72, %c0_i32_73] : memref<16x32xf32, #tpu.memory_space<vmem>> -> memref<1x32xf32, #tpu.memory_space<vmem>>
    %71 = tpu.memref_slice %arg11[%c1_i32_69, %c7_i32_70] : memref<2x16x!tpu.dma_semaphore, #tpu.memory_space<semaphore_mem>> -> memref<1x1x!tpu.dma_semaphore, #tpu.memory_space<semaphore_mem>>
    %72 = tpu.memref_squeeze %71 : memref<1x1x!tpu.dma_semaphore, #tpu.memory_space<semaphore_mem>> -> memref<!tpu.dma_semaphore, #tpu.memory_space<semaphore_mem>>
    tpu.enqueue_dma source(%69 : memref<1x32xf32, #tpu.memory_space<any>>) target(%70 : memref<1x32xf32, #tpu.memory_space<vmem>>) target_semaphore(%72 : memref<!tpu.dma_semaphore, #tpu.memory_space<semaphore_mem>>)
    %c8 = arith.constant 8 : index
    %73 = memref.load %arg0[%c8] : memref<16xi32, #tpu.memory_space<smem>>
    %c0_i32_74 = arith.constant 0 : i32
    %c8_i32 = arith.constant 8 : i32
    %c0_i32_75 = arith.constant 0 : i32
    %74 = tpu.memref_slice %arg2[%73, %c0_i32_75] : memref<24x32xf32, #tpu.memory_space<any>> -> memref<1x32xf32, #tpu.memory_space<any>>
    %c8_i32_76 = arith.constant 8 : i32
    %c0_i32_77 = arith.constant 0 : i32
    %75 = tpu.memref_slice %arg9[%c8_i32_76, %c0_i32_77] : memref<16x32xf32, #tpu.memory_space<vmem>> -> memref<1x32xf32, #tpu.memory_space<vmem>>
    %76 = tpu.memref_slice %arg11[%c0_i32_74, %c8_i32] : memref<2x16x!tpu.dma_semaphore, #tpu.memory_space<semaphore_mem>> -> memref<1x1x!tpu.dma_semaphore, #tpu.memory_space<semaphore_mem>>
    %77 = tpu.memref_squeeze %76 : memref<1x1x!tpu.dma_semaphore, #tpu.memory_space<semaphore_mem>> -> memref<!tpu.dma_semaphore, #tpu.memory_space<semaphore_mem>>
    tpu.enqueue_dma source(%74 : memref<1x32xf32, #tpu.memory_space<any>>) target(%75 : memref<1x32xf32, #tpu.memory_space<vmem>>) target_semaphore(%77 : memref<!tpu.dma_semaphore, #tpu.memory_space<semaphore_mem>>)
    %c1_i32_78 = arith.constant 1 : i32
    %c8_i32_79 = arith.constant 8 : i32
    %c0_i32_80 = arith.constant 0 : i32
    %78 = tpu.memref_slice %arg3[%73, %c0_i32_80] : memref<24x32xf32, #tpu.memory_space<any>> -> memref<1x32xf32, #tpu.memory_space<any>>
    %c8_i32_81 = arith.constant 8 : i32
    %c0_i32_82 = arith.constant 0 : i32
    %79 = tpu.memref_slice %arg10[%c8_i32_81, %c0_i32_82] : memref<16x32xf32, #tpu.memory_space<vmem>> -> memref<1x32xf32, #tpu.memory_space<vmem>>
    %80 = tpu.memref_slice %arg11[%c1_i32_78, %c8_i32_79] : memref<2x16x!tpu.dma_semaphore, #tpu.memory_space<semaphore_mem>> -> memref<1x1x!tpu.dma_semaphore, #tpu.memory_space<semaphore_mem>>
    %81 = tpu.memref_squeeze %80 : memref<1x1x!tpu.dma_semaphore, #tpu.memory_space<semaphore_mem>> -> memref<!tpu.dma_semaphore, #tpu.memory_space<semaphore_mem>>
    tpu.enqueue_dma source(%78 : memref<1x32xf32, #tpu.memory_space<any>>) target(%79 : memref<1x32xf32, #tpu.memory_space<vmem>>) target_semaphore(%81 : memref<!tpu.dma_semaphore, #tpu.memory_space<semaphore_mem>>)
    %c9 = arith.constant 9 : index
    %82 = memref.load %arg0[%c9] : memref<16xi32, #tpu.memory_space<smem>>
    %c0_i32_83 = arith.constant 0 : i32
    %c9_i32 = arith.constant 9 : i32
    %c0_i32_84 = arith.constant 0 : i32
    %83 = tpu.memref_slice %arg2[%82, %c0_i32_84] : memref<24x32xf32, #tpu.memory_space<any>> -> memref<1x32xf32, #tpu.memory_space<any>>
    %c9_i32_85 = arith.constant 9 : i32
    %c0_i32_86 = arith.constant 0 : i32
    %84 = tpu.memref_slice %arg9[%c9_i32_85, %c0_i32_86] : memref<16x32xf32, #tpu.memory_space<vmem>> -> memref<1x32xf32, #tpu.memory_space<vmem>>
    %85 = tpu.memref_slice %arg11[%c0_i32_83, %c9_i32] : memref<2x16x!tpu.dma_semaphore, #tpu.memory_space<semaphore_mem>> -> memref<1x1x!tpu.dma_semaphore, #tpu.memory_space<semaphore_mem>>
    %86 = tpu.memref_squeeze %85 : memref<1x1x!tpu.dma_semaphore, #tpu.memory_space<semaphore_mem>> -> memref<!tpu.dma_semaphore, #tpu.memory_space<semaphore_mem>>
    tpu.enqueue_dma source(%83 : memref<1x32xf32, #tpu.memory_space<any>>) target(%84 : memref<1x32xf32, #tpu.memory_space<vmem>>) target_semaphore(%86 : memref<!tpu.dma_semaphore, #tpu.memory_space<semaphore_mem>>)
    %c1_i32_87 = arith.constant 1 : i32
    %c9_i32_88 = arith.constant 9 : i32
    %c0_i32_89 = arith.constant 0 : i32
    %87 = tpu.memref_slice %arg3[%82, %c0_i32_89] : memref<24x32xf32, #tpu.memory_space<any>> -> memref<1x32xf32, #tpu.memory_space<any>>
    %c9_i32_90 = arith.constant 9 : i32
    %c0_i32_91 = arith.constant 0 : i32
    %88 = tpu.memref_slice %arg10[%c9_i32_90, %c0_i32_91] : memref<16x32xf32, #tpu.memory_space<vmem>> -> memref<1x32xf32, #tpu.memory_space<vmem>>
    %89 = tpu.memref_slice %arg11[%c1_i32_87, %c9_i32_88] : memref<2x16x!tpu.dma_semaphore, #tpu.memory_space<semaphore_mem>> -> memref<1x1x!tpu.dma_semaphore, #tpu.memory_space<semaphore_mem>>
    %90 = tpu.memref_squeeze %89 : memref<1x1x!tpu.dma_semaphore, #tpu.memory_space<semaphore_mem>> -> memref<!tpu.dma_semaphore, #tpu.memory_space<semaphore_mem>>
    tpu.enqueue_dma source(%87 : memref<1x32xf32, #tpu.memory_space<any>>) target(%88 : memref<1x32xf32, #tpu.memory_space<vmem>>) target_semaphore(%90 : memref<!tpu.dma_semaphore, #tpu.memory_space<semaphore_mem>>)
    %c10 = arith.constant 10 : index
    %91 = memref.load %arg0[%c10] : memref<16xi32, #tpu.memory_space<smem>>
    %c0_i32_92 = arith.constant 0 : i32
    %c10_i32 = arith.constant 10 : i32
    %c0_i32_93 = arith.constant 0 : i32
    %92 = tpu.memref_slice %arg2[%91, %c0_i32_93] : memref<24x32xf32, #tpu.memory_space<any>> -> memref<1x32xf32, #tpu.memory_space<any>>
    %c10_i32_94 = arith.constant 10 : i32
    %c0_i32_95 = arith.constant 0 : i32
    %93 = tpu.memref_slice %arg9[%c10_i32_94, %c0_i32_95] : memref<16x32xf32, #tpu.memory_space<vmem>> -> memref<1x32xf32, #tpu.memory_space<vmem>>
    %94 = tpu.memref_slice %arg11[%c0_i32_92, %c10_i32] : memref<2x16x!tpu.dma_semaphore, #tpu.memory_space<semaphore_mem>> -> memref<1x1x!tpu.dma_semaphore, #tpu.memory_space<semaphore_mem>>
    %95 = tpu.memref_squeeze %94 : memref<1x1x!tpu.dma_semaphore, #tpu.memory_space<semaphore_mem>> -> memref<!tpu.dma_semaphore, #tpu.memory_space<semaphore_mem>>
    tpu.enqueue_dma source(%92 : memref<1x32xf32, #tpu.memory_space<any>>) target(%93 : memref<1x32xf32, #tpu.memory_space<vmem>>) target_semaphore(%95 : memref<!tpu.dma_semaphore, #tpu.memory_space<semaphore_mem>>)
    %c1_i32_96 = arith.constant 1 : i32
    %c10_i32_97 = arith.constant 10 : i32
    %c0_i32_98 = arith.constant 0 : i32
    %96 = tpu.memref_slice %arg3[%91, %c0_i32_98] : memref<24x32xf32, #tpu.memory_space<any>> -> memref<1x32xf32, #tpu.memory_space<any>>
    %c10_i32_99 = arith.constant 10 : i32
    %c0_i32_100 = arith.constant 0 : i32
    %97 = tpu.memref_slice %arg10[%c10_i32_99, %c0_i32_100] : memref<16x32xf32, #tpu.memory_space<vmem>> -> memref<1x32xf32, #tpu.memory_space<vmem>>
    %98 = tpu.memref_slice %arg11[%c1_i32_96, %c10_i32_97] : memref<2x16x!tpu.dma_semaphore, #tpu.memory_space<semaphore_mem>> -> memref<1x1x!tpu.dma_semaphore, #tpu.memory_space<semaphore_mem>>
    %99 = tpu.memref_squeeze %98 : memref<1x1x!tpu.dma_semaphore, #tpu.memory_space<semaphore_mem>> -> memref<!tpu.dma_semaphore, #tpu.memory_space<semaphore_mem>>
    tpu.enqueue_dma source(%96 : memref<1x32xf32, #tpu.memory_space<any>>) target(%97 : memref<1x32xf32, #tpu.memory_space<vmem>>) target_semaphore(%99 : memref<!tpu.dma_semaphore, #tpu.memory_space<semaphore_mem>>)
    %c11 = arith.constant 11 : index
    %100 = memref.load %arg0[%c11] : memref<16xi32, #tpu.memory_space<smem>>
    %c0_i32_101 = arith.constant 0 : i32
    %c11_i32 = arith.constant 11 : i32
    %c0_i32_102 = arith.constant 0 : i32
    %101 = tpu.memref_slice %arg2[%100, %c0_i32_102] : memref<24x32xf32, #tpu.memory_space<any>> -> memref<1x32xf32, #tpu.memory_space<any>>
    %c11_i32_103 = arith.constant 11 : i32
    %c0_i32_104 = arith.constant 0 : i32
    %102 = tpu.memref_slice %arg9[%c11_i32_103, %c0_i32_104] : memref<16x32xf32, #tpu.memory_space<vmem>> -> memref<1x32xf32, #tpu.memory_space<vmem>>
    %103 = tpu.memref_slice %arg11[%c0_i32_101, %c11_i32] : memref<2x16x!tpu.dma_semaphore, #tpu.memory_space<semaphore_mem>> -> memref<1x1x!tpu.dma_semaphore, #tpu.memory_space<semaphore_mem>>
    %104 = tpu.memref_squeeze %103 : memref<1x1x!tpu.dma_semaphore, #tpu.memory_space<semaphore_mem>> -> memref<!tpu.dma_semaphore, #tpu.memory_space<semaphore_mem>>
    tpu.enqueue_dma source(%101 : memref<1x32xf32, #tpu.memory_space<any>>) target(%102 : memref<1x32xf32, #tpu.memory_space<vmem>>) target_semaphore(%104 : memref<!tpu.dma_semaphore, #tpu.memory_space<semaphore_mem>>)
    %c1_i32_105 = arith.constant 1 : i32
    %c11_i32_106 = arith.constant 11 : i32
    %c0_i32_107 = arith.constant 0 : i32
    %105 = tpu.memref_slice %arg3[%100, %c0_i32_107] : memref<24x32xf32, #tpu.memory_space<any>> -> memref<1x32xf32, #tpu.memory_space<any>>
    %c11_i32_108 = arith.constant 11 : i32
    %c0_i32_109 = arith.constant 0 : i32
    %106 = tpu.memref_slice %arg10[%c11_i32_108, %c0_i32_109] : memref<16x32xf32, #tpu.memory_space<vmem>> -> memref<1x32xf32, #tpu.memory_space<vmem>>
    %107 = tpu.memref_slice %arg11[%c1_i32_105, %c11_i32_106] : memref<2x16x!tpu.dma_semaphore, #tpu.memory_space<semaphore_mem>> -> memref<1x1x!tpu.dma_semaphore, #tpu.memory_space<semaphore_mem>>
    %108 = tpu.memref_squeeze %107 : memref<1x1x!tpu.dma_semaphore, #tpu.memory_space<semaphore_mem>> -> memref<!tpu.dma_semaphore, #tpu.memory_space<semaphore_mem>>
    tpu.enqueue_dma source(%105 : memref<1x32xf32, #tpu.memory_space<any>>) target(%106 : memref<1x32xf32, #tpu.memory_space<vmem>>) target_semaphore(%108 : memref<!tpu.dma_semaphore, #tpu.memory_space<semaphore_mem>>)
    %c12 = arith.constant 12 : index
    %109 = memref.load %arg0[%c12] : memref<16xi32, #tpu.memory_space<smem>>
    %c0_i32_110 = arith.constant 0 : i32
    %c12_i32 = arith.constant 12 : i32
    %c0_i32_111 = arith.constant 0 : i32
    %110 = tpu.memref_slice %arg2[%109, %c0_i32_111] : memref<24x32xf32, #tpu.memory_space<any>> -> memref<1x32xf32, #tpu.memory_space<any>>
    %c12_i32_112 = arith.constant 12 : i32
    %c0_i32_113 = arith.constant 0 : i32
    %111 = tpu.memref_slice %arg9[%c12_i32_112, %c0_i32_113] : memref<16x32xf32, #tpu.memory_space<vmem>> -> memref<1x32xf32, #tpu.memory_space<vmem>>
    %112 = tpu.memref_slice %arg11[%c0_i32_110, %c12_i32] : memref<2x16x!tpu.dma_semaphore, #tpu.memory_space<semaphore_mem>> -> memref<1x1x!tpu.dma_semaphore, #tpu.memory_space<semaphore_mem>>
    %113 = tpu.memref_squeeze %112 : memref<1x1x!tpu.dma_semaphore, #tpu.memory_space<semaphore_mem>> -> memref<!tpu.dma_semaphore, #tpu.memory_space<semaphore_mem>>
    tpu.enqueue_dma source(%110 : memref<1x32xf32, #tpu.memory_space<any>>) target(%111 : memref<1x32xf32, #tpu.memory_space<vmem>>) target_semaphore(%113 : memref<!tpu.dma_semaphore, #tpu.memory_space<semaphore_mem>>)
    %c1_i32_114 = arith.constant 1 : i32
    %c12_i32_115 = arith.constant 12 : i32
    %c0_i32_116 = arith.constant 0 : i32
    %114 = tpu.memref_slice %arg3[%109, %c0_i32_116] : memref<24x32xf32, #tpu.memory_space<any>> -> memref<1x32xf32, #tpu.memory_space<any>>
    %c12_i32_117 = arith.constant 12 : i32
    %c0_i32_118 = arith.constant 0 : i32
    %115 = tpu.memref_slice %arg10[%c12_i32_117, %c0_i32_118] : memref<16x32xf32, #tpu.memory_space<vmem>> -> memref<1x32xf32, #tpu.memory_space<vmem>>
    %116 = tpu.memref_slice %arg11[%c1_i32_114, %c12_i32_115] : memref<2x16x!tpu.dma_semaphore, #tpu.memory_space<semaphore_mem>> -> memref<1x1x!tpu.dma_semaphore, #tpu.memory_space<semaphore_mem>>
    %117 = tpu.memref_squeeze %116 : memref<1x1x!tpu.dma_semaphore, #tpu.memory_space<semaphore_mem>> -> memref<!tpu.dma_semaphore, #tpu.memory_space<semaphore_mem>>
    tpu.enqueue_dma source(%114 : memref<1x32xf32, #tpu.memory_space<any>>) target(%115 : memref<1x32xf32, #tpu.memory_space<vmem>>) target_semaphore(%117 : memref<!tpu.dma_semaphore, #tpu.memory_space<semaphore_mem>>)
    %c13 = arith.constant 13 : index
    %118 = memref.load %arg0[%c13] : memref<16xi32, #tpu.memory_space<smem>>
    %c0_i32_119 = arith.constant 0 : i32
    %c13_i32 = arith.constant 13 : i32
    %c0_i32_120 = arith.constant 0 : i32
    %119 = tpu.memref_slice %arg2[%118, %c0_i32_120] : memref<24x32xf32, #tpu.memory_space<any>> -> memref<1x32xf32, #tpu.memory_space<any>>
    %c13_i32_121 = arith.constant 13 : i32
    %c0_i32_122 = arith.constant 0 : i32
    %120 = tpu.memref_slice %arg9[%c13_i32_121, %c0_i32_122] : memref<16x32xf32, #tpu.memory_space<vmem>> -> memref<1x32xf32, #tpu.memory_space<vmem>>
    %121 = tpu.memref_slice %arg11[%c0_i32_119, %c13_i32] : memref<2x16x!tpu.dma_semaphore, #tpu.memory_space<semaphore_mem>> -> memref<1x1x!tpu.dma_semaphore, #tpu.memory_space<semaphore_mem>>
    %122 = tpu.memref_squeeze %121 : memref<1x1x!tpu.dma_semaphore, #tpu.memory_space<semaphore_mem>> -> memref<!tpu.dma_semaphore, #tpu.memory_space<semaphore_mem>>
    tpu.enqueue_dma source(%119 : memref<1x32xf32, #tpu.memory_space<any>>) target(%120 : memref<1x32xf32, #tpu.memory_space<vmem>>) target_semaphore(%122 : memref<!tpu.dma_semaphore, #tpu.memory_space<semaphore_mem>>)
    %c1_i32_123 = arith.constant 1 : i32
    %c13_i32_124 = arith.constant 13 : i32
    %c0_i32_125 = arith.constant 0 : i32
    %123 = tpu.memref_slice %arg3[%118, %c0_i32_125] : memref<24x32xf32, #tpu.memory_space<any>> -> memref<1x32xf32, #tpu.memory_space<any>>
    %c13_i32_126 = arith.constant 13 : i32
    %c0_i32_127 = arith.constant 0 : i32
    %124 = tpu.memref_slice %arg10[%c13_i32_126, %c0_i32_127] : memref<16x32xf32, #tpu.memory_space<vmem>> -> memref<1x32xf32, #tpu.memory_space<vmem>>
    %125 = tpu.memref_slice %arg11[%c1_i32_123, %c13_i32_124] : memref<2x16x!tpu.dma_semaphore, #tpu.memory_space<semaphore_mem>> -> memref<1x1x!tpu.dma_semaphore, #tpu.memory_space<semaphore_mem>>
    %126 = tpu.memref_squeeze %125 : memref<1x1x!tpu.dma_semaphore, #tpu.memory_space<semaphore_mem>> -> memref<!tpu.dma_semaphore, #tpu.memory_space<semaphore_mem>>
    tpu.enqueue_dma source(%123 : memref<1x32xf32, #tpu.memory_space<any>>) target(%124 : memref<1x32xf32, #tpu.memory_space<vmem>>) target_semaphore(%126 : memref<!tpu.dma_semaphore, #tpu.memory_space<semaphore_mem>>)
    %c14 = arith.constant 14 : index
    %127 = memref.load %arg0[%c14] : memref<16xi32, #tpu.memory_space<smem>>
    %c0_i32_128 = arith.constant 0 : i32
    %c14_i32 = arith.constant 14 : i32
    %c0_i32_129 = arith.constant 0 : i32
    %128 = tpu.memref_slice %arg2[%127, %c0_i32_129] : memref<24x32xf32, #tpu.memory_space<any>> -> memref<1x32xf32, #tpu.memory_space<any>>
    %c14_i32_130 = arith.constant 14 : i32
    %c0_i32_131 = arith.constant 0 : i32
    %129 = tpu.memref_slice %arg9[%c14_i32_130, %c0_i32_131] : memref<16x32xf32, #tpu.memory_space<vmem>> -> memref<1x32xf32, #tpu.memory_space<vmem>>
    %130 = tpu.memref_slice %arg11[%c0_i32_128, %c14_i32] : memref<2x16x!tpu.dma_semaphore, #tpu.memory_space<semaphore_mem>> -> memref<1x1x!tpu.dma_semaphore, #tpu.memory_space<semaphore_mem>>
    %131 = tpu.memref_squeeze %130 : memref<1x1x!tpu.dma_semaphore, #tpu.memory_space<semaphore_mem>> -> memref<!tpu.dma_semaphore, #tpu.memory_space<semaphore_mem>>
    tpu.enqueue_dma source(%128 : memref<1x32xf32, #tpu.memory_space<any>>) target(%129 : memref<1x32xf32, #tpu.memory_space<vmem>>) target_semaphore(%131 : memref<!tpu.dma_semaphore, #tpu.memory_space<semaphore_mem>>)
    %c1_i32_132 = arith.constant 1 : i32
    %c14_i32_133 = arith.constant 14 : i32
    %c0_i32_134 = arith.constant 0 : i32
    %132 = tpu.memref_slice %arg3[%127, %c0_i32_134] : memref<24x32xf32, #tpu.memory_space<any>> -> memref<1x32xf32, #tpu.memory_space<any>>
    %c14_i32_135 = arith.constant 14 : i32
    %c0_i32_136 = arith.constant 0 : i32
    %133 = tpu.memref_slice %arg10[%c14_i32_135, %c0_i32_136] : memref<16x32xf32, #tpu.memory_space<vmem>> -> memref<1x32xf32, #tpu.memory_space<vmem>>
    %134 = tpu.memref_slice %arg11[%c1_i32_132, %c14_i32_133] : memref<2x16x!tpu.dma_semaphore, #tpu.memory_space<semaphore_mem>> -> memref<1x1x!tpu.dma_semaphore, #tpu.memory_space<semaphore_mem>>
    %135 = tpu.memref_squeeze %134 : memref<1x1x!tpu.dma_semaphore, #tpu.memory_space<semaphore_mem>> -> memref<!tpu.dma_semaphore, #tpu.memory_space<semaphore_mem>>
    tpu.enqueue_dma source(%132 : memref<1x32xf32, #tpu.memory_space<any>>) target(%133 : memref<1x32xf32, #tpu.memory_space<vmem>>) target_semaphore(%135 : memref<!tpu.dma_semaphore, #tpu.memory_space<semaphore_mem>>)
    %c15 = arith.constant 15 : index
    %136 = memref.load %arg0[%c15] : memref<16xi32, #tpu.memory_space<smem>>
    %c0_i32_137 = arith.constant 0 : i32
    %c15_i32 = arith.constant 15 : i32
    %c0_i32_138 = arith.constant 0 : i32
    %137 = tpu.memref_slice %arg2[%136, %c0_i32_138] : memref<24x32xf32, #tpu.memory_space<any>> -> memref<1x32xf32, #tpu.memory_space<any>>
    %c15_i32_139 = arith.constant 15 : i32
    %c0_i32_140 = arith.constant 0 : i32
    %138 = tpu.memref_slice %arg9[%c15_i32_139, %c0_i32_140] : memref<16x32xf32, #tpu.memory_space<vmem>> -> memref<1x32xf32, #tpu.memory_space<vmem>>
    %139 = tpu.memref_slice %arg11[%c0_i32_137, %c15_i32] : memref<2x16x!tpu.dma_semaphore, #tpu.memory_space<semaphore_mem>> -> memref<1x1x!tpu.dma_semaphore, #tpu.memory_space<semaphore_mem>>
    %140 = tpu.memref_squeeze %139 : memref<1x1x!tpu.dma_semaphore, #tpu.memory_space<semaphore_mem>> -> memref<!tpu.dma_semaphore, #tpu.memory_space<semaphore_mem>>
    tpu.enqueue_dma source(%137 : memref<1x32xf32, #tpu.memory_space<any>>) target(%138 : memref<1x32xf32, #tpu.memory_space<vmem>>) target_semaphore(%140 : memref<!tpu.dma_semaphore, #tpu.memory_space<semaphore_mem>>)
    %c1_i32_141 = arith.constant 1 : i32
    %c15_i32_142 = arith.constant 15 : i32
    %c0_i32_143 = arith.constant 0 : i32
    %141 = tpu.memref_slice %arg3[%136, %c0_i32_143] : memref<24x32xf32, #tpu.memory_space<any>> -> memref<1x32xf32, #tpu.memory_space<any>>
    %c15_i32_144 = arith.constant 15 : i32
    %c0_i32_145 = arith.constant 0 : i32
    %142 = tpu.memref_slice %arg10[%c15_i32_144, %c0_i32_145] : memref<16x32xf32, #tpu.memory_space<vmem>> -> memref<1x32xf32, #tpu.memory_space<vmem>>
    %143 = tpu.memref_slice %arg11[%c1_i32_141, %c15_i32_142] : memref<2x16x!tpu.dma_semaphore, #tpu.memory_space<semaphore_mem>> -> memref<1x1x!tpu.dma_semaphore, #tpu.memory_space<semaphore_mem>>
    %144 = tpu.memref_squeeze %143 : memref<1x1x!tpu.dma_semaphore, #tpu.memory_space<semaphore_mem>> -> memref<!tpu.dma_semaphore, #tpu.memory_space<semaphore_mem>>
    tpu.enqueue_dma source(%141 : memref<1x32xf32, #tpu.memory_space<any>>) target(%142 : memref<1x32xf32, #tpu.memory_space<vmem>>) target_semaphore(%144 : memref<!tpu.dma_semaphore, #tpu.memory_space<semaphore_mem>>)
    %c0_i32_146 = arith.constant 0 : i32
    %c0_i32_147 = arith.constant 0 : i32
    %c0_i32_148 = arith.constant 0 : i32
    %145 = tpu.memref_slice %arg2[%1, %c0_i32_148] : memref<24x32xf32, #tpu.memory_space<any>> -> memref<1x32xf32, #tpu.memory_space<any>>
    %c0_i32_149 = arith.constant 0 : i32
    %c0_i32_150 = arith.constant 0 : i32
    %146 = tpu.memref_slice %arg9[%c0_i32_149, %c0_i32_150] : memref<16x32xf32, #tpu.memory_space<vmem>> -> memref<1x32xf32, #tpu.memory_space<vmem>>
    %147 = tpu.memref_slice %arg11[%c0_i32_146, %c0_i32_147] : memref<2x16x!tpu.dma_semaphore, #tpu.memory_space<semaphore_mem>> -> memref<1x1x!tpu.dma_semaphore, #tpu.memory_space<semaphore_mem>>
    %148 = tpu.memref_squeeze %147 : memref<1x1x!tpu.dma_semaphore, #tpu.memory_space<semaphore_mem>> -> memref<!tpu.dma_semaphore, #tpu.memory_space<semaphore_mem>>
    tpu.wait_dma2 semaphore(%148 : memref<!tpu.dma_semaphore, #tpu.memory_space<semaphore_mem>>) src(%145 : memref<1x32xf32, #tpu.memory_space<any>>) dst(%146 : memref<1x32xf32, #tpu.memory_space<vmem>>)
    %c1_i32_151 = arith.constant 1 : i32
    %c0_i32_152 = arith.constant 0 : i32
    %c0_i32_153 = arith.constant 0 : i32
    %149 = tpu.memref_slice %arg3[%1, %c0_i32_153] : memref<24x32xf32, #tpu.memory_space<any>> -> memref<1x32xf32, #tpu.memory_space<any>>
    %c0_i32_154 = arith.constant 0 : i32
    %c0_i32_155 = arith.constant 0 : i32
    %150 = tpu.memref_slice %arg10[%c0_i32_154, %c0_i32_155] : memref<16x32xf32, #tpu.memory_space<vmem>> -> memref<1x32xf32, #tpu.memory_space<vmem>>
    %151 = tpu.memref_slice %arg11[%c1_i32_151, %c0_i32_152] : memref<2x16x!tpu.dma_semaphore, #tpu.memory_space<semaphore_mem>> -> memref<1x1x!tpu.dma_semaphore, #tpu.memory_space<semaphore_mem>>
    %152 = tpu.memref_squeeze %151 : memref<1x1x!tpu.dma_semaphore, #tpu.memory_space<semaphore_mem>> -> memref<!tpu.dma_semaphore, #tpu.memory_space<semaphore_mem>>
    tpu.wait_dma2 semaphore(%152 : memref<!tpu.dma_semaphore, #tpu.memory_space<semaphore_mem>>) src(%149 : memref<1x32xf32, #tpu.memory_space<any>>) dst(%150 : memref<1x32xf32, #tpu.memory_space<vmem>>)
    %c0_i32_156 = arith.constant 0 : i32
    %c1_i32_157 = arith.constant 1 : i32
    %c0_i32_158 = arith.constant 0 : i32
    %153 = tpu.memref_slice %arg2[%10, %c0_i32_158] : memref<24x32xf32, #tpu.memory_space<any>> -> memref<1x32xf32, #tpu.memory_space<any>>
    %c1_i32_159 = arith.constant 1 : i32
    %c0_i32_160 = arith.constant 0 : i32
    %154 = tpu.memref_slice %arg9[%c1_i32_159, %c0_i32_160] : memref<16x32xf32, #tpu.memory_space<vmem>> -> memref<1x32xf32, #tpu.memory_space<vmem>>
    %155 = tpu.memref_slice %arg11[%c0_i32_156, %c1_i32_157] : memref<2x16x!tpu.dma_semaphore, #tpu.memory_space<semaphore_mem>> -> memref<1x1x!tpu.dma_semaphore, #tpu.memory_space<semaphore_mem>>
    %156 = tpu.memref_squeeze %155 : memref<1x1x!tpu.dma_semaphore, #tpu.memory_space<semaphore_mem>> -> memref<!tpu.dma_semaphore, #tpu.memory_space<semaphore_mem>>
    tpu.wait_dma2 semaphore(%156 : memref<!tpu.dma_semaphore, #tpu.memory_space<semaphore_mem>>) src(%153 : memref<1x32xf32, #tpu.memory_space<any>>) dst(%154 : memref<1x32xf32, #tpu.memory_space<vmem>>)
    %c1_i32_161 = arith.constant 1 : i32
    %c1_i32_162 = arith.constant 1 : i32
    %c0_i32_163 = arith.constant 0 : i32
    %157 = tpu.memref_slice %arg3[%10, %c0_i32_163] : memref<24x32xf32, #tpu.memory_space<any>> -> memref<1x32xf32, #tpu.memory_space<any>>
    %c1_i32_164 = arith.constant 1 : i32
    %c0_i32_165 = arith.constant 0 : i32
    %158 = tpu.memref_slice %arg10[%c1_i32_164, %c0_i32_165] : memref<16x32xf32, #tpu.memory_space<vmem>> -> memref<1x32xf32, #tpu.memory_space<vmem>>
    %159 = tpu.memref_slice %arg11[%c1_i32_161, %c1_i32_162] : memref<2x16x!tpu.dma_semaphore, #tpu.memory_space<semaphore_mem>> -> memref<1x1x!tpu.dma_semaphore, #tpu.memory_space<semaphore_mem>>
    %160 = tpu.memref_squeeze %159 : memref<1x1x!tpu.dma_semaphore, #tpu.memory_space<semaphore_mem>> -> memref<!tpu.dma_semaphore, #tpu.memory_space<semaphore_mem>>
    tpu.wait_dma2 semaphore(%160 : memref<!tpu.dma_semaphore, #tpu.memory_space<semaphore_mem>>) src(%157 : memref<1x32xf32, #tpu.memory_space<any>>) dst(%158 : memref<1x32xf32, #tpu.memory_space<vmem>>)
    %c0_i32_166 = arith.constant 0 : i32
    %c2_i32_167 = arith.constant 2 : i32
    %c0_i32_168 = arith.constant 0 : i32
    %161 = tpu.memref_slice %arg2[%19, %c0_i32_168] : memref<24x32xf32, #tpu.memory_space<any>> -> memref<1x32xf32, #tpu.memory_space<any>>
    %c2_i32_169 = arith.constant 2 : i32
    %c0_i32_170 = arith.constant 0 : i32
    %162 = tpu.memref_slice %arg9[%c2_i32_169, %c0_i32_170] : memref<16x32xf32, #tpu.memory_space<vmem>> -> memref<1x32xf32, #tpu.memory_space<vmem>>
    %163 = tpu.memref_slice %arg11[%c0_i32_166, %c2_i32_167] : memref<2x16x!tpu.dma_semaphore, #tpu.memory_space<semaphore_mem>> -> memref<1x1x!tpu.dma_semaphore, #tpu.memory_space<semaphore_mem>>
    %164 = tpu.memref_squeeze %163 : memref<1x1x!tpu.dma_semaphore, #tpu.memory_space<semaphore_mem>> -> memref<!tpu.dma_semaphore, #tpu.memory_space<semaphore_mem>>
    tpu.wait_dma2 semaphore(%164 : memref<!tpu.dma_semaphore, #tpu.memory_space<semaphore_mem>>) src(%161 : memref<1x32xf32, #tpu.memory_space<any>>) dst(%162 : memref<1x32xf32, #tpu.memory_space<vmem>>)
    %c1_i32_171 = arith.constant 1 : i32
    %c2_i32_172 = arith.constant 2 : i32
    %c0_i32_173 = arith.constant 0 : i32
    %165 = tpu.memref_slice %arg3[%19, %c0_i32_173] : memref<24x32xf32, #tpu.memory_space<any>> -> memref<1x32xf32, #tpu.memory_space<any>>
    %c2_i32_174 = arith.constant 2 : i32
    %c0_i32_175 = arith.constant 0 : i32
    %166 = tpu.memref_slice %arg10[%c2_i32_174, %c0_i32_175] : memref<16x32xf32, #tpu.memory_space<vmem>> -> memref<1x32xf32, #tpu.memory_space<vmem>>
    %167 = tpu.memref_slice %arg11[%c1_i32_171, %c2_i32_172] : memref<2x16x!tpu.dma_semaphore, #tpu.memory_space<semaphore_mem>> -> memref<1x1x!tpu.dma_semaphore, #tpu.memory_space<semaphore_mem>>
    %168 = tpu.memref_squeeze %167 : memref<1x1x!tpu.dma_semaphore, #tpu.memory_space<semaphore_mem>> -> memref<!tpu.dma_semaphore, #tpu.memory_space<semaphore_mem>>
    tpu.wait_dma2 semaphore(%168 : memref<!tpu.dma_semaphore, #tpu.memory_space<semaphore_mem>>) src(%165 : memref<1x32xf32, #tpu.memory_space<any>>) dst(%166 : memref<1x32xf32, #tpu.memory_space<vmem>>)
    %c0_i32_176 = arith.constant 0 : i32
    %c3_i32_177 = arith.constant 3 : i32
    %c0_i32_178 = arith.constant 0 : i32
    %169 = tpu.memref_slice %arg2[%28, %c0_i32_178] : memref<24x32xf32, #tpu.memory_space<any>> -> memref<1x32xf32, #tpu.memory_space<any>>
    %c3_i32_179 = arith.constant 3 : i32
    %c0_i32_180 = arith.constant 0 : i32
    %170 = tpu.memref_slice %arg9[%c3_i32_179, %c0_i32_180] : memref<16x32xf32, #tpu.memory_space<vmem>> -> memref<1x32xf32, #tpu.memory_space<vmem>>
    %171 = tpu.memref_slice %arg11[%c0_i32_176, %c3_i32_177] : memref<2x16x!tpu.dma_semaphore, #tpu.memory_space<semaphore_mem>> -> memref<1x1x!tpu.dma_semaphore, #tpu.memory_space<semaphore_mem>>
    %172 = tpu.memref_squeeze %171 : memref<1x1x!tpu.dma_semaphore, #tpu.memory_space<semaphore_mem>> -> memref<!tpu.dma_semaphore, #tpu.memory_space<semaphore_mem>>
    tpu.wait_dma2 semaphore(%172 : memref<!tpu.dma_semaphore, #tpu.memory_space<semaphore_mem>>) src(%169 : memref<1x32xf32, #tpu.memory_space<any>>) dst(%170 : memref<1x32xf32, #tpu.memory_space<vmem>>)
    %c1_i32_181 = arith.constant 1 : i32
    %c3_i32_182 = arith.constant 3 : i32
    %c0_i32_183 = arith.constant 0 : i32
    %173 = tpu.memref_slice %arg3[%28, %c0_i32_183] : memref<24x32xf32, #tpu.memory_space<any>> -> memref<1x32xf32, #tpu.memory_space<any>>
    %c3_i32_184 = arith.constant 3 : i32
    %c0_i32_185 = arith.constant 0 : i32
    %174 = tpu.memref_slice %arg10[%c3_i32_184, %c0_i32_185] : memref<16x32xf32, #tpu.memory_space<vmem>> -> memref<1x32xf32, #tpu.memory_space<vmem>>
    %175 = tpu.memref_slice %arg11[%c1_i32_181, %c3_i32_182] : memref<2x16x!tpu.dma_semaphore, #tpu.memory_space<semaphore_mem>> -> memref<1x1x!tpu.dma_semaphore, #tpu.memory_space<semaphore_mem>>
    %176 = tpu.memref_squeeze %175 : memref<1x1x!tpu.dma_semaphore, #tpu.memory_space<semaphore_mem>> -> memref<!tpu.dma_semaphore, #tpu.memory_space<semaphore_mem>>
    tpu.wait_dma2 semaphore(%176 : memref<!tpu.dma_semaphore, #tpu.memory_space<semaphore_mem>>) src(%173 : memref<1x32xf32, #tpu.memory_space<any>>) dst(%174 : memref<1x32xf32, #tpu.memory_space<vmem>>)
    %c0_i32_186 = arith.constant 0 : i32
    %c4_i32_187 = arith.constant 4 : i32
    %c0_i32_188 = arith.constant 0 : i32
    %177 = tpu.memref_slice %arg2[%37, %c0_i32_188] : memref<24x32xf32, #tpu.memory_space<any>> -> memref<1x32xf32, #tpu.memory_space<any>>
    %c4_i32_189 = arith.constant 4 : i32
    %c0_i32_190 = arith.constant 0 : i32
    %178 = tpu.memref_slice %arg9[%c4_i32_189, %c0_i32_190] : memref<16x32xf32, #tpu.memory_space<vmem>> -> memref<1x32xf32, #tpu.memory_space<vmem>>
    %179 = tpu.memref_slice %arg11[%c0_i32_186, %c4_i32_187] : memref<2x16x!tpu.dma_semaphore, #tpu.memory_space<semaphore_mem>> -> memref<1x1x!tpu.dma_semaphore, #tpu.memory_space<semaphore_mem>>
    %180 = tpu.memref_squeeze %179 : memref<1x1x!tpu.dma_semaphore, #tpu.memory_space<semaphore_mem>> -> memref<!tpu.dma_semaphore, #tpu.memory_space<semaphore_mem>>
    tpu.wait_dma2 semaphore(%180 : memref<!tpu.dma_semaphore, #tpu.memory_space<semaphore_mem>>) src(%177 : memref<1x32xf32, #tpu.memory_space<any>>) dst(%178 : memref<1x32xf32, #tpu.memory_space<vmem>>)
    %c1_i32_191 = arith.constant 1 : i32
    %c4_i32_192 = arith.constant 4 : i32
    %c0_i32_193 = arith.constant 0 : i32
    %181 = tpu.memref_slice %arg3[%37, %c0_i32_193] : memref<24x32xf32, #tpu.memory_space<any>> -> memref<1x32xf32, #tpu.memory_space<any>>
    %c4_i32_194 = arith.constant 4 : i32
    %c0_i32_195 = arith.constant 0 : i32
    %182 = tpu.memref_slice %arg10[%c4_i32_194, %c0_i32_195] : memref<16x32xf32, #tpu.memory_space<vmem>> -> memref<1x32xf32, #tpu.memory_space<vmem>>
    %183 = tpu.memref_slice %arg11[%c1_i32_191, %c4_i32_192] : memref<2x16x!tpu.dma_semaphore, #tpu.memory_space<semaphore_mem>> -> memref<1x1x!tpu.dma_semaphore, #tpu.memory_space<semaphore_mem>>
    %184 = tpu.memref_squeeze %183 : memref<1x1x!tpu.dma_semaphore, #tpu.memory_space<semaphore_mem>> -> memref<!tpu.dma_semaphore, #tpu.memory_space<semaphore_mem>>
    tpu.wait_dma2 semaphore(%184 : memref<!tpu.dma_semaphore, #tpu.memory_space<semaphore_mem>>) src(%181 : memref<1x32xf32, #tpu.memory_space<any>>) dst(%182 : memref<1x32xf32, #tpu.memory_space<vmem>>)
    %c0_i32_196 = arith.constant 0 : i32
    %c5_i32_197 = arith.constant 5 : i32
    %c0_i32_198 = arith.constant 0 : i32
    %185 = tpu.memref_slice %arg2[%46, %c0_i32_198] : memref<24x32xf32, #tpu.memory_space<any>> -> memref<1x32xf32, #tpu.memory_space<any>>
    %c5_i32_199 = arith.constant 5 : i32
    %c0_i32_200 = arith.constant 0 : i32
    %186 = tpu.memref_slice %arg9[%c5_i32_199, %c0_i32_200] : memref<16x32xf32, #tpu.memory_space<vmem>> -> memref<1x32xf32, #tpu.memory_space<vmem>>
    %187 = tpu.memref_slice %arg11[%c0_i32_196, %c5_i32_197] : memref<2x16x!tpu.dma_semaphore, #tpu.memory_space<semaphore_mem>> -> memref<1x1x!tpu.dma_semaphore, #tpu.memory_space<semaphore_mem>>
    %188 = tpu.memref_squeeze %187 : memref<1x1x!tpu.dma_semaphore, #tpu.memory_space<semaphore_mem>> -> memref<!tpu.dma_semaphore, #tpu.memory_space<semaphore_mem>>
    tpu.wait_dma2 semaphore(%188 : memref<!tpu.dma_semaphore, #tpu.memory_space<semaphore_mem>>) src(%185 : memref<1x32xf32, #tpu.memory_space<any>>) dst(%186 : memref<1x32xf32, #tpu.memory_space<vmem>>)
    %c1_i32_201 = arith.constant 1 : i32
    %c5_i32_202 = arith.constant 5 : i32
    %c0_i32_203 = arith.constant 0 : i32
    %189 = tpu.memref_slice %arg3[%46, %c0_i32_203] : memref<24x32xf32, #tpu.memory_space<any>> -> memref<1x32xf32, #tpu.memory_space<any>>
    %c5_i32_204 = arith.constant 5 : i32
    %c0_i32_205 = arith.constant 0 : i32
    %190 = tpu.memref_slice %arg10[%c5_i32_204, %c0_i32_205] : memref<16x32xf32, #tpu.memory_space<vmem>> -> memref<1x32xf32, #tpu.memory_space<vmem>>
    %191 = tpu.memref_slice %arg11[%c1_i32_201, %c5_i32_202] : memref<2x16x!tpu.dma_semaphore, #tpu.memory_space<semaphore_mem>> -> memref<1x1x!tpu.dma_semaphore, #tpu.memory_space<semaphore_mem>>
    %192 = tpu.memref_squeeze %191 : memref<1x1x!tpu.dma_semaphore, #tpu.memory_space<semaphore_mem>> -> memref<!tpu.dma_semaphore, #tpu.memory_space<semaphore_mem>>
    tpu.wait_dma2 semaphore(%192 : memref<!tpu.dma_semaphore, #tpu.memory_space<semaphore_mem>>) src(%189 : memref<1x32xf32, #tpu.memory_space<any>>) dst(%190 : memref<1x32xf32, #tpu.memory_space<vmem>>)
    %c0_i32_206 = arith.constant 0 : i32
    %c6_i32_207 = arith.constant 6 : i32
    %c0_i32_208 = arith.constant 0 : i32
    %193 = tpu.memref_slice %arg2[%55, %c0_i32_208] : memref<24x32xf32, #tpu.memory_space<any>> -> memref<1x32xf32, #tpu.memory_space<any>>
    %c6_i32_209 = arith.constant 6 : i32
    %c0_i32_210 = arith.constant 0 : i32
    %194 = tpu.memref_slice %arg9[%c6_i32_209, %c0_i32_210] : memref<16x32xf32, #tpu.memory_space<vmem>> -> memref<1x32xf32, #tpu.memory_space<vmem>>
    %195 = tpu.memref_slice %arg11[%c0_i32_206, %c6_i32_207] : memref<2x16x!tpu.dma_semaphore, #tpu.memory_space<semaphore_mem>> -> memref<1x1x!tpu.dma_semaphore, #tpu.memory_space<semaphore_mem>>
    %196 = tpu.memref_squeeze %195 : memref<1x1x!tpu.dma_semaphore, #tpu.memory_space<semaphore_mem>> -> memref<!tpu.dma_semaphore, #tpu.memory_space<semaphore_mem>>
    tpu.wait_dma2 semaphore(%196 : memref<!tpu.dma_semaphore, #tpu.memory_space<semaphore_mem>>) src(%193 : memref<1x32xf32, #tpu.memory_space<any>>) dst(%194 : memref<1x32xf32, #tpu.memory_space<vmem>>)
    %c1_i32_211 = arith.constant 1 : i32
    %c6_i32_212 = arith.constant 6 : i32
    %c0_i32_213 = arith.constant 0 : i32
    %197 = tpu.memref_slice %arg3[%55, %c0_i32_213] : memref<24x32xf32, #tpu.memory_space<any>> -> memref<1x32xf32, #tpu.memory_space<any>>
    %c6_i32_214 = arith.constant 6 : i32
    %c0_i32_215 = arith.constant 0 : i32
    %198 = tpu.memref_slice %arg10[%c6_i32_214, %c0_i32_215] : memref<16x32xf32, #tpu.memory_space<vmem>> -> memref<1x32xf32, #tpu.memory_space<vmem>>
    %199 = tpu.memref_slice %arg11[%c1_i32_211, %c6_i32_212] : memref<2x16x!tpu.dma_semaphore, #tpu.memory_space<semaphore_mem>> -> memref<1x1x!tpu.dma_semaphore, #tpu.memory_space<semaphore_mem>>
    %200 = tpu.memref_squeeze %199 : memref<1x1x!tpu.dma_semaphore, #tpu.memory_space<semaphore_mem>> -> memref<!tpu.dma_semaphore, #tpu.memory_space<semaphore_mem>>
    tpu.wait_dma2 semaphore(%200 : memref<!tpu.dma_semaphore, #tpu.memory_space<semaphore_mem>>) src(%197 : memref<1x32xf32, #tpu.memory_space<any>>) dst(%198 : memref<1x32xf32, #tpu.memory_space<vmem>>)
    %c0_i32_216 = arith.constant 0 : i32
    %c7_i32_217 = arith.constant 7 : i32
    %c0_i32_218 = arith.constant 0 : i32
    %201 = tpu.memref_slice %arg2[%64, %c0_i32_218] : memref<24x32xf32, #tpu.memory_space<any>> -> memref<1x32xf32, #tpu.memory_space<any>>
    %c7_i32_219 = arith.constant 7 : i32
    %c0_i32_220 = arith.constant 0 : i32
    %202 = tpu.memref_slice %arg9[%c7_i32_219, %c0_i32_220] : memref<16x32xf32, #tpu.memory_space<vmem>> -> memref<1x32xf32, #tpu.memory_space<vmem>>
    %203 = tpu.memref_slice %arg11[%c0_i32_216, %c7_i32_217] : memref<2x16x!tpu.dma_semaphore, #tpu.memory_space<semaphore_mem>> -> memref<1x1x!tpu.dma_semaphore, #tpu.memory_space<semaphore_mem>>
    %204 = tpu.memref_squeeze %203 : memref<1x1x!tpu.dma_semaphore, #tpu.memory_space<semaphore_mem>> -> memref<!tpu.dma_semaphore, #tpu.memory_space<semaphore_mem>>
    tpu.wait_dma2 semaphore(%204 : memref<!tpu.dma_semaphore, #tpu.memory_space<semaphore_mem>>) src(%201 : memref<1x32xf32, #tpu.memory_space<any>>) dst(%202 : memref<1x32xf32, #tpu.memory_space<vmem>>)
    %c1_i32_221 = arith.constant 1 : i32
    %c7_i32_222 = arith.constant 7 : i32
    %c0_i32_223 = arith.constant 0 : i32
    %205 = tpu.memref_slice %arg3[%64, %c0_i32_223] : memref<24x32xf32, #tpu.memory_space<any>> -> memref<1x32xf32, #tpu.memory_space<any>>
    %c7_i32_224 = arith.constant 7 : i32
    %c0_i32_225 = arith.constant 0 : i32
    %206 = tpu.memref_slice %arg10[%c7_i32_224, %c0_i32_225] : memref<16x32xf32, #tpu.memory_space<vmem>> -> memref<1x32xf32, #tpu.memory_space<vmem>>
    %207 = tpu.memref_slice %arg11[%c1_i32_221, %c7_i32_222] : memref<2x16x!tpu.dma_semaphore, #tpu.memory_space<semaphore_mem>> -> memref<1x1x!tpu.dma_semaphore, #tpu.memory_space<semaphore_mem>>
    %208 = tpu.memref_squeeze %207 : memref<1x1x!tpu.dma_semaphore, #tpu.memory_space<semaphore_mem>> -> memref<!tpu.dma_semaphore, #tpu.memory_space<semaphore_mem>>
    tpu.wait_dma2 semaphore(%208 : memref<!tpu.dma_semaphore, #tpu.memory_space<semaphore_mem>>) src(%205 : memref<1x32xf32, #tpu.memory_space<any>>) dst(%206 : memref<1x32xf32, #tpu.memory_space<vmem>>)
    %c0_i32_226 = arith.constant 0 : i32
    %c8_i32_227 = arith.constant 8 : i32
    %c0_i32_228 = arith.constant 0 : i32
    %209 = tpu.memref_slice %arg2[%73, %c0_i32_228] : memref<24x32xf32, #tpu.memory_space<any>> -> memref<1x32xf32, #tpu.memory_space<any>>
    %c8_i32_229 = arith.constant 8 : i32
    %c0_i32_230 = arith.constant 0 : i32
    %210 = tpu.memref_slice %arg9[%c8_i32_229, %c0_i32_230] : memref<16x32xf32, #tpu.memory_space<vmem>> -> memref<1x32xf32, #tpu.memory_space<vmem>>
    %211 = tpu.memref_slice %arg11[%c0_i32_226, %c8_i32_227] : memref<2x16x!tpu.dma_semaphore, #tpu.memory_space<semaphore_mem>> -> memref<1x1x!tpu.dma_semaphore, #tpu.memory_space<semaphore_mem>>
    %212 = tpu.memref_squeeze %211 : memref<1x1x!tpu.dma_semaphore, #tpu.memory_space<semaphore_mem>> -> memref<!tpu.dma_semaphore, #tpu.memory_space<semaphore_mem>>
    tpu.wait_dma2 semaphore(%212 : memref<!tpu.dma_semaphore, #tpu.memory_space<semaphore_mem>>) src(%209 : memref<1x32xf32, #tpu.memory_space<any>>) dst(%210 : memref<1x32xf32, #tpu.memory_space<vmem>>)
    %c1_i32_231 = arith.constant 1 : i32
    %c8_i32_232 = arith.constant 8 : i32
    %c0_i32_233 = arith.constant 0 : i32
    %213 = tpu.memref_slice %arg3[%73, %c0_i32_233] : memref<24x32xf32, #tpu.memory_space<any>> -> memref<1x32xf32, #tpu.memory_space<any>>
    %c8_i32_234 = arith.constant 8 : i32
    %c0_i32_235 = arith.constant 0 : i32
    %214 = tpu.memref_slice %arg10[%c8_i32_234, %c0_i32_235] : memref<16x32xf32, #tpu.memory_space<vmem>> -> memref<1x32xf32, #tpu.memory_space<vmem>>
    %215 = tpu.memref_slice %arg11[%c1_i32_231, %c8_i32_232] : memref<2x16x!tpu.dma_semaphore, #tpu.memory_space<semaphore_mem>> -> memref<1x1x!tpu.dma_semaphore, #tpu.memory_space<semaphore_mem>>
    %216 = tpu.memref_squeeze %215 : memref<1x1x!tpu.dma_semaphore, #tpu.memory_space<semaphore_mem>> -> memref<!tpu.dma_semaphore, #tpu.memory_space<semaphore_mem>>
    tpu.wait_dma2 semaphore(%216 : memref<!tpu.dma_semaphore, #tpu.memory_space<semaphore_mem>>) src(%213 : memref<1x32xf32, #tpu.memory_space<any>>) dst(%214 : memref<1x32xf32, #tpu.memory_space<vmem>>)
    %c0_i32_236 = arith.constant 0 : i32
    %c9_i32_237 = arith.constant 9 : i32
    %c0_i32_238 = arith.constant 0 : i32
    %217 = tpu.memref_slice %arg2[%82, %c0_i32_238] : memref<24x32xf32, #tpu.memory_space<any>> -> memref<1x32xf32, #tpu.memory_space<any>>
    %c9_i32_239 = arith.constant 9 : i32
    %c0_i32_240 = arith.constant 0 : i32
    %218 = tpu.memref_slice %arg9[%c9_i32_239, %c0_i32_240] : memref<16x32xf32, #tpu.memory_space<vmem>> -> memref<1x32xf32, #tpu.memory_space<vmem>>
    %219 = tpu.memref_slice %arg11[%c0_i32_236, %c9_i32_237] : memref<2x16x!tpu.dma_semaphore, #tpu.memory_space<semaphore_mem>> -> memref<1x1x!tpu.dma_semaphore, #tpu.memory_space<semaphore_mem>>
    %220 = tpu.memref_squeeze %219 : memref<1x1x!tpu.dma_semaphore, #tpu.memory_space<semaphore_mem>> -> memref<!tpu.dma_semaphore, #tpu.memory_space<semaphore_mem>>
    tpu.wait_dma2 semaphore(%220 : memref<!tpu.dma_semaphore, #tpu.memory_space<semaphore_mem>>) src(%217 : memref<1x32xf32, #tpu.memory_space<any>>) dst(%218 : memref<1x32xf32, #tpu.memory_space<vmem>>)
    %c1_i32_241 = arith.constant 1 : i32
    %c9_i32_242 = arith.constant 9 : i32
    %c0_i32_243 = arith.constant 0 : i32
    %221 = tpu.memref_slice %arg3[%82, %c0_i32_243] : memref<24x32xf32, #tpu.memory_space<any>> -> memref<1x32xf32, #tpu.memory_space<any>>
    %c9_i32_244 = arith.constant 9 : i32
    %c0_i32_245 = arith.constant 0 : i32
    %222 = tpu.memref_slice %arg10[%c9_i32_244, %c0_i32_245] : memref<16x32xf32, #tpu.memory_space<vmem>> -> memref<1x32xf32, #tpu.memory_space<vmem>>
    %223 = tpu.memref_slice %arg11[%c1_i32_241, %c9_i32_242] : memref<2x16x!tpu.dma_semaphore, #tpu.memory_space<semaphore_mem>> -> memref<1x1x!tpu.dma_semaphore, #tpu.memory_space<semaphore_mem>>
    %224 = tpu.memref_squeeze %223 : memref<1x1x!tpu.dma_semaphore, #tpu.memory_space<semaphore_mem>> -> memref<!tpu.dma_semaphore, #tpu.memory_space<semaphore_mem>>
    tpu.wait_dma2 semaphore(%224 : memref<!tpu.dma_semaphore, #tpu.memory_space<semaphore_mem>>) src(%221 : memref<1x32xf32, #tpu.memory_space<any>>) dst(%222 : memref<1x32xf32, #tpu.memory_space<vmem>>)
    %c0_i32_246 = arith.constant 0 : i32
    %c10_i32_247 = arith.constant 10 : i32
    %c0_i32_248 = arith.constant 0 : i32
    %225 = tpu.memref_slice %arg2[%91, %c0_i32_248] : memref<24x32xf32, #tpu.memory_space<any>> -> memref<1x32xf32, #tpu.memory_space<any>>
    %c10_i32_249 = arith.constant 10 : i32
    %c0_i32_250 = arith.constant 0 : i32
    %226 = tpu.memref_slice %arg9[%c10_i32_249, %c0_i32_250] : memref<16x32xf32, #tpu.memory_space<vmem>> -> memref<1x32xf32, #tpu.memory_space<vmem>>
    %227 = tpu.memref_slice %arg11[%c0_i32_246, %c10_i32_247] : memref<2x16x!tpu.dma_semaphore, #tpu.memory_space<semaphore_mem>> -> memref<1x1x!tpu.dma_semaphore, #tpu.memory_space<semaphore_mem>>
    %228 = tpu.memref_squeeze %227 : memref<1x1x!tpu.dma_semaphore, #tpu.memory_space<semaphore_mem>> -> memref<!tpu.dma_semaphore, #tpu.memory_space<semaphore_mem>>
    tpu.wait_dma2 semaphore(%228 : memref<!tpu.dma_semaphore, #tpu.memory_space<semaphore_mem>>) src(%225 : memref<1x32xf32, #tpu.memory_space<any>>) dst(%226 : memref<1x32xf32, #tpu.memory_space<vmem>>)
    %c1_i32_251 = arith.constant 1 : i32
    %c10_i32_252 = arith.constant 10 : i32
    %c0_i32_253 = arith.constant 0 : i32
    %229 = tpu.memref_slice %arg3[%91, %c0_i32_253] : memref<24x32xf32, #tpu.memory_space<any>> -> memref<1x32xf32, #tpu.memory_space<any>>
    %c10_i32_254 = arith.constant 10 : i32
    %c0_i32_255 = arith.constant 0 : i32
    %230 = tpu.memref_slice %arg10[%c10_i32_254, %c0_i32_255] : memref<16x32xf32, #tpu.memory_space<vmem>> -> memref<1x32xf32, #tpu.memory_space<vmem>>
    %231 = tpu.memref_slice %arg11[%c1_i32_251, %c10_i32_252] : memref<2x16x!tpu.dma_semaphore, #tpu.memory_space<semaphore_mem>> -> memref<1x1x!tpu.dma_semaphore, #tpu.memory_space<semaphore_mem>>
    %232 = tpu.memref_squeeze %231 : memref<1x1x!tpu.dma_semaphore, #tpu.memory_space<semaphore_mem>> -> memref<!tpu.dma_semaphore, #tpu.memory_space<semaphore_mem>>
    tpu.wait_dma2 semaphore(%232 : memref<!tpu.dma_semaphore, #tpu.memory_space<semaphore_mem>>) src(%229 : memref<1x32xf32, #tpu.memory_space<any>>) dst(%230 : memref<1x32xf32, #tpu.memory_space<vmem>>)
    %c0_i32_256 = arith.constant 0 : i32
    %c11_i32_257 = arith.constant 11 : i32
    %c0_i32_258 = arith.constant 0 : i32
    %233 = tpu.memref_slice %arg2[%100, %c0_i32_258] : memref<24x32xf32, #tpu.memory_space<any>> -> memref<1x32xf32, #tpu.memory_space<any>>
    %c11_i32_259 = arith.constant 11 : i32
    %c0_i32_260 = arith.constant 0 : i32
    %234 = tpu.memref_slice %arg9[%c11_i32_259, %c0_i32_260] : memref<16x32xf32, #tpu.memory_space<vmem>> -> memref<1x32xf32, #tpu.memory_space<vmem>>
    %235 = tpu.memref_slice %arg11[%c0_i32_256, %c11_i32_257] : memref<2x16x!tpu.dma_semaphore, #tpu.memory_space<semaphore_mem>> -> memref<1x1x!tpu.dma_semaphore, #tpu.memory_space<semaphore_mem>>
    %236 = tpu.memref_squeeze %235 : memref<1x1x!tpu.dma_semaphore, #tpu.memory_space<semaphore_mem>> -> memref<!tpu.dma_semaphore, #tpu.memory_space<semaphore_mem>>
    tpu.wait_dma2 semaphore(%236 : memref<!tpu.dma_semaphore, #tpu.memory_space<semaphore_mem>>) src(%233 : memref<1x32xf32, #tpu.memory_space<any>>) dst(%234 : memref<1x32xf32, #tpu.memory_space<vmem>>)
    %c1_i32_261 = arith.constant 1 : i32
    %c11_i32_262 = arith.constant 11 : i32
    %c0_i32_263 = arith.constant 0 : i32
    %237 = tpu.memref_slice %arg3[%100, %c0_i32_263] : memref<24x32xf32, #tpu.memory_space<any>> -> memref<1x32xf32, #tpu.memory_space<any>>
    %c11_i32_264 = arith.constant 11 : i32
    %c0_i32_265 = arith.constant 0 : i32
    %238 = tpu.memref_slice %arg10[%c11_i32_264, %c0_i32_265] : memref<16x32xf32, #tpu.memory_space<vmem>> -> memref<1x32xf32, #tpu.memory_space<vmem>>
    %239 = tpu.memref_slice %arg11[%c1_i32_261, %c11_i32_262] : memref<2x16x!tpu.dma_semaphore, #tpu.memory_space<semaphore_mem>> -> memref<1x1x!tpu.dma_semaphore, #tpu.memory_space<semaphore_mem>>
    %240 = tpu.memref_squeeze %239 : memref<1x1x!tpu.dma_semaphore, #tpu.memory_space<semaphore_mem>> -> memref<!tpu.dma_semaphore, #tpu.memory_space<semaphore_mem>>
    tpu.wait_dma2 semaphore(%240 : memref<!tpu.dma_semaphore, #tpu.memory_space<semaphore_mem>>) src(%237 : memref<1x32xf32, #tpu.memory_space<any>>) dst(%238 : memref<1x32xf32, #tpu.memory_space<vmem>>)
    %c0_i32_266 = arith.constant 0 : i32
    %c12_i32_267 = arith.constant 12 : i32
    %c0_i32_268 = arith.constant 0 : i32
    %241 = tpu.memref_slice %arg2[%109, %c0_i32_268] : memref<24x32xf32, #tpu.memory_space<any>> -> memref<1x32xf32, #tpu.memory_space<any>>
    %c12_i32_269 = arith.constant 12 : i32
    %c0_i32_270 = arith.constant 0 : i32
    %242 = tpu.memref_slice %arg9[%c12_i32_269, %c0_i32_270] : memref<16x32xf32, #tpu.memory_space<vmem>> -> memref<1x32xf32, #tpu.memory_space<vmem>>
    %243 = tpu.memref_slice %arg11[%c0_i32_266, %c12_i32_267] : memref<2x16x!tpu.dma_semaphore, #tpu.memory_space<semaphore_mem>> -> memref<1x1x!tpu.dma_semaphore, #tpu.memory_space<semaphore_mem>>
    %244 = tpu.memref_squeeze %243 : memref<1x1x!tpu.dma_semaphore, #tpu.memory_space<semaphore_mem>> -> memref<!tpu.dma_semaphore, #tpu.memory_space<semaphore_mem>>
    tpu.wait_dma2 semaphore(%244 : memref<!tpu.dma_semaphore, #tpu.memory_space<semaphore_mem>>) src(%241 : memref<1x32xf32, #tpu.memory_space<any>>) dst(%242 : memref<1x32xf32, #tpu.memory_space<vmem>>)
    %c1_i32_271 = arith.constant 1 : i32
    %c12_i32_272 = arith.constant 12 : i32
    %c0_i32_273 = arith.constant 0 : i32
    %245 = tpu.memref_slice %arg3[%109, %c0_i32_273] : memref<24x32xf32, #tpu.memory_space<any>> -> memref<1x32xf32, #tpu.memory_space<any>>
    %c12_i32_274 = arith.constant 12 : i32
    %c0_i32_275 = arith.constant 0 : i32
    %246 = tpu.memref_slice %arg10[%c12_i32_274, %c0_i32_275] : memref<16x32xf32, #tpu.memory_space<vmem>> -> memref<1x32xf32, #tpu.memory_space<vmem>>
    %247 = tpu.memref_slice %arg11[%c1_i32_271, %c12_i32_272] : memref<2x16x!tpu.dma_semaphore, #tpu.memory_space<semaphore_mem>> -> memref<1x1x!tpu.dma_semaphore, #tpu.memory_space<semaphore_mem>>
    %248 = tpu.memref_squeeze %247 : memref<1x1x!tpu.dma_semaphore, #tpu.memory_space<semaphore_mem>> -> memref<!tpu.dma_semaphore, #tpu.memory_space<semaphore_mem>>
    tpu.wait_dma2 semaphore(%248 : memref<!tpu.dma_semaphore, #tpu.memory_space<semaphore_mem>>) src(%245 : memref<1x32xf32, #tpu.memory_space<any>>) dst(%246 : memref<1x32xf32, #tpu.memory_space<vmem>>)
    %c0_i32_276 = arith.constant 0 : i32
    %c13_i32_277 = arith.constant 13 : i32
    %c0_i32_278 = arith.constant 0 : i32
    %249 = tpu.memref_slice %arg2[%118, %c0_i32_278] : memref<24x32xf32, #tpu.memory_space<any>> -> memref<1x32xf32, #tpu.memory_space<any>>
    %c13_i32_279 = arith.constant 13 : i32
    %c0_i32_280 = arith.constant 0 : i32
    %250 = tpu.memref_slice %arg9[%c13_i32_279, %c0_i32_280] : memref<16x32xf32, #tpu.memory_space<vmem>> -> memref<1x32xf32, #tpu.memory_space<vmem>>
    %251 = tpu.memref_slice %arg11[%c0_i32_276, %c13_i32_277] : memref<2x16x!tpu.dma_semaphore, #tpu.memory_space<semaphore_mem>> -> memref<1x1x!tpu.dma_semaphore, #tpu.memory_space<semaphore_mem>>
    %252 = tpu.memref_squeeze %251 : memref<1x1x!tpu.dma_semaphore, #tpu.memory_space<semaphore_mem>> -> memref<!tpu.dma_semaphore, #tpu.memory_space<semaphore_mem>>
    tpu.wait_dma2 semaphore(%252 : memref<!tpu.dma_semaphore, #tpu.memory_space<semaphore_mem>>) src(%249 : memref<1x32xf32, #tpu.memory_space<any>>) dst(%250 : memref<1x32xf32, #tpu.memory_space<vmem>>)
    %c1_i32_281 = arith.constant 1 : i32
    %c13_i32_282 = arith.constant 13 : i32
    %c0_i32_283 = arith.constant 0 : i32
    %253 = tpu.memref_slice %arg3[%118, %c0_i32_283] : memref<24x32xf32, #tpu.memory_space<any>> -> memref<1x32xf32, #tpu.memory_space<any>>
    %c13_i32_284 = arith.constant 13 : i32
    %c0_i32_285 = arith.constant 0 : i32
    %254 = tpu.memref_slice %arg10[%c13_i32_284, %c0_i32_285] : memref<16x32xf32, #tpu.memory_space<vmem>> -> memref<1x32xf32, #tpu.memory_space<vmem>>
    %255 = tpu.memref_slice %arg11[%c1_i32_281, %c13_i32_282] : memref<2x16x!tpu.dma_semaphore, #tpu.memory_space<semaphore_mem>> -> memref<1x1x!tpu.dma_semaphore, #tpu.memory_space<semaphore_mem>>
    %256 = tpu.memref_squeeze %255 : memref<1x1x!tpu.dma_semaphore, #tpu.memory_space<semaphore_mem>> -> memref<!tpu.dma_semaphore, #tpu.memory_space<semaphore_mem>>
    tpu.wait_dma2 semaphore(%256 : memref<!tpu.dma_semaphore, #tpu.memory_space<semaphore_mem>>) src(%253 : memref<1x32xf32, #tpu.memory_space<any>>) dst(%254 : memref<1x32xf32, #tpu.memory_space<vmem>>)
    %c0_i32_286 = arith.constant 0 : i32
    %c14_i32_287 = arith.constant 14 : i32
    %c0_i32_288 = arith.constant 0 : i32
    %257 = tpu.memref_slice %arg2[%127, %c0_i32_288] : memref<24x32xf32, #tpu.memory_space<any>> -> memref<1x32xf32, #tpu.memory_space<any>>
    %c14_i32_289 = arith.constant 14 : i32
    %c0_i32_290 = arith.constant 0 : i32
    %258 = tpu.memref_slice %arg9[%c14_i32_289, %c0_i32_290] : memref<16x32xf32, #tpu.memory_space<vmem>> -> memref<1x32xf32, #tpu.memory_space<vmem>>
    %259 = tpu.memref_slice %arg11[%c0_i32_286, %c14_i32_287] : memref<2x16x!tpu.dma_semaphore, #tpu.memory_space<semaphore_mem>> -> memref<1x1x!tpu.dma_semaphore, #tpu.memory_space<semaphore_mem>>
    %260 = tpu.memref_squeeze %259 : memref<1x1x!tpu.dma_semaphore, #tpu.memory_space<semaphore_mem>> -> memref<!tpu.dma_semaphore, #tpu.memory_space<semaphore_mem>>
    tpu.wait_dma2 semaphore(%260 : memref<!tpu.dma_semaphore, #tpu.memory_space<semaphore_mem>>) src(%257 : memref<1x32xf32, #tpu.memory_space<any>>) dst(%258 : memref<1x32xf32, #tpu.memory_space<vmem>>)
    %c1_i32_291 = arith.constant 1 : i32
    %c14_i32_292 = arith.constant 14 : i32
    %c0_i32_293 = arith.constant 0 : i32
    %261 = tpu.memref_slice %arg3[%127, %c0_i32_293] : memref<24x32xf32, #tpu.memory_space<any>> -> memref<1x32xf32, #tpu.memory_space<any>>
    %c14_i32_294 = arith.constant 14 : i32
    %c0_i32_295 = arith.constant 0 : i32
    %262 = tpu.memref_slice %arg10[%c14_i32_294, %c0_i32_295] : memref<16x32xf32, #tpu.memory_space<vmem>> -> memref<1x32xf32, #tpu.memory_space<vmem>>
    %263 = tpu.memref_slice %arg11[%c1_i32_291, %c14_i32_292] : memref<2x16x!tpu.dma_semaphore, #tpu.memory_space<semaphore_mem>> -> memref<1x1x!tpu.dma_semaphore, #tpu.memory_space<semaphore_mem>>
    %264 = tpu.memref_squeeze %263 : memref<1x1x!tpu.dma_semaphore, #tpu.memory_space<semaphore_mem>> -> memref<!tpu.dma_semaphore, #tpu.memory_space<semaphore_mem>>
    tpu.wait_dma2 semaphore(%264 : memref<!tpu.dma_semaphore, #tpu.memory_space<semaphore_mem>>) src(%261 : memref<1x32xf32, #tpu.memory_space<any>>) dst(%262 : memref<1x32xf32, #tpu.memory_space<vmem>>)
    %c0_i32_296 = arith.constant 0 : i32
    %c15_i32_297 = arith.constant 15 : i32
    %c0_i32_298 = arith.constant 0 : i32
    %265 = tpu.memref_slice %arg2[%136, %c0_i32_298] : memref<24x32xf32, #tpu.memory_space<any>> -> memref<1x32xf32, #tpu.memory_space<any>>
    %c15_i32_299 = arith.constant 15 : i32
    %c0_i32_300 = arith.constant 0 : i32
    %266 = tpu.memref_slice %arg9[%c15_i32_299, %c0_i32_300] : memref<16x32xf32, #tpu.memory_space<vmem>> -> memref<1x32xf32, #tpu.memory_space<vmem>>
    %267 = tpu.memref_slice %arg11[%c0_i32_296, %c15_i32_297] : memref<2x16x!tpu.dma_semaphore, #tpu.memory_space<semaphore_mem>> -> memref<1x1x!tpu.dma_semaphore, #tpu.memory_space<semaphore_mem>>
    %268 = tpu.memref_squeeze %267 : memref<1x1x!tpu.dma_semaphore, #tpu.memory_space<semaphore_mem>> -> memref<!tpu.dma_semaphore, #tpu.memory_space<semaphore_mem>>
    tpu.wait_dma2 semaphore(%268 : memref<!tpu.dma_semaphore, #tpu.memory_space<semaphore_mem>>) src(%265 : memref<1x32xf32, #tpu.memory_space<any>>) dst(%266 : memref<1x32xf32, #tpu.memory_space<vmem>>)
    %c1_i32_301 = arith.constant 1 : i32
    %c15_i32_302 = arith.constant 15 : i32
    %c0_i32_303 = arith.constant 0 : i32
    %269 = tpu.memref_slice %arg3[%136, %c0_i32_303] : memref<24x32xf32, #tpu.memory_space<any>> -> memref<1x32xf32, #tpu.memory_space<any>>
    %c15_i32_304 = arith.constant 15 : i32
    %c0_i32_305 = arith.constant 0 : i32
    %270 = tpu.memref_slice %arg10[%c15_i32_304, %c0_i32_305] : memref<16x32xf32, #tpu.memory_space<vmem>> -> memref<1x32xf32, #tpu.memory_space<vmem>>
    %271 = tpu.memref_slice %arg11[%c1_i32_301, %c15_i32_302] : memref<2x16x!tpu.dma_semaphore, #tpu.memory_space<semaphore_mem>> -> memref<1x1x!tpu.dma_semaphore, #tpu.memory_space<semaphore_mem>>
    %272 = tpu.memref_squeeze %271 : memref<1x1x!tpu.dma_semaphore, #tpu.memory_space<semaphore_mem>> -> memref<!tpu.dma_semaphore, #tpu.memory_space<semaphore_mem>>
    tpu.wait_dma2 semaphore(%272 : memref<!tpu.dma_semaphore, #tpu.memory_space<semaphore_mem>>) src(%269 : memref<1x32xf32, #tpu.memory_space<any>>) dst(%270 : memref<1x32xf32, #tpu.memory_space<vmem>>)
    %c0_306 = arith.constant 0 : index
    %c0_307 = arith.constant 0 : index
    %273 = vector.load %arg9[%c0_306, %c0_307] : memref<16x32xf32, #tpu.memory_space<vmem>>, vector<16x32xf32>
    %c0_308 = arith.constant 0 : index
    %c0_309 = arith.constant 0 : index
    %274 = vector.load %arg10[%c0_308, %c0_309] : memref<16x32xf32, #tpu.memory_space<vmem>>, vector<16x32xf32>
    %c0_310 = arith.constant 0 : index
    %c0_311 = arith.constant 0 : index
    %275 = vector.load %arg4[%c0_310, %c0_311] : memref<48x32xf32, #tpu.memory_space<vmem>>, vector<48x32xf32>
    %cst = arith.constant dense<0.000000e+00> : vector<16x48xf32>
    %276 = tpu.matmul %273, %275, %cst {dimension_numbers = #tpu.dot_dimension_numbers<[1], [1], [0], [0], [0, 0, 1, 0], [], []>} : vector<16x32xf32>, vector<48x32xf32>, vector<16x48xf32> -> vector<16x48xf32>
    %c0_312 = arith.constant 0 : index
    %c0_313 = arith.constant 0 : index
    %277 = vector.load %arg5[%c0_312, %c0_313] : memref<1x48xf32, #tpu.memory_space<vmem>>, vector<1x48xf32>
    %278 = vector.broadcast %277 : vector<1x48xf32> to vector<16x48xf32>
    %279 = arith.addf %276, %278 : vector<16x48xf32>
    %280 = vector.broadcast %0 : f32 to vector<16x48xf32>
    %281 = arith.mulf %280, %279 : vector<16x48xf32>
    %282 = math.tanh %281 : vector<16x48xf32>
    %c0_314 = arith.constant 0 : index
    %c0_315 = arith.constant 0 : index
    %283 = vector.load %arg6[%c0_314, %c0_315] : memref<48x32xf32, #tpu.memory_space<vmem>>, vector<48x32xf32>
    %cst_316 = arith.constant dense<0.000000e+00> : vector<16x48xf32>
    %284 = tpu.matmul %274, %283, %cst_316 {dimension_numbers = #tpu.dot_dimension_numbers<[1], [1], [0], [0], [0, 0, 1, 0], [], []>} : vector<16x32xf32>, vector<48x32xf32>, vector<16x48xf32> -> vector<16x48xf32>
    %c0_317 = arith.constant 0 : index
    %c0_318 = arith.constant 0 : index
    %285 = vector.load %arg7[%c0_317, %c0_318] : memref<1x48xf32, #tpu.memory_space<vmem>>, vector<1x48xf32>
    %286 = vector.broadcast %285 : vector<1x48xf32> to vector<16x48xf32>
    %287 = arith.addf %284, %286 : vector<16x48xf32>
    %288 = vector.broadcast %0 : f32 to vector<16x48xf32>
    %289 = arith.mulf %288, %287 : vector<16x48xf32>
    %290 = math.tanh %289 : vector<16x48xf32>
    %cst_319 = arith.constant dense<0.000000e+00> : vector<16x16xf32>
    %291 = tpu.matmul %282, %290, %cst_319 {dimension_numbers = #tpu.dot_dimension_numbers<[1], [1], [0], [0], [0, 0, 1, 0], [], []>} : vector<16x48xf32>, vector<16x48xf32>, vector<16x16xf32> -> vector<16x16xf32>
    %292 = tpu.transpose %291, [1, 0] : vector<16x16xf32> -> vector<16x16xf32>
    %293 = arith.subf %291, %292 : vector<16x16xf32>
    %294 = vector.broadcast %0 : f32 to vector<16x16xf32>
    %295 = arith.mulf %294, %293 : vector<16x16xf32>
    %296 = math.tanh %295 : vector<16x16xf32>
    %cst_320 = arith.constant 0.000000e+00 : f32
    %297 = vector.broadcast %cst_320 : f32 to vector<16x16xf32>
    %298 = arith.maximumf %296, %297 : vector<16x16xf32>
    %c0_321 = arith.constant 0 : index
    %c0_322 = arith.constant 0 : index
    %299 = vector.load %arg8[%c0_321, %c0_322] : memref<16x16xf32, #tpu.memory_space<vmem>>, vector<16x16xf32>
    tpu.vector_store %arg8[%c0_321, %c0_322], %298 {strides = array<i32>} : memref<16x16xf32, #tpu.memory_space<vmem>>, vector<16x16xf32>,
    return
  }
}

</mosaic_0001>

<llo_original>
// kernel: tpu_custom_call.1
$region0: #{tpu_custom_call.1}
  #allocation0 [shape = 'u32[]', space=smem, size = 0x4, offset = 0x4, fixed_abs, tag = 'smem constant byte address 0x4 - core index']
  #allocation1 [shape = 'u32[72,128]{1,0:T(1,128)}', space=vmem, size = 0x9000, scoped, tag = 'internal scratch']
  #allocation2 [shape = 'f32[16,32]{1,0:T(8,128)}', space=vmem, size = 0x2000, scoped, tag = 'scratch operand']
  #allocation3 [shape = 'f32[16,32]{1,0:T(8,128)}', space=vmem, size = 0x2000, scoped, tag = 'scratch operand']
  #allocation4 [shape = 's32[32]{0}', space=sflag, size = 0x80, scoped, tag = 'scratch operand']
  #allocation5 [shape = 'f32[1,1]{1,0:T(1,128)S(6)}', space=smem, size = 0x200, scoped, tag = 'scoped memory for tpu_custom_call.1']
  #allocation10 [shape = 's32[]', space=sflag, size = 0x4, offset = 0, fixed_abs, tag = 'sflag constant byte address 0x0 - dummy sync flag']
  #allocation11 [shape = 's32[]', space=sflag, size = 0x4, offset = 0, fixed_abs, tag = 'sflag constant byte address 0x0 - dummy sync flag']
  #allocation12 [shape = 's32[]', space=sflag, size = 0x4, offset = 0, fixed_abs, tag = 'sflag constant byte address 0x0 - dummy sync flag']
  #allocation13 [shape = 's32[]', space=sflag, size = 0x4, offset = 0, fixed_abs, tag = 'sflag constant byte address 0x0 - dummy sync flag']
  #allocation14 [shape = 's32[]', space=sflag, size = 0x4, offset = 0, fixed_abs, tag = 'sflag constant byte address 0x0 - dummy sync flag']
  #allocation15 [shape = 's32[]', space=sflag, size = 0x4, offset = 0, fixed_abs, tag = 'sflag constant byte address 0x0 - dummy sync flag']
  #allocation16 [shape = 's32[]', space=sflag, size = 0x4, offset = 0, fixed_abs, tag = 'sflag constant byte address 0x0 - dummy sync flag']
  #allocation17 [shape = 's32[]', space=sflag, size = 0x4, offset = 0, fixed_abs, tag = 'sflag constant byte address 0x0 - dummy sync flag']
  #allocation18 [shape = 's32[]', space=sflag, size = 0x4, offset = 0, fixed_abs, tag = 'sflag constant byte address 0x0 - dummy sync flag']
  #allocation19 [shape = 's32[]', space=sflag, size = 0x4, offset = 0, fixed_abs, tag = 'sflag constant byte address 0x0 - dummy sync flag']
  #allocation20 [shape = 's32[]', space=sflag, size = 0x4, offset = 0, fixed_abs, tag = 'sflag constant byte address 0x0 - dummy sync flag']
  #allocation21 [shape = 's32[]', space=sflag, size = 0x4, offset = 0, fixed_abs, tag = 'sflag constant byte address 0x0 - dummy sync flag']
  #allocation22 [shape = 's32[]', space=sflag, size = 0x4, offset = 0, fixed_abs, tag = 'sflag constant byte address 0x0 - dummy sync flag']
  #allocation23 [shape = 's32[]', space=sflag, size = 0x4, offset = 0, fixed_abs, tag = 'sflag constant byte address 0x0 - dummy sync flag']
  #allocation24 [shape = 's32[]', space=sflag, size = 0x4, offset = 0, fixed_abs, tag = 'sflag constant byte address 0x0 - dummy sync flag']
  #allocation25 [shape = 's32[]', space=sflag, size = 0x4, offset = 0, fixed_abs, tag = 'sflag constant byte address 0x0 - dummy sync flag']
  #allocation26 [shape = 's32[]', space=sflag, size = 0x4, offset = 0, fixed_abs, tag = 'sflag constant byte address 0x0 - dummy sync flag']
  #allocation27 [shape = 's32[]', space=sflag, size = 0x4, offset = 0, fixed_abs, tag = 'sflag constant byte address 0x0 - dummy sync flag']
  #allocation28 [shape = 's32[]', space=sflag, size = 0x4, offset = 0, fixed_abs, tag = 'sflag constant byte address 0x0 - dummy sync flag']
  #allocation29 [shape = 's32[]', space=sflag, size = 0x4, offset = 0, fixed_abs, tag = 'sflag constant byte address 0x0 - dummy sync flag']
  #allocation30 [shape = 's32[]', space=sflag, size = 0x4, offset = 0, fixed_abs, tag = 'sflag constant byte address 0x0 - dummy sync flag']
  #allocation31 [shape = 's32[]', space=sflag, size = 0x4, offset = 0, fixed_abs, tag = 'sflag constant byte address 0x0 - dummy sync flag']
  #allocation32 [shape = 's32[]', space=sflag, size = 0x4, offset = 0, fixed_abs, tag = 'sflag constant byte address 0x0 - dummy sync flag']
  #allocation33 [shape = 's32[]', space=sflag, size = 0x4, offset = 0, fixed_abs, tag = 'sflag constant byte address 0x0 - dummy sync flag']
  #allocation34 [shape = 's32[]', space=sflag, size = 0x4, offset = 0, fixed_abs, tag = 'sflag constant byte address 0x0 - dummy sync flag']
  #allocation35 [shape = 's32[]', space=sflag, size = 0x4, offset = 0, fixed_abs, tag = 'sflag constant byte address 0x0 - dummy sync flag']
  #allocation36 [shape = 's32[]', space=sflag, size = 0x4, offset = 0, fixed_abs, tag = 'sflag constant byte address 0x0 - dummy sync flag']
  #allocation37 [shape = 's32[]', space=sflag, size = 0x4, offset = 0, fixed_abs, tag = 'sflag constant byte address 0x0 - dummy sync flag']
  #allocation38 [shape = 's32[]', space=sflag, size = 0x4, offset = 0, fixed_abs, tag = 'sflag constant byte address 0x0 - dummy sync flag']
  #allocation39 [shape = 's32[]', space=sflag, size = 0x4, offset = 0, fixed_abs, tag = 'sflag constant byte address 0x0 - dummy sync flag']
  #allocation40 [shape = 's32[]', space=sflag, size = 0x4, offset = 0, fixed_abs, tag = 'sflag constant byte address 0x0 - dummy sync flag']
  #allocation41 [shape = 's32[]', space=sflag, size = 0x4, offset = 0, fixed_abs, tag = 'sflag constant byte address 0x0 - dummy sync flag']
  %s0 = inlined_call_operand.vmem [shape: s32[16], index: 0, kind: input, shape index: {}]
  %s1 = inlined_call_operand.<no memory space> [shape: f32[1,1], index: 1, kind: input, shape index: {}]
  %s2 = inlined_call_operand.vmem [shape: f32[24,32], index: 2, kind: input, shape index: {}]
  %s3 = inlined_call_operand.vmem [shape: f32[24,32], index: 3, kind: input, shape index: {}]
  %s4 = inlined_call_operand.vmem [shape: f32[48,32], index: 4, kind: input, shape index: {}]
  %s5 = inlined_call_operand.vmem [shape: f32[1,48], index: 5, kind: input, shape index: {}]
  %s6 = inlined_call_operand.vmem [shape: f32[48,32], index: 6, kind: input, shape index: {}]
  %s7 = inlined_call_operand.vmem [shape: f32[1,48], index: 7, kind: input, shape index: {}]
  %s8 = inlined_call_operand.hbm [shape: f32[16,16], index: 8, kind: output, shape index: {}]
  %s9 = sld [smem:[#allocation0]]
  $region998: #{tpu_custom_call.1} parent=0
    _
  %s11 = ssub.s32 1, %s9
  %s12 = scalar_select 0, %s11, %s9
  %13 = sst [smem:[#allocation5]] %s1
  $region1: #{tpu_custom_call.1} parent=0
    #allocation6 [shape = 'u8[512]{0}', space=smem, size = 0x200, scoped, tag = 'input window, operand 0, single buffered']
    #allocation7 [shape = 's32[1]{0}', space=sflag, size = 0x4, scoped, tag = 'scoped memory for tpu_custom_call.1']
    #allocation8 [shape = 's32[1]{0}', space=sflag, size = 0x4, scoped, tag = 'scoped memory for tpu_custom_call.1']
    #allocation9 [shape = 'u8[8192]{0}', space=vmem, size = 0x2000, scoped, tag = 'output window, operand 0, single buffered']
    %14 = vsyncpa [#allocation8], 0
    %15 = vsyncpa [#allocation7], 0
    // Predicated region
    $region2: #{tpu_custom_call.1} parent=1 // pred_check
      _
    $region3: #{tpu_custom_call.1} parent=1 // pred_check_branch
      %17 = sbr.rel (0) target = $region5
    $region4: #{tpu_custom_call.1} parent=1 // pred_region
      %19 = vsyncadd [#allocation8], 0
      %s21 = sshll.u32 %s0, 4
      %s22 = int_to_ptr.vmem [resolvable:$true] %s21
      %24 = dma.vmem_to_smem %s22, 16, [#allocation6], [#allocation8]
    $region5: #{tpu_custom_call.1} parent=1 // pred_fallthru
      _
    // Predicated region
    $region6: #{tpu_custom_call.1} parent=1 // pred_check
      _
    $region7: #{tpu_custom_call.1} parent=1 // pred_check_branch
      %26 = sbr.rel (0) target = $region9
    $region8: #{tpu_custom_call.1} parent=1 // pred_region
      _
    $region9: #{tpu_custom_call.1} parent=1 // pred_fallthru
      _
    // Predicated region
    $region10: #{tpu_custom_call.1} parent=1 // pred_check
      _
    $region11: #{tpu_custom_call.1} parent=1 // pred_check_branch
      %28 = sbr.rel (0) target = $region13
    $region12: #{tpu_custom_call.1} parent=1 // pred_region
      _
    $region13: #{tpu_custom_call.1} parent=1 // pred_fallthru
      _
    // Predicated region
    $region14: #{tpu_custom_call.1} parent=1 // pred_check
      _
    $region15: #{tpu_custom_call.1} parent=1 // pred_check_branch
      %30 = sbr.rel (0) target = $region17
    $region16: #{tpu_custom_call.1} parent=1 // pred_region
      _
    $region17: #{tpu_custom_call.1} parent=1 // pred_fallthru
      _
    // Predicated region
    $region18: #{tpu_custom_call.1} parent=1 // pred_check
      _
    $region19: #{tpu_custom_call.1} parent=1 // pred_check_branch
      %32 = sbr.rel (0) target = $region21
    $region20: #{tpu_custom_call.1} parent=1 // pred_region
      _
    $region21: #{tpu_custom_call.1} parent=1 // pred_fallthru
      _
    // Predicated region
    $region22: #{tpu_custom_call.1} parent=1 // pred_check
      _
    $region23: #{tpu_custom_call.1} parent=1 // pred_check_branch
      %34 = sbr.rel (0) target = $region25
    $region24: #{tpu_custom_call.1} parent=1 // pred_region
      _
    $region25: #{tpu_custom_call.1} parent=1 // pred_fallthru
      _
    // Predicated region
    $region26: #{tpu_custom_call.1} parent=1 // pred_check
      _
    $region27: #{tpu_custom_call.1} parent=1 // pred_check_branch
      %36 = sbr.rel (0) target = $region29
    $region28: #{tpu_custom_call.1} parent=1 // pred_region
      %38 = dma.done [#allocation8], 16
    $region29: #{tpu_custom_call.1} parent=1 // pred_fallthru
      _
    %39 = sfence
    %s40 = sld [smem:[#allocation5]]
    %s41 = sld [smem:[#allocation6]]
    %s42 = scalar_lea.vmem %s2, %s41
    // Predicated region
    $region30: #{tpu_custom_call.1} parent=1 // pred_check
      _
    $region31: #{tpu_custom_call.1} parent=1 // pred_check_branch
      %44 = sbr.rel target = $region33
    $region32: #{tpu_custom_call.1} parent=1 // pred_region
      // Predicated region
      $region45: #{tpu_custom_call.1} parent=32 // pred_check
        _
      $region46: #{tpu_custom_call.1} parent=32 // pred_check_branch
        %60 = sbr.rel (0) target = $region48
      $region47: #{tpu_custom_call.1} parent=32 // pred_region
        %s62 = ssub.s32 2, 1
        loop: start=0, step=1, limit=1
        $region49: #{tpu_custom_call.1} parent=47 // loop_pre_header
          _
        $region50: #{tpu_custom_call.1} parent=47 // loop_header
          %s64 = sphi 0, %s68
          %p65 = scmp.ge.s32.totalorder %s64, 1
          %s69 = sphi %s42, %s42
          %s70 = sphi [#allocation2], [#allocation2]
        $region51: #{tpu_custom_call.1} parent=47 // loop_header_branch
          %67 = sbr.rel (%p65) target = $region55
        $region52: #{tpu_custom_call.1} parent=47 // loop_body
          %v71 = vld [vmem:[%s69] sm:%s62]
          %72 = vst [vmem:[%s70] sm:%s62] %v71
        $region53: #{tpu_custom_call.1} parent=47 // loop_footer
          %s68 = sadd.s32 1, %s64
        $region54: #{tpu_custom_call.1} parent=47 // loop_footer_branch
          %63 = sbr.rel target = $region50
        $region55: #{tpu_custom_call.1} parent=47 // loop_exit
          _
      $region48: #{tpu_custom_call.1} parent=32 // pred_fallthru
        _
    $region33: #{tpu_custom_call.1} parent=1 // pred_fallthru
      _
    // Predicated region
    $region34: #{tpu_custom_call.1} parent=1 // pred_check
      _
    $region35: #{tpu_custom_call.1} parent=1 // pred_check_branch
      %46 = sbr.rel (0) target = $region37
    $region36: #{tpu_custom_call.1} parent=1 // pred_region
      %s48 = ssub.s32 2, 1
      loop: start=0, step=1, limit=1
      $region38: #{tpu_custom_call.1} parent=36 // loop_pre_header
        _
      $region39: #{tpu_custom_call.1} parent=36 // loop_header
        %s50 = sphi 0, %s54
        %p51 = scmp.ge.s32.totalorder %s50, 1
        %s55 = sphi %s42, %s42
        %s56 = sphi [#allocation2], [#allocation2]
      $region40: #{tpu_custom_call.1} parent=36 // loop_header_branch
        %53 = sbr.rel (%p51) target = $region44
      $region41: #{tpu_custom_call.1} parent=36 // loop_body
        %v57 = vld [vmem:[%s55] sm:%s48]
        %58 = vst [vmem:[%s56] sm:%s48] %v57
      $region42: #{tpu_custom_call.1} parent=36 // loop_footer
        %s54 = sadd.s32 1, %s50
      $region43: #{tpu_custom_call.1} parent=36 // loop_footer_branch
        %49 = sbr.rel target = $region39
      $region44: #{tpu_custom_call.1} parent=36 // loop_exit
        _
    $region37: #{tpu_custom_call.1} parent=1 // pred_fallthru
      _
    // Predicated region
    $region56: #{tpu_custom_call.1} parent=1 // pred_check
      _
    $region57: #{tpu_custom_call.1} parent=1 // pred_check_branch
      %75 = sbr.rel (0) target = $region59
    $region58: #{tpu_custom_call.1} parent=1 // pred_region
      %76 = vsyncadd [#allocation4], 16
    $region59: #{tpu_custom_call.1} parent=1 // pred_fallthru
      _
    %s77 = scalar_lea.vmem %s3, %s41
    %s78 = scalar_lea.sflag [#allocation4], 16
    // Predicated region
    $region60: #{tpu_custom_call.1} parent=1 // pred_check
      _
    $region61: #{tpu_custom_call.1} parent=1 // pred_check_branch
      %80 = sbr.rel target = $region63
    $region62: #{tpu_custom_call.1} parent=1 // pred_region
      // Predicated region
      $region75: #{tpu_custom_call.1} parent=62 // pred_check
        _
      $region76: #{tpu_custom_call.1} parent=62 // pred_check_branch
        %96 = sbr.rel (0) target = $region78
      $region77: #{tpu_custom_call.1} parent=62 // pred_region
        %s98 = ssub.s32 2, 1
        loop: start=0, step=1, limit=1
        $region79: #{tpu_custom_call.1} parent=77 // loop_pre_header
          _
        $region80: #{tpu_custom_call.1} parent=77 // loop_header
          %s100 = sphi 0, %s104
          %p101 = scmp.ge.s32.totalorder %s100, 1
          %s105 = sphi %s77, %s77
          %s106 = sphi [#allocation3], [#allocation3]
        $region81: #{tpu_custom_call.1} parent=77 // loop_header_branch
          %103 = sbr.rel (%p101) target = $region85
        $region82: #{tpu_custom_call.1} parent=77 // loop_body
          %v107 = vld [vmem:[%s105] sm:%s98]
          %108 = vst [vmem:[%s106] sm:%s98] %v107
        $region83: #{tpu_custom_call.1} parent=77 // loop_footer
          %s104 = sadd.s32 1, %s100
        $region84: #{tpu_custom_call.1} parent=77 // loop_footer_branch
          %99 = sbr.rel target = $region80
        $region85: #{tpu_custom_call.1} parent=77 // loop_exit
          _
      $region78: #{tpu_custom_call.1} parent=62 // pred_fallthru
        _
    $region63: #{tpu_custom_call.1} parent=1 // pred_fallthru
      _
    // Predicated region
    $region64: #{tpu_custom_call.1} parent=1 // pred_check
      _
    $region65: #{tpu_custom_call.1} parent=1 // pred_check_branch
      %82 = sbr.rel (0) target = $region67
    $region66: #{tpu_custom_call.1} parent=1 // pred_region
      %s84 = ssub.s32 2, 1
      loop: start=0, step=1, limit=1
      $region68: #{tpu_custom_call.1} parent=66 // loop_pre_header
        _
      $region69: #{tpu_custom_call.1} parent=66 // loop_header
        %s86 = sphi 0, %s90
        %p87 = scmp.ge.s32.totalorder %s86, 1
        %s91 = sphi %s77, %s77
        %s92 = sphi [#allocation3], [#allocation3]
      $region70: #{tpu_custom_call.1} parent=66 // loop_header_branch
        %89 = sbr.rel (%p87) target = $region74
      $region71: #{tpu_custom_call.1} parent=66 // loop_body
        %v93 = vld [vmem:[%s91] sm:%s84]
        %94 = vst [vmem:[%s92] sm:%s84] %v93
      $region72: #{tpu_custom_call.1} parent=66 // loop_footer
        %s90 = sadd.s32 1, %s86
      $region73: #{tpu_custom_call.1} parent=66 // loop_footer_branch
        %85 = sbr.rel target = $region69
      $region74: #{tpu_custom_call.1} parent=66 // loop_exit
        _
    $region67: #{tpu_custom_call.1} parent=1 // pred_fallthru
      _
    // Predicated region
    $region86: #{tpu_custom_call.1} parent=1 // pred_check
      _
    $region87: #{tpu_custom_call.1} parent=1 // pred_check_branch
      %111 = sbr.rel (0) target = $region89
    $region88: #{tpu_custom_call.1} parent=1 // pred_region
      %112 = vsyncadd %s78, 16
    $region89: #{tpu_custom_call.1} parent=1 // pred_fallthru
      _
    %s113 = sld [smem:[#allocation6 + $0x1]]
    %s114 = scalar_lea.vmem %s2, %s113
    %s115 = scalar_lea.vmem [#allocation2], 1
    %s116 = scalar_lea.sflag [#allocation4], 1
    // Predicated region
    $region90: #{tpu_custom_call.1} parent=1 // pred_check
      _
    $region91: #{tpu_custom_call.1} parent=1 // pred_check_branch
      %118 = sbr.rel target = $region93
    $region92: #{tpu_custom_call.1} parent=1 // pred_region
      // Predicated region
      $region105: #{tpu_custom_call.1} parent=92 // pred_check
        _
      $region106: #{tpu_custom_call.1} parent=92 // pred_check_branch
        %134 = sbr.rel (0) target = $region108
      $region107: #{tpu_custom_call.1} parent=92 // pred_region
        %s136 = ssub.s32 2, 1
        loop: start=0, step=1, limit=1
        $region109: #{tpu_custom_call.1} parent=107 // loop_pre_header
          _
        $region110: #{tpu_custom_call.1} parent=107 // loop_header
          %s138 = sphi 0, %s142
          %p139 = scmp.ge.s32.totalorder %s138, 1
          %s143 = sphi %s114, %s114
          %s144 = sphi %s115, %s115
        $region111: #{tpu_custom_call.1} parent=107 // loop_header_branch
          %141 = sbr.rel (%p139) target = $region115
        $region112: #{tpu_custom_call.1} parent=107 // loop_body
          %v145 = vld [vmem:[%s143] sm:%s136]
          %146 = vst [vmem:[%s144] sm:%s136] %v145
        $region113: #{tpu_custom_call.1} parent=107 // loop_footer
          %s142 = sadd.s32 1, %s138
        $region114: #{tpu_custom_call.1} parent=107 // loop_footer_branch
          %137 = sbr.rel target = $region110
        $region115: #{tpu_custom_call.1} parent=107 // loop_exit
          _
      $region108: #{tpu_custom_call.1} parent=92 // pred_fallthru
        _
    $region93: #{tpu_custom_call.1} parent=1 // pred_fallthru
      _
    // Predicated region
    $region94: #{tpu_custom_call.1} parent=1 // pred_check
      _
    $region95: #{tpu_custom_call.1} parent=1 // pred_check_branch
      %120 = sbr.rel (0) target = $region97
    $region96: #{tpu_custom_call.1} parent=1 // pred_region
      %s122 = ssub.s32 2, 1
      loop: start=0, step=1, limit=1
      $region98: #{tpu_custom_call.1} parent=96 // loop_pre_header
        _
      $region99: #{tpu_custom_call.1} parent=96 // loop_header
        %s124 = sphi 0, %s128
        %p125 = scmp.ge.s32.totalorder %s124, 1
        %s129 = sphi %s114, %s114
        %s130 = sphi %s115, %s115
      $region100: #{tpu_custom_call.1} parent=96 // loop_header_branch
        %127 = sbr.rel (%p125) target = $region104
      $region101: #{tpu_custom_call.1} parent=96 // loop_body
        %v131 = vld [vmem:[%s129] sm:%s122]
        %132 = vst [vmem:[%s130] sm:%s122] %v131
      $region102: #{tpu_custom_call.1} parent=96 // loop_footer
        %s128 = sadd.s32 1, %s124
      $region103: #{tpu_custom_call.1} parent=96 // loop_footer_branch
        %123 = sbr.rel target = $region99
      $region104: #{tpu_custom_call.1} parent=96 // loop_exit
        _
    $region97: #{tpu_custom_call.1} parent=1 // pred_fallthru
      _
    // Predicated region
    $region116: #{tpu_custom_call.1} parent=1 // pred_check
      _
    $region117: #{tpu_custom_call.1} parent=1 // pred_check_branch
      %149 = sbr.rel (0) target = $region119
    $region118: #{tpu_custom_call.1} parent=1 // pred_region
      %150 = vsyncadd %s116, 16
    $region119: #{tpu_custom_call.1} parent=1 // pred_fallthru
      _
    %s151 = scalar_lea.vmem %s3, %s113
    %s152 = scalar_lea.vmem [#allocation3], 1
    %s153 = scalar_lea.sflag [#allocation4], 17
    // Predicated region
    $region120: #{tpu_custom_call.1} parent=1 // pred_check
      _
    $region121: #{tpu_custom_call.1} parent=1 // pred_check_branch
      %155 = sbr.rel target = $region123
    $region122: #{tpu_custom_call.1} parent=1 // pred_region
      // Predicated region
      $region135: #{tpu_custom_call.1} parent=122 // pred_check
        _
      $region136: #{tpu_custom_call.1} parent=122 // pred_check_branch
        %171 = sbr.rel (0) target = $region138
      $region137: #{tpu_custom_call.1} parent=122 // pred_region
        %s173 = ssub.s32 2, 1
        loop: start=0, step=1, limit=1
        $region139: #{tpu_custom_call.1} parent=137 // loop_pre_header
          _
        $region140: #{tpu_custom_call.1} parent=137 // loop_header
          %s175 = sphi 0, %s179
          %p176 = scmp.ge.s32.totalorder %s175, 1
          %s180 = sphi %s151, %s151
          %s181 = sphi %s152, %s152
        $region141: #{tpu_custom_call.1} parent=137 // loop_header_branch
          %178 = sbr.rel (%p176) target = $region145
        $region142: #{tpu_custom_call.1} parent=137 // loop_body
          %v182 = vld [vmem:[%s180] sm:%s173]
          %183 = vst [vmem:[%s181] sm:%s173] %v182
        $region143: #{tpu_custom_call.1} parent=137 // loop_footer
          %s179 = sadd.s32 1, %s175
        $region144: #{tpu_custom_call.1} parent=137 // loop_footer_branch
          %174 = sbr.rel target = $region140
        $region145: #{tpu_custom_call.1} parent=137 // loop_exit
          _
      $region138: #{tpu_custom_call.1} parent=122 // pred_fallthru
        _
    $region123: #{tpu_custom_call.1} parent=1 // pred_fallthru
      _
    // Predicated region
    $region124: #{tpu_custom_call.1} parent=1 // pred_check
      _
    $region125: #{tpu_custom_call.1} parent=1 // pred_check_branch
      %157 = sbr.rel (0) target = $region127
    $region126: #{tpu_custom_call.1} parent=1 // pred_region
      %s159 = ssub.s32 2, 1
      loop: start=0, step=1, limit=1
      $region128: #{tpu_custom_call.1} parent=126 // loop_pre_header
        _
      $region129: #{tpu_custom_call.1} parent=126 // loop_header
        %s161 = sphi 0, %s165
        %p162 = scmp.ge.s32.totalorder %s161, 1
        %s166 = sphi %s151, %s151
        %s167 = sphi %s152, %s152
      $region130: #{tpu_custom_call.1} parent=126 // loop_header_branch
        %164 = sbr.rel (%p162) target = $region134
      $region131: #{tpu_custom_call.1} parent=126 // loop_body
        %v168 = vld [vmem:[%s166] sm:%s159]
        %169 = vst [vmem:[%s167] sm:%s159] %v168
      $region132: #{tpu_custom_call.1} parent=126 // loop_footer
        %s165 = sadd.s32 1, %s161
      $region133: #{tpu_custom_call.1} parent=126 // loop_footer_branch
        %160 = sbr.rel target = $region129
      $region134: #{tpu_custom_call.1} parent=126 // loop_exit
        _
    $region127: #{tpu_custom_call.1} parent=1 // pred_fallthru
      _
    // Predicated region
    $region146: #{tpu_custom_call.1} parent=1 // pred_check
      _
    $region147: #{tpu_custom_call.1} parent=1 // pred_check_branch
      %186 = sbr.rel (0) target = $region149
    $region148: #{tpu_custom_call.1} parent=1 // pred_region
      %187 = vsyncadd %s153, 16
    $region149: #{tpu_custom_call.1} parent=1 // pred_fallthru
      _
    %s188 = sld [smem:[#allocation6 + $0x2]]
    %s189 = scalar_lea.vmem %s2, %s188
    %s190 = scalar_lea.vmem [#allocation2], 2
    %s191 = scalar_lea.sflag [#allocation4], 2
    // Predicated region
    $region150: #{tpu_custom_call.1} parent=1 // pred_check
      _
    $region151: #{tpu_custom_call.1} parent=1 // pred_check_branch
      %193 = sbr.rel target = $region153
    $region152: #{tpu_custom_call.1} parent=1 // pred_region
      // Predicated region
      $region165: #{tpu_custom_call.1} parent=152 // pred_check
        _
      $region166: #{tpu_custom_call.1} parent=152 // pred_check_branch
        %209 = sbr.rel (0) target = $region168
      $region167: #{tpu_custom_call.1} parent=152 // pred_region
        %s211 = ssub.s32 2, 1
        loop: start=0, step=1, limit=1
        $region169: #{tpu_custom_call.1} parent=167 // loop_pre_header
          _
        $region170: #{tpu_custom_call.1} parent=167 // loop_header
          %s213 = sphi 0, %s217
          %p214 = scmp.ge.s32.totalorder %s213, 1
          %s218 = sphi %s189, %s189
          %s219 = sphi %s190, %s190
        $region171: #{tpu_custom_call.1} parent=167 // loop_header_branch
          %216 = sbr.rel (%p214) target = $region175
        $region172: #{tpu_custom_call.1} parent=167 // loop_body
          %v220 = vld [vmem:[%s218] sm:%s211]
          %221 = vst [vmem:[%s219] sm:%s211] %v220
        $region173: #{tpu_custom_call.1} parent=167 // loop_footer
          %s217 = sadd.s32 1, %s213
        $region174: #{tpu_custom_call.1} parent=167 // loop_footer_branch
          %212 = sbr.rel target = $region170
        $region175: #{tpu_custom_call.1} parent=167 // loop_exit
          _
      $region168: #{tpu_custom_call.1} parent=152 // pred_fallthru
        _
    $region153: #{tpu_custom_call.1} parent=1 // pred_fallthru
      _
    // Predicated region
    $region154: #{tpu_custom_call.1} parent=1 // pred_check
      _
    $region155: #{tpu_custom_call.1} parent=1 // pred_check_branch
      %195 = sbr.rel (0) target = $region157
    $region156: #{tpu_custom_call.1} parent=1 // pred_region
      %s197 = ssub.s32 2, 1
      loop: start=0, step=1, limit=1
      $region158: #{tpu_custom_call.1} parent=156 // loop_pre_header
        _
      $region159: #{tpu_custom_call.1} parent=156 // loop_header
        %s199 = sphi 0, %s203
        %p200 = scmp.ge.s32.totalorder %s199, 1
        %s204 = sphi %s189, %s189
        %s205 = sphi %s190, %s190
      $region160: #{tpu_custom_call.1} parent=156 // loop_header_branch
        %202 = sbr.rel (%p200) target = $region164
      $region161: #{tpu_custom_call.1} parent=156 // loop_body
        %v206 = vld [vmem:[%s204] sm:%s197]
        %207 = vst [vmem:[%s205] sm:%s197] %v206
      $region162: #{tpu_custom_call.1} parent=156 // loop_footer
        %s203 = sadd.s32 1, %s199
      $region163: #{tpu_custom_call.1} parent=156 // loop_footer_branch
        %198 = sbr.rel target = $region159
      $region164: #{tpu_custom_call.1} parent=156 // loop_exit
        _
    $region157: #{tpu_custom_call.1} parent=1 // pred_fallthru
      _
    // Predicated region
    $region176: #{tpu_custom_call.1} parent=1 // pred_check
      _
    $region177: #{tpu_custom_call.1} parent=1 // pred_check_branch
      %224 = sbr.rel (0) target = $region179
    $region178: #{tpu_custom_call.1} parent=1 // pred_region
      %225 = vsyncadd %s191, 16
    $region179: #{tpu_custom_call.1} parent=1 // pred_fallthru
      _
    %s226 = scalar_lea.vmem %s3, %s188
    %s227 = scalar_lea.vmem [#allocation3], 2
    %s228 = scalar_lea.sflag [#allocation4], 18
    // Predicated region
    $region180: #{tpu_custom_call.1} parent=1 // pred_check
      _
    $region181: #{tpu_custom_call.1} parent=1 // pred_check_branch
      %230 = sbr.rel target = $region183
    $region182: #{tpu_custom_call.1} parent=1 // pred_region
      // Predicated region
      $region195: #{tpu_custom_call.1} parent=182 // pred_check
        _
      $region196: #{tpu_custom_call.1} parent=182 // pred_check_branch
        %246 = sbr.rel (0) target = $region198
      $region197: #{tpu_custom_call.1} parent=182 // pred_region
        %s248 = ssub.s32 2, 1
        loop: start=0, step=1, limit=1
        $region199: #{tpu_custom_call.1} parent=197 // loop_pre_header
          _
        $region200: #{tpu_custom_call.1} parent=197 // loop_header
          %s250 = sphi 0, %s254
          %p251 = scmp.ge.s32.totalorder %s250, 1
          %s255 = sphi %s226, %s226
          %s256 = sphi %s227, %s227
        $region201: #{tpu_custom_call.1} parent=197 // loop_header_branch
          %253 = sbr.rel (%p251) target = $region205
        $region202: #{tpu_custom_call.1} parent=197 // loop_body
          %v257 = vld [vmem:[%s255] sm:%s248]
          %258 = vst [vmem:[%s256] sm:%s248] %v257
        $region203: #{tpu_custom_call.1} parent=197 // loop_footer
          %s254 = sadd.s32 1, %s250
        $region204: #{tpu_custom_call.1} parent=197 // loop_footer_branch
          %249 = sbr.rel target = $region200
        $region205: #{tpu_custom_call.1} parent=197 // loop_exit
          _
      $region198: #{tpu_custom_call.1} parent=182 // pred_fallthru
        _
    $region183: #{tpu_custom_call.1} parent=1 // pred_fallthru
      _
    // Predicated region
    $region184: #{tpu_custom_call.1} parent=1 // pred_check
      _
    $region185: #{tpu_custom_call.1} parent=1 // pred_check_branch
      %232 = sbr.rel (0) target = $region187
    $region186: #{tpu_custom_call.1} parent=1 // pred_region
      %s234 = ssub.s32 2, 1
      loop: start=0, step=1, limit=1
      $region188: #{tpu_custom_call.1} parent=186 // loop_pre_header
        _
      $region189: #{tpu_custom_call.1} parent=186 // loop_header
        %s236 = sphi 0, %s240
        %p237 = scmp.ge.s32.totalorder %s236, 1
        %s241 = sphi %s226, %s226
        %s242 = sphi %s227, %s227
      $region190: #{tpu_custom_call.1} parent=186 // loop_header_branch
        %239 = sbr.rel (%p237) target = $region194
      $region191: #{tpu_custom_call.1} parent=186 // loop_body
        %v243 = vld [vmem:[%s241] sm:%s234]
        %244 = vst [vmem:[%s242] sm:%s234] %v243
      $region192: #{tpu_custom_call.1} parent=186 // loop_footer
        %s240 = sadd.s32 1, %s236
      $region193: #{tpu_custom_call.1} parent=186 // loop_footer_branch
        %235 = sbr.rel target = $region189
      $region194: #{tpu_custom_call.1} parent=186 // loop_exit
        _
    $region187: #{tpu_custom_call.1} parent=1 // pred_fallthru
      _
    // Predicated region
    $region206: #{tpu_custom_call.1} parent=1 // pred_check
      _
    $region207: #{tpu_custom_call.1} parent=1 // pred_check_branch
      %261 = sbr.rel (0) target = $region209
    $region208: #{tpu_custom_call.1} parent=1 // pred_region
      %262 = vsyncadd %s228, 16
    $region209: #{tpu_custom_call.1} parent=1 // pred_fallthru
      _
    %s263 = sld [smem:[#allocation6 + $0x3]]
    %s264 = scalar_lea.vmem %s2, %s263
    %s265 = scalar_lea.vmem [#allocation2], 3
    %s266 = scalar_lea.sflag [#allocation4], 3
    // Predicated region
    $region210: #{tpu_custom_call.1} parent=1 // pred_check
      _
    $region211: #{tpu_custom_call.1} parent=1 // pred_check_branch
      %268 = sbr.rel target = $region213
    $region212: #{tpu_custom_call.1} parent=1 // pred_region
      // Predicated region
      $region225: #{tpu_custom_call.1} parent=212 // pred_check
        _
      $region226: #{tpu_custom_call.1} parent=212 // pred_check_branch
        %284 = sbr.rel (0) target = $region228
      $region227: #{tpu_custom_call.1} parent=212 // pred_region
        %s286 = ssub.s32 2, 1
        loop: start=0, step=1, limit=1
        $region229: #{tpu_custom_call.1} parent=227 // loop_pre_header
          _
        $region230: #{tpu_custom_call.1} parent=227 // loop_header
          %s288 = sphi 0, %s292
          %p289 = scmp.ge.s32.totalorder %s288, 1
          %s293 = sphi %s264, %s264
          %s294 = sphi %s265, %s265
        $region231: #{tpu_custom_call.1} parent=227 // loop_header_branch
          %291 = sbr.rel (%p289) target = $region235
        $region232: #{tpu_custom_call.1} parent=227 // loop_body
          %v295 = vld [vmem:[%s293] sm:%s286]
          %296 = vst [vmem:[%s294] sm:%s286] %v295
        $region233: #{tpu_custom_call.1} parent=227 // loop_footer
          %s292 = sadd.s32 1, %s288
        $region234: #{tpu_custom_call.1} parent=227 // loop_footer_branch
          %287 = sbr.rel target = $region230
        $region235: #{tpu_custom_call.1} parent=227 // loop_exit
          _
      $region228: #{tpu_custom_call.1} parent=212 // pred_fallthru
        _
    $region213: #{tpu_custom_call.1} parent=1 // pred_fallthru
      _
    // Predicated region
    $region214: #{tpu_custom_call.1} parent=1 // pred_check
      _
    $region215: #{tpu_custom_call.1} parent=1 // pred_check_branch
      %270 = sbr.rel (0) target = $region217
    $region216: #{tpu_custom_call.1} parent=1 // pred_region
      %s272 = ssub.s32 2, 1
      loop: start=0, step=1, limit=1
      $region218: #{tpu_custom_call.1} parent=216 // loop_pre_header
        _
      $region219: #{tpu_custom_call.1} parent=216 // loop_header
        %s274 = sphi 0, %s278
        %p275 = scmp.ge.s32.totalorder %s274, 1
        %s279 = sphi %s264, %s264
        %s280 = sphi %s265, %s265
      $region220: #{tpu_custom_call.1} parent=216 // loop_header_branch
        %277 = sbr.rel (%p275) target = $region224
      $region221: #{tpu_custom_call.1} parent=216 // loop_body
        %v281 = vld [vmem:[%s279] sm:%s272]
        %282 = vst [vmem:[%s280] sm:%s272] %v281
      $region222: #{tpu_custom_call.1} parent=216 // loop_footer
        %s278 = sadd.s32 1, %s274
      $region223: #{tpu_custom_call.1} parent=216 // loop_footer_branch
        %273 = sbr.rel target = $region219
      $region224: #{tpu_custom_call.1} parent=216 // loop_exit
        _
    $region217: #{tpu_custom_call.1} parent=1 // pred_fallthru
      _
    // Predicated region
    $region236: #{tpu_custom_call.1} parent=1 // pred_check
      _
    $region237: #{tpu_custom_call.1} parent=1 // pred_check_branch
      %299 = sbr.rel (0) target = $region239
    $region238: #{tpu_custom_call.1} parent=1 // pred_region
      %300 = vsyncadd %s266, 16
    $region239: #{tpu_custom_call.1} parent=1 // pred_fallthru
      _
    %s301 = scalar_lea.vmem %s3, %s263
    %s302 = scalar_lea.vmem [#allocation3], 3
    %s303 = scalar_lea.sflag [#allocation4], 19
    // Predicated region
    $region240: #{tpu_custom_call.1} parent=1 // pred_check
      _
    $region241: #{tpu_custom_call.1} parent=1 // pred_check_branch
      %305 = sbr.rel target = $region243
    $region242: #{tpu_custom_call.1} parent=1 // pred_region
      // Predicated region
      $region255: #{tpu_custom_call.1} parent=242 // pred_check
        _
      $region256: #{tpu_custom_call.1} parent=242 // pred_check_branch
        %321 = sbr.rel (0) target = $region258
      $region257: #{tpu_custom_call.1} parent=242 // pred_region
        %s323 = ssub.s32 2, 1
        loop: start=0, step=1, limit=1
        $region259: #{tpu_custom_call.1} parent=257 // loop_pre_header
          _
        $region260: #{tpu_custom_call.1} parent=257 // loop_header
          %s325 = sphi 0, %s329
          %p326 = scmp.ge.s32.totalorder %s325, 1
          %s330 = sphi %s301, %s301
          %s331 = sphi %s302, %s302
        $region261: #{tpu_custom_call.1} parent=257 // loop_header_branch
          %328 = sbr.rel (%p326) target = $region265
        $region262: #{tpu_custom_call.1} parent=257 // loop_body
          %v332 = vld [vmem:[%s330] sm:%s323]
          %333 = vst [vmem:[%s331] sm:%s323] %v332
        $region263: #{tpu_custom_call.1} parent=257 // loop_footer
          %s329 = sadd.s32 1, %s325
        $region264: #{tpu_custom_call.1} parent=257 // loop_footer_branch
          %324 = sbr.rel target = $region260
        $region265: #{tpu_custom_call.1} parent=257 // loop_exit
          _
      $region258: #{tpu_custom_call.1} parent=242 // pred_fallthru
        _
    $region243: #{tpu_custom_call.1} parent=1 // pred_fallthru
      _
    // Predicated region
    $region244: #{tpu_custom_call.1} parent=1 // pred_check
      _
    $region245: #{tpu_custom_call.1} parent=1 // pred_check_branch
      %307 = sbr.rel (0) target = $region247
    $region246: #{tpu_custom_call.1} parent=1 // pred_region
      %s309 = ssub.s32 2, 1
      loop: start=0, step=1, limit=1
      $region248: #{tpu_custom_call.1} parent=246 // loop_pre_header
        _
      $region249: #{tpu_custom_call.1} parent=246 // loop_header
        %s311 = sphi 0, %s315
        %p312 = scmp.ge.s32.totalorder %s311, 1
        %s316 = sphi %s301, %s301
        %s317 = sphi %s302, %s302
      $region250: #{tpu_custom_call.1} parent=246 // loop_header_branch
        %314 = sbr.rel (%p312) target = $region254
      $region251: #{tpu_custom_call.1} parent=246 // loop_body
        %v318 = vld [vmem:[%s316] sm:%s309]
        %319 = vst [vmem:[%s317] sm:%s309] %v318
      $region252: #{tpu_custom_call.1} parent=246 // loop_footer
        %s315 = sadd.s32 1, %s311
      $region253: #{tpu_custom_call.1} parent=246 // loop_footer_branch
        %310 = sbr.rel target = $region249
      $region254: #{tpu_custom_call.1} parent=246 // loop_exit
        _
    $region247: #{tpu_custom_call.1} parent=1 // pred_fallthru
      _
    // Predicated region
    $region266: #{tpu_custom_call.1} parent=1 // pred_check
      _
    $region267: #{tpu_custom_call.1} parent=1 // pred_check_branch
      %336 = sbr.rel (0) target = $region269
    $region268: #{tpu_custom_call.1} parent=1 // pred_region
      %337 = vsyncadd %s303, 16
    $region269: #{tpu_custom_call.1} parent=1 // pred_fallthru
      _
    %s338 = sld [smem:[#allocation6 + $0x4]]
    %s339 = scalar_lea.vmem %s2, %s338
    %s340 = scalar_lea.vmem [#allocation2], 4
    %s341 = scalar_lea.sflag [#allocation4], 4
    // Predicated region
    $region270: #{tpu_custom_call.1} parent=1 // pred_check
      _
    $region271: #{tpu_custom_call.1} parent=1 // pred_check_branch
      %343 = sbr.rel target = $region273
    $region272: #{tpu_custom_call.1} parent=1 // pred_region
      // Predicated region
      $region285: #{tpu_custom_call.1} parent=272 // pred_check
        _
      $region286: #{tpu_custom_call.1} parent=272 // pred_check_branch
        %359 = sbr.rel (0) target = $region288
      $region287: #{tpu_custom_call.1} parent=272 // pred_region
        %s361 = ssub.s32 2, 1
        loop: start=0, step=1, limit=1
        $region289: #{tpu_custom_call.1} parent=287 // loop_pre_header
          _
        $region290: #{tpu_custom_call.1} parent=287 // loop_header
          %s363 = sphi 0, %s367
          %p364 = scmp.ge.s32.totalorder %s363, 1
          %s368 = sphi %s339, %s339
          %s369 = sphi %s340, %s340
        $region291: #{tpu_custom_call.1} parent=287 // loop_header_branch
          %366 = sbr.rel (%p364) target = $region295
        $region292: #{tpu_custom_call.1} parent=287 // loop_body
          %v370 = vld [vmem:[%s368] sm:%s361]
          %371 = vst [vmem:[%s369] sm:%s361] %v370
        $region293: #{tpu_custom_call.1} parent=287 // loop_footer
          %s367 = sadd.s32 1, %s363
        $region294: #{tpu_custom_call.1} parent=287 // loop_footer_branch
          %362 = sbr.rel target = $region290
        $region295: #{tpu_custom_call.1} parent=287 // loop_exit
          _
      $region288: #{tpu_custom_call.1} parent=272 // pred_fallthru
        _
    $region273: #{tpu_custom_call.1} parent=1 // pred_fallthru
      _
    // Predicated region
    $region274: #{tpu_custom_call.1} parent=1 // pred_check
      _
    $region275: #{tpu_custom_call.1} parent=1 // pred_check_branch
      %345 = sbr.rel (0) target = $region277
    $region276: #{tpu_custom_call.1} parent=1 // pred_region
      %s347 = ssub.s32 2, 1
      loop: start=0, step=1, limit=1
      $region278: #{tpu_custom_call.1} parent=276 // loop_pre_header
        _
      $region279: #{tpu_custom_call.1} parent=276 // loop_header
        %s349 = sphi 0, %s353
        %p350 = scmp.ge.s32.totalorder %s349, 1
        %s354 = sphi %s339, %s339
        %s355 = sphi %s340, %s340
      $region280: #{tpu_custom_call.1} parent=276 // loop_header_branch
        %352 = sbr.rel (%p350) target = $region284
      $region281: #{tpu_custom_call.1} parent=276 // loop_body
        %v356 = vld [vmem:[%s354] sm:%s347]
        %357 = vst [vmem:[%s355] sm:%s347] %v356
      $region282: #{tpu_custom_call.1} parent=276 // loop_footer
        %s353 = sadd.s32 1, %s349
      $region283: #{tpu_custom_call.1} parent=276 // loop_footer_branch
        %348 = sbr.rel target = $region279
      $region284: #{tpu_custom_call.1} parent=276 // loop_exit
        _
    $region277: #{tpu_custom_call.1} parent=1 // pred_fallthru
      _
    // Predicated region
    $region296: #{tpu_custom_call.1} parent=1 // pred_check
      _
    $region297: #{tpu_custom_call.1} parent=1 // pred_check_branch
      %374 = sbr.rel (0) target = $region299
    $region298: #{tpu_custom_call.1} parent=1 // pred_region
      %375 = vsyncadd %s341, 16
    $region299: #{tpu_custom_call.1} parent=1 // pred_fallthru
      _
    %s376 = scalar_lea.vmem %s3, %s338
    %s377 = scalar_lea.vmem [#allocation3], 4
    %s378 = scalar_lea.sflag [#allocation4], 20
    // Predicated region
    $region300: #{tpu_custom_call.1} parent=1 // pred_check
      _
    $region301: #{tpu_custom_call.1} parent=1 // pred_check_branch
      %380 = sbr.rel target = $region303
    $region302: #{tpu_custom_call.1} parent=1 // pred_region
      // Predicated region
      $region315: #{tpu_custom_call.1} parent=302 // pred_check
        _
      $region316: #{tpu_custom_call.1} parent=302 // pred_check_branch
        %396 = sbr.rel (0) target = $region318
      $region317: #{tpu_custom_call.1} parent=302 // pred_region
        %s398 = ssub.s32 2, 1
        loop: start=0, step=1, limit=1
        $region319: #{tpu_custom_call.1} parent=317 // loop_pre_header
          _
        $region320: #{tpu_custom_call.1} parent=317 // loop_header
          %s400 = sphi 0, %s404
          %p401 = scmp.ge.s32.totalorder %s400, 1
          %s405 = sphi %s376, %s376
          %s406 = sphi %s377, %s377
        $region321: #{tpu_custom_call.1} parent=317 // loop_header_branch
          %403 = sbr.rel (%p401) target = $region325
        $region322: #{tpu_custom_call.1} parent=317 // loop_body
          %v407 = vld [vmem:[%s405] sm:%s398]
          %408 = vst [vmem:[%s406] sm:%s398] %v407
        $region323: #{tpu_custom_call.1} parent=317 // loop_footer
          %s404 = sadd.s32 1, %s400
        $region324: #{tpu_custom_call.1} parent=317 // loop_footer_branch
          %399 = sbr.rel target = $region320
        $region325: #{tpu_custom_call.1} parent=317 // loop_exit
          _
      $region318: #{tpu_custom_call.1} parent=302 // pred_fallthru
        _
    $region303: #{tpu_custom_call.1} parent=1 // pred_fallthru
      _
    // Predicated region
    $region304: #{tpu_custom_call.1} parent=1 // pred_check
      _
    $region305: #{tpu_custom_call.1} parent=1 // pred_check_branch
      %382 = sbr.rel (0) target = $region307
    $region306: #{tpu_custom_call.1} parent=1 // pred_region
      %s384 = ssub.s32 2, 1
      loop: start=0, step=1, limit=1
      $region308: #{tpu_custom_call.1} parent=306 // loop_pre_header
        _
      $region309: #{tpu_custom_call.1} parent=306 // loop_header
        %s386 = sphi 0, %s390
        %p387 = scmp.ge.s32.totalorder %s386, 1
        %s391 = sphi %s376, %s376
        %s392 = sphi %s377, %s377
      $region310: #{tpu_custom_call.1} parent=306 // loop_header_branch
        %389 = sbr.rel (%p387) target = $region314
      $region311: #{tpu_custom_call.1} parent=306 // loop_body
        %v393 = vld [vmem:[%s391] sm:%s384]
        %394 = vst [vmem:[%s392] sm:%s384] %v393
      $region312: #{tpu_custom_call.1} parent=306 // loop_footer
        %s390 = sadd.s32 1, %s386
      $region313: #{tpu_custom_call.1} parent=306 // loop_footer_branch
        %385 = sbr.rel target = $region309
      $region314: #{tpu_custom_call.1} parent=306 // loop_exit
        _
    $region307: #{tpu_custom_call.1} parent=1 // pred_fallthru
      _
    // Predicated region
    $region326: #{tpu_custom_call.1} parent=1 // pred_check
      _
    $region327: #{tpu_custom_call.1} parent=1 // pred_check_branch
      %411 = sbr.rel (0) target = $region329
    $region328: #{tpu_custom_call.1} parent=1 // pred_region
      %412 = vsyncadd %s378, 16
    $region329: #{tpu_custom_call.1} parent=1 // pred_fallthru
      _
    %s413 = sld [smem:[#allocation6 + $0x5]]
    %s414 = scalar_lea.vmem %s2, %s413
    %s415 = scalar_lea.vmem [#allocation2], 5
    %s416 = scalar_lea.sflag [#allocation4], 5
    // Predicated region
    $region330: #{tpu_custom_call.1} parent=1 // pred_check
      _
    $region331: #{tpu_custom_call.1} parent=1 // pred_check_branch
      %418 = sbr.rel target = $region333
    $region332: #{tpu_custom_call.1} parent=1 // pred_region
      // Predicated region
      $region345: #{tpu_custom_call.1} parent=332 // pred_check
        _
      $region346: #{tpu_custom_call.1} parent=332 // pred_check_branch
        %434 = sbr.rel (0) target = $region348
      $region347: #{tpu_custom_call.1} parent=332 // pred_region
        %s436 = ssub.s32 2, 1
        loop: start=0, step=1, limit=1
        $region349: #{tpu_custom_call.1} parent=347 // loop_pre_header
          _
        $region350: #{tpu_custom_call.1} parent=347 // loop_header
          %s438 = sphi 0, %s442
          %p439 = scmp.ge.s32.totalorder %s438, 1
          %s443 = sphi %s414, %s414
          %s444 = sphi %s415, %s415
        $region351: #{tpu_custom_call.1} parent=347 // loop_header_branch
          %441 = sbr.rel (%p439) target = $region355
        $region352: #{tpu_custom_call.1} parent=347 // loop_body
          %v445 = vld [vmem:[%s443] sm:%s436]
          %446 = vst [vmem:[%s444] sm:%s436] %v445
        $region353: #{tpu_custom_call.1} parent=347 // loop_footer
          %s442 = sadd.s32 1, %s438
        $region354: #{tpu_custom_call.1} parent=347 // loop_footer_branch
          %437 = sbr.rel target = $region350
        $region355: #{tpu_custom_call.1} parent=347 // loop_exit
          _
      $region348: #{tpu_custom_call.1} parent=332 // pred_fallthru
        _
    $region333: #{tpu_custom_call.1} parent=1 // pred_fallthru
      _
    // Predicated region
    $region334: #{tpu_custom_call.1} parent=1 // pred_check
      _
    $region335: #{tpu_custom_call.1} parent=1 // pred_check_branch
      %420 = sbr.rel (0) target = $region337
    $region336: #{tpu_custom_call.1} parent=1 // pred_region
      %s422 = ssub.s32 2, 1
      loop: start=0, step=1, limit=1
      $region338: #{tpu_custom_call.1} parent=336 // loop_pre_header
        _
      $region339: #{tpu_custom_call.1} parent=336 // loop_header
        %s424 = sphi 0, %s428
        %p425 = scmp.ge.s32.totalorder %s424, 1
        %s429 = sphi %s414, %s414
        %s430 = sphi %s415, %s415
      $region340: #{tpu_custom_call.1} parent=336 // loop_header_branch
        %427 = sbr.rel (%p425) target = $region344
      $region341: #{tpu_custom_call.1} parent=336 // loop_body
        %v431 = vld [vmem:[%s429] sm:%s422]
        %432 = vst [vmem:[%s430] sm:%s422] %v431
      $region342: #{tpu_custom_call.1} parent=336 // loop_footer
        %s428 = sadd.s32 1, %s424
      $region343: #{tpu_custom_call.1} parent=336 // loop_footer_branch
        %423 = sbr.rel target = $region339
      $region344: #{tpu_custom_call.1} parent=336 // loop_exit
        _
    $region337: #{tpu_custom_call.1} parent=1 // pred_fallthru
      _
    // Predicated region
    $region356: #{tpu_custom_call.1} parent=1 // pred_check
      _
    $region357: #{tpu_custom_call.1} parent=1 // pred_check_branch
      %449 = sbr.rel (0) target = $region359
    $region358: #{tpu_custom_call.1} parent=1 // pred_region
      %450 = vsyncadd %s416, 16
    $region359: #{tpu_custom_call.1} parent=1 // pred_fallthru
      _
    %s451 = scalar_lea.vmem %s3, %s413
    %s452 = scalar_lea.vmem [#allocation3], 5
    %s453 = scalar_lea.sflag [#allocation4], 21
    // Predicated region
    $region360: #{tpu_custom_call.1} parent=1 // pred_check
      _
    $region361: #{tpu_custom_call.1} parent=1 // pred_check_branch
      %455 = sbr.rel target = $region363
    $region362: #{tpu_custom_call.1} parent=1 // pred_region
      // Predicated region
      $region375: #{tpu_custom_call.1} parent=362 // pred_check
        _
      $region376: #{tpu_custom_call.1} parent=362 // pred_check_branch
        %471 = sbr.rel (0) target = $region378
      $region377: #{tpu_custom_call.1} parent=362 // pred_region
        %s473 = ssub.s32 2, 1
        loop: start=0, step=1, limit=1
        $region379: #{tpu_custom_call.1} parent=377 // loop_pre_header
          _
        $region380: #{tpu_custom_call.1} parent=377 // loop_header
          %s475 = sphi 0, %s479
          %p476 = scmp.ge.s32.totalorder %s475, 1
          %s480 = sphi %s451, %s451
          %s481 = sphi %s452, %s452
        $region381: #{tpu_custom_call.1} parent=377 // loop_header_branch
          %478 = sbr.rel (%p476) target = $region385
        $region382: #{tpu_custom_call.1} parent=377 // loop_body
          %v482 = vld [vmem:[%s480] sm:%s473]
          %483 = vst [vmem:[%s481] sm:%s473] %v482
        $region383: #{tpu_custom_call.1} parent=377 // loop_footer
          %s479 = sadd.s32 1, %s475
        $region384: #{tpu_custom_call.1} parent=377 // loop_footer_branch
          %474 = sbr.rel target = $region380
        $region385: #{tpu_custom_call.1} parent=377 // loop_exit
          _
      $region378: #{tpu_custom_call.1} parent=362 // pred_fallthru
        _
    $region363: #{tpu_custom_call.1} parent=1 // pred_fallthru
      _
    // Predicated region
    $region364: #{tpu_custom_call.1} parent=1 // pred_check
      _
    $region365: #{tpu_custom_call.1} parent=1 // pred_check_branch
      %457 = sbr.rel (0) target = $region367
    $region366: #{tpu_custom_call.1} parent=1 // pred_region
      %s459 = ssub.s32 2, 1
      loop: start=0, step=1, limit=1
      $region368: #{tpu_custom_call.1} parent=366 // loop_pre_header
        _
      $region369: #{tpu_custom_call.1} parent=366 // loop_header
        %s461 = sphi 0, %s465
        %p462 = scmp.ge.s32.totalorder %s461, 1
        %s466 = sphi %s451, %s451
        %s467 = sphi %s452, %s452
      $region370: #{tpu_custom_call.1} parent=366 // loop_header_branch
        %464 = sbr.rel (%p462) target = $region374
      $region371: #{tpu_custom_call.1} parent=366 // loop_body
        %v468 = vld [vmem:[%s466] sm:%s459]
        %469 = vst [vmem:[%s467] sm:%s459] %v468
      $region372: #{tpu_custom_call.1} parent=366 // loop_footer
        %s465 = sadd.s32 1, %s461
      $region373: #{tpu_custom_call.1} parent=366 // loop_footer_branch
        %460 = sbr.rel target = $region369
      $region374: #{tpu_custom_call.1} parent=366 // loop_exit
        _
    $region367: #{tpu_custom_call.1} parent=1 // pred_fallthru
      _
    // Predicated region
    $region386: #{tpu_custom_call.1} parent=1 // pred_check
      _
    $region387: #{tpu_custom_call.1} parent=1 // pred_check_branch
      %486 = sbr.rel (0) target = $region389
    $region388: #{tpu_custom_call.1} parent=1 // pred_region
      %487 = vsyncadd %s453, 16
    $region389: #{tpu_custom_call.1} parent=1 // pred_fallthru
      _
    %s488 = sld [smem:[#allocation6 + $0x6]]
    %s489 = scalar_lea.vmem %s2, %s488
    %s490 = scalar_lea.vmem [#allocation2], 6
    %s491 = scalar_lea.sflag [#allocation4], 6
    // Predicated region
    $region390: #{tpu_custom_call.1} parent=1 // pred_check
      _
    $region391: #{tpu_custom_call.1} parent=1 // pred_check_branch
      %493 = sbr.rel target = $region393
    $region392: #{tpu_custom_call.1} parent=1 // pred_region
      // Predicated region
      $region405: #{tpu_custom_call.1} parent=392 // pred_check
        _
      $region406: #{tpu_custom_call.1} parent=392 // pred_check_branch
        %509 = sbr.rel (0) target = $region408
      $region407: #{tpu_custom_call.1} parent=392 // pred_region
        %s511 = ssub.s32 2, 1
        loop: start=0, step=1, limit=1
        $region409: #{tpu_custom_call.1} parent=407 // loop_pre_header
          _
        $region410: #{tpu_custom_call.1} parent=407 // loop_header
          %s513 = sphi 0, %s517
          %p514 = scmp.ge.s32.totalorder %s513, 1
          %s518 = sphi %s489, %s489
          %s519 = sphi %s490, %s490
        $region411: #{tpu_custom_call.1} parent=407 // loop_header_branch
          %516 = sbr.rel (%p514) target = $region415
        $region412: #{tpu_custom_call.1} parent=407 // loop_body
          %v520 = vld [vmem:[%s518] sm:%s511]
          %521 = vst [vmem:[%s519] sm:%s511] %v520
        $region413: #{tpu_custom_call.1} parent=407 // loop_footer
          %s517 = sadd.s32 1, %s513
        $region414: #{tpu_custom_call.1} parent=407 // loop_footer_branch
          %512 = sbr.rel target = $region410
        $region415: #{tpu_custom_call.1} parent=407 // loop_exit
          _
      $region408: #{tpu_custom_call.1} parent=392 // pred_fallthru
        _
    $region393: #{tpu_custom_call.1} parent=1 // pred_fallthru
      _
    // Predicated region
    $region394: #{tpu_custom_call.1} parent=1 // pred_check
      _
    $region395: #{tpu_custom_call.1} parent=1 // pred_check_branch
      %495 = sbr.rel (0) target = $region397
    $region396: #{tpu_custom_call.1} parent=1 // pred_region
      %s497 = ssub.s32 2, 1
      loop: start=0, step=1, limit=1
      $region398: #{tpu_custom_call.1} parent=396 // loop_pre_header
        _
      $region399: #{tpu_custom_call.1} parent=396 // loop_header
        %s499 = sphi 0, %s503
        %p500 = scmp.ge.s32.totalorder %s499, 1
        %s504 = sphi %s489, %s489
        %s505 = sphi %s490, %s490
      $region400: #{tpu_custom_call.1} parent=396 // loop_header_branch
        %502 = sbr.rel (%p500) target = $region404
      $region401: #{tpu_custom_call.1} parent=396 // loop_body
        %v506 = vld [vmem:[%s504] sm:%s497]
        %507 = vst [vmem:[%s505] sm:%s497] %v506
      $region402: #{tpu_custom_call.1} parent=396 // loop_footer
        %s503 = sadd.s32 1, %s499
      $region403: #{tpu_custom_call.1} parent=396 // loop_footer_branch
        %498 = sbr.rel target = $region399
      $region404: #{tpu_custom_call.1} parent=396 // loop_exit
        _
    $region397: #{tpu_custom_call.1} parent=1 // pred_fallthru
      _
    // Predicated region
    $region416: #{tpu_custom_call.1} parent=1 // pred_check
      _
    $region417: #{tpu_custom_call.1} parent=1 // pred_check_branch
      %524 = sbr.rel (0) target = $region419
    $region418: #{tpu_custom_call.1} parent=1 // pred_region
      %525 = vsyncadd %s491, 16
    $region419: #{tpu_custom_call.1} parent=1 // pred_fallthru
      _
    %s526 = scalar_lea.vmem %s3, %s488
    %s527 = scalar_lea.vmem [#allocation3], 6
    %s528 = scalar_lea.sflag [#allocation4], 22
    // Predicated region
    $region420: #{tpu_custom_call.1} parent=1 // pred_check
      _
    $region421: #{tpu_custom_call.1} parent=1 // pred_check_branch
      %530 = sbr.rel target = $region423
    $region422: #{tpu_custom_call.1} parent=1 // pred_region
      // Predicated region
      $region435: #{tpu_custom_call.1} parent=422 // pred_check
        _
      $region436: #{tpu_custom_call.1} parent=422 // pred_check_branch
        %546 = sbr.rel (0) target = $region438
      $region437: #{tpu_custom_call.1} parent=422 // pred_region
        %s548 = ssub.s32 2, 1
        loop: start=0, step=1, limit=1
        $region439: #{tpu_custom_call.1} parent=437 // loop_pre_header
          _
        $region440: #{tpu_custom_call.1} parent=437 // loop_header
          %s550 = sphi 0, %s554
          %p551 = scmp.ge.s32.totalorder %s550, 1
          %s555 = sphi %s526, %s526
          %s556 = sphi %s527, %s527
        $region441: #{tpu_custom_call.1} parent=437 // loop_header_branch
          %553 = sbr.rel (%p551) target = $region445
        $region442: #{tpu_custom_call.1} parent=437 // loop_body
          %v557 = vld [vmem:[%s555] sm:%s548]
          %558 = vst [vmem:[%s556] sm:%s548] %v557
        $region443: #{tpu_custom_call.1} parent=437 // loop_footer
          %s554 = sadd.s32 1, %s550
        $region444: #{tpu_custom_call.1} parent=437 // loop_footer_branch
          %549 = sbr.rel target = $region440
        $region445: #{tpu_custom_call.1} parent=437 // loop_exit
          _
      $region438: #{tpu_custom_call.1} parent=422 // pred_fallthru
        _
    $region423: #{tpu_custom_call.1} parent=1 // pred_fallthru
      _
    // Predicated region
    $region424: #{tpu_custom_call.1} parent=1 // pred_check
      _
    $region425: #{tpu_custom_call.1} parent=1 // pred_check_branch
      %532 = sbr.rel (0) target = $region427
    $region426: #{tpu_custom_call.1} parent=1 // pred_region
      %s534 = ssub.s32 2, 1
      loop: start=0, step=1, limit=1
      $region428: #{tpu_custom_call.1} parent=426 // loop_pre_header
        _
      $region429: #{tpu_custom_call.1} parent=426 // loop_header
        %s536 = sphi 0, %s540
        %p537 = scmp.ge.s32.totalorder %s536, 1
        %s541 = sphi %s526, %s526
        %s542 = sphi %s527, %s527
      $region430: #{tpu_custom_call.1} parent=426 // loop_header_branch
        %539 = sbr.rel (%p537) target = $region434
      $region431: #{tpu_custom_call.1} parent=426 // loop_body
        %v543 = vld [vmem:[%s541] sm:%s534]
        %544 = vst [vmem:[%s542] sm:%s534] %v543
      $region432: #{tpu_custom_call.1} parent=426 // loop_footer
        %s540 = sadd.s32 1, %s536
      $region433: #{tpu_custom_call.1} parent=426 // loop_footer_branch
        %535 = sbr.rel target = $region429
      $region434: #{tpu_custom_call.1} parent=426 // loop_exit
        _
    $region427: #{tpu_custom_call.1} parent=1 // pred_fallthru
      _
    // Predicated region
    $region446: #{tpu_custom_call.1} parent=1 // pred_check
      _
    $region447: #{tpu_custom_call.1} parent=1 // pred_check_branch
      %561 = sbr.rel (0) target = $region449
    $region448: #{tpu_custom_call.1} parent=1 // pred_region
      %562 = vsyncadd %s528, 16
    $region449: #{tpu_custom_call.1} parent=1 // pred_fallthru
      _
    %s563 = sld [smem:[#allocation6 + $0x7]]
    %s564 = scalar_lea.vmem %s2, %s563
    %s565 = scalar_lea.vmem [#allocation2], 7
    %s566 = scalar_lea.sflag [#allocation4], 7
    // Predicated region
    $region450: #{tpu_custom_call.1} parent=1 // pred_check
      _
    $region451: #{tpu_custom_call.1} parent=1 // pred_check_branch
      %568 = sbr.rel target = $region453
    $region452: #{tpu_custom_call.1} parent=1 // pred_region
      // Predicated region
      $region465: #{tpu_custom_call.1} parent=452 // pred_check
        _
      $region466: #{tpu_custom_call.1} parent=452 // pred_check_branch
        %584 = sbr.rel (0) target = $region468
      $region467: #{tpu_custom_call.1} parent=452 // pred_region
        %s586 = ssub.s32 2, 1
        loop: start=0, step=1, limit=1
        $region469: #{tpu_custom_call.1} parent=467 // loop_pre_header
          _
        $region470: #{tpu_custom_call.1} parent=467 // loop_header
          %s588 = sphi 0, %s592
          %p589 = scmp.ge.s32.totalorder %s588, 1
          %s593 = sphi %s564, %s564
          %s594 = sphi %s565, %s565
        $region471: #{tpu_custom_call.1} parent=467 // loop_header_branch
          %591 = sbr.rel (%p589) target = $region475
        $region472: #{tpu_custom_call.1} parent=467 // loop_body
          %v595 = vld [vmem:[%s593] sm:%s586]
          %596 = vst [vmem:[%s594] sm:%s586] %v595
        $region473: #{tpu_custom_call.1} parent=467 // loop_footer
          %s592 = sadd.s32 1, %s588
        $region474: #{tpu_custom_call.1} parent=467 // loop_footer_branch
          %587 = sbr.rel target = $region470
        $region475: #{tpu_custom_call.1} parent=467 // loop_exit
          _
      $region468: #{tpu_custom_call.1} parent=452 // pred_fallthru
        _
    $region453: #{tpu_custom_call.1} parent=1 // pred_fallthru
      _
    // Predicated region
    $region454: #{tpu_custom_call.1} parent=1 // pred_check
      _
    $region455: #{tpu_custom_call.1} parent=1 // pred_check_branch
      %570 = sbr.rel (0) target = $region457
    $region456: #{tpu_custom_call.1} parent=1 // pred_region
      %s572 = ssub.s32 2, 1
      loop: start=0, step=1, limit=1
      $region458: #{tpu_custom_call.1} parent=456 // loop_pre_header
        _
      $region459: #{tpu_custom_call.1} parent=456 // loop_header
        %s574 = sphi 0, %s578
        %p575 = scmp.ge.s32.totalorder %s574, 1
        %s579 = sphi %s564, %s564
        %s580 = sphi %s565, %s565
      $region460: #{tpu_custom_call.1} parent=456 // loop_header_branch
        %577 = sbr.rel (%p575) target = $region464
      $region461: #{tpu_custom_call.1} parent=456 // loop_body
        %v581 = vld [vmem:[%s579] sm:%s572]
        %582 = vst [vmem:[%s580] sm:%s572] %v581
      $region462: #{tpu_custom_call.1} parent=456 // loop_footer
        %s578 = sadd.s32 1, %s574
      $region463: #{tpu_custom_call.1} parent=456 // loop_footer_branch
        %573 = sbr.rel target = $region459
      $region464: #{tpu_custom_call.1} parent=456 // loop_exit
        _
    $region457: #{tpu_custom_call.1} parent=1 // pred_fallthru
      _
    // Predicated region
    $region476: #{tpu_custom_call.1} parent=1 // pred_check
      _
    $region477: #{tpu_custom_call.1} parent=1 // pred_check_branch
      %599 = sbr.rel (0) target = $region479
    $region478: #{tpu_custom_call.1} parent=1 // pred_region
      %600 = vsyncadd %s566, 16
    $region479: #{tpu_custom_call.1} parent=1 // pred_fallthru
      _
    %s601 = scalar_lea.vmem %s3, %s563
    %s602 = scalar_lea.vmem [#allocation3], 7
    %s603 = scalar_lea.sflag [#allocation4], 23
    // Predicated region
    $region480: #{tpu_custom_call.1} parent=1 // pred_check
      _
    $region481: #{tpu_custom_call.1} parent=1 // pred_check_branch
      %605 = sbr.rel target = $region483
    $region482: #{tpu_custom_call.1} parent=1 // pred_region
      // Predicated region
      $region495: #{tpu_custom_call.1} parent=482 // pred_check
        _
      $region496: #{tpu_custom_call.1} parent=482 // pred_check_branch
        %621 = sbr.rel (0) target = $region498
      $region497: #{tpu_custom_call.1} parent=482 // pred_region
        %s623 = ssub.s32 2, 1
        loop: start=0, step=1, limit=1
        $region499: #{tpu_custom_call.1} parent=497 // loop_pre_header
          _
        $region500: #{tpu_custom_call.1} parent=497 // loop_header
          %s625 = sphi 0, %s629
          %p626 = scmp.ge.s32.totalorder %s625, 1
          %s630 = sphi %s601, %s601
          %s631 = sphi %s602, %s602
        $region501: #{tpu_custom_call.1} parent=497 // loop_header_branch
          %628 = sbr.rel (%p626) target = $region505
        $region502: #{tpu_custom_call.1} parent=497 // loop_body
          %v632 = vld [vmem:[%s630] sm:%s623]
          %633 = vst [vmem:[%s631] sm:%s623] %v632
        $region503: #{tpu_custom_call.1} parent=497 // loop_footer
          %s629 = sadd.s32 1, %s625
        $region504: #{tpu_custom_call.1} parent=497 // loop_footer_branch
          %624 = sbr.rel target = $region500
        $region505: #{tpu_custom_call.1} parent=497 // loop_exit
          _
      $region498: #{tpu_custom_call.1} parent=482 // pred_fallthru
        _
    $region483: #{tpu_custom_call.1} parent=1 // pred_fallthru
      _
    // Predicated region
    $region484: #{tpu_custom_call.1} parent=1 // pred_check
      _
    $region485: #{tpu_custom_call.1} parent=1 // pred_check_branch
      %607 = sbr.rel (0) target = $region487
    $region486: #{tpu_custom_call.1} parent=1 // pred_region
      %s609 = ssub.s32 2, 1
      loop: start=0, step=1, limit=1
      $region488: #{tpu_custom_call.1} parent=486 // loop_pre_header
        _
      $region489: #{tpu_custom_call.1} parent=486 // loop_header
        %s611 = sphi 0, %s615
        %p612 = scmp.ge.s32.totalorder %s611, 1
        %s616 = sphi %s601, %s601
        %s617 = sphi %s602, %s602
      $region490: #{tpu_custom_call.1} parent=486 // loop_header_branch
        %614 = sbr.rel (%p612) target = $region494
      $region491: #{tpu_custom_call.1} parent=486 // loop_body
        %v618 = vld [vmem:[%s616] sm:%s609]
        %619 = vst [vmem:[%s617] sm:%s609] %v618
      $region492: #{tpu_custom_call.1} parent=486 // loop_footer
        %s615 = sadd.s32 1, %s611
      $region493: #{tpu_custom_call.1} parent=486 // loop_footer_branch
        %610 = sbr.rel target = $region489
      $region494: #{tpu_custom_call.1} parent=486 // loop_exit
        _
    $region487: #{tpu_custom_call.1} parent=1 // pred_fallthru
      _
    // Predicated region
    $region506: #{tpu_custom_call.1} parent=1 // pred_check
      _
    $region507: #{tpu_custom_call.1} parent=1 // pred_check_branch
      %636 = sbr.rel (0) target = $region509
    $region508: #{tpu_custom_call.1} parent=1 // pred_region
      %637 = vsyncadd %s603, 16
    $region509: #{tpu_custom_call.1} parent=1 // pred_fallthru
      _
    %s638 = sld [smem:[#allocation6 + $0x8]]
    %s639 = scalar_lea.vmem %s2, %s638
    %s640 = scalar_lea.vmem [#allocation2], 8
    %s641 = scalar_lea.sflag [#allocation4], 8
    // Predicated region
    $region510: #{tpu_custom_call.1} parent=1 // pred_check
      _
    $region511: #{tpu_custom_call.1} parent=1 // pred_check_branch
      %643 = sbr.rel target = $region513
    $region512: #{tpu_custom_call.1} parent=1 // pred_region
      // Predicated region
      $region525: #{tpu_custom_call.1} parent=512 // pred_check
        _
      $region526: #{tpu_custom_call.1} parent=512 // pred_check_branch
        %659 = sbr.rel (0) target = $region528
      $region527: #{tpu_custom_call.1} parent=512 // pred_region
        %s661 = ssub.s32 2, 1
        loop: start=0, step=1, limit=1
        $region529: #{tpu_custom_call.1} parent=527 // loop_pre_header
          _
        $region530: #{tpu_custom_call.1} parent=527 // loop_header
          %s663 = sphi 0, %s667
          %p664 = scmp.ge.s32.totalorder %s663, 1
          %s668 = sphi %s639, %s639
          %s669 = sphi %s640, %s640
        $region531: #{tpu_custom_call.1} parent=527 // loop_header_branch
          %666 = sbr.rel (%p664) target = $region535
        $region532: #{tpu_custom_call.1} parent=527 // loop_body
          %v670 = vld [vmem:[%s668] sm:%s661]
          %671 = vst [vmem:[%s669] sm:%s661] %v670
        $region533: #{tpu_custom_call.1} parent=527 // loop_footer
          %s667 = sadd.s32 1, %s663
        $region534: #{tpu_custom_call.1} parent=527 // loop_footer_branch
          %662 = sbr.rel target = $region530
        $region535: #{tpu_custom_call.1} parent=527 // loop_exit
          _
      $region528: #{tpu_custom_call.1} parent=512 // pred_fallthru
        _
    $region513: #{tpu_custom_call.1} parent=1 // pred_fallthru
      _
    // Predicated region
    $region514: #{tpu_custom_call.1} parent=1 // pred_check
      _
    $region515: #{tpu_custom_call.1} parent=1 // pred_check_branch
      %645 = sbr.rel (0) target = $region517
    $region516: #{tpu_custom_call.1} parent=1 // pred_region
      %s647 = ssub.s32 2, 1
      loop: start=0, step=1, limit=1
      $region518: #{tpu_custom_call.1} parent=516 // loop_pre_header
        _
      $region519: #{tpu_custom_call.1} parent=516 // loop_header
        %s649 = sphi 0, %s653
        %p650 = scmp.ge.s32.totalorder %s649, 1
        %s654 = sphi %s639, %s639
        %s655 = sphi %s640, %s640
      $region520: #{tpu_custom_call.1} parent=516 // loop_header_branch
        %652 = sbr.rel (%p650) target = $region524
      $region521: #{tpu_custom_call.1} parent=516 // loop_body
        %v656 = vld [vmem:[%s654] sm:%s647]
        %657 = vst [vmem:[%s655] sm:%s647] %v656
      $region522: #{tpu_custom_call.1} parent=516 // loop_footer
        %s653 = sadd.s32 1, %s649
      $region523: #{tpu_custom_call.1} parent=516 // loop_footer_branch
        %648 = sbr.rel target = $region519
      $region524: #{tpu_custom_call.1} parent=516 // loop_exit
        _
    $region517: #{tpu_custom_call.1} parent=1 // pred_fallthru
      _
    // Predicated region
    $region536: #{tpu_custom_call.1} parent=1 // pred_check
      _
    $region537: #{tpu_custom_call.1} parent=1 // pred_check_branch
      %674 = sbr.rel (0) target = $region539
    $region538: #{tpu_custom_call.1} parent=1 // pred_region
      %675 = vsyncadd %s641, 16
    $region539: #{tpu_custom_call.1} parent=1 // pred_fallthru
      _
    %s676 = scalar_lea.vmem %s3, %s638
    %s677 = scalar_lea.vmem [#allocation3], 8
    %s678 = scalar_lea.sflag [#allocation4], 24
    // Predicated region
    $region540: #{tpu_custom_call.1} parent=1 // pred_check
      _
    $region541: #{tpu_custom_call.1} parent=1 // pred_check_branch
      %680 = sbr.rel target = $region543
    $region542: #{tpu_custom_call.1} parent=1 // pred_region
      // Predicated region
      $region555: #{tpu_custom_call.1} parent=542 // pred_check
        _
      $region556: #{tpu_custom_call.1} parent=542 // pred_check_branch
        %696 = sbr.rel (0) target = $region558
      $region557: #{tpu_custom_call.1} parent=542 // pred_region
        %s698 = ssub.s32 2, 1
        loop: start=0, step=1, limit=1
        $region559: #{tpu_custom_call.1} parent=557 // loop_pre_header
          _
        $region560: #{tpu_custom_call.1} parent=557 // loop_header
          %s700 = sphi 0, %s704
          %p701 = scmp.ge.s32.totalorder %s700, 1
          %s705 = sphi %s676, %s676
          %s706 = sphi %s677, %s677
        $region561: #{tpu_custom_call.1} parent=557 // loop_header_branch
          %703 = sbr.rel (%p701) target = $region565
        $region562: #{tpu_custom_call.1} parent=557 // loop_body
          %v707 = vld [vmem:[%s705] sm:%s698]
          %708 = vst [vmem:[%s706] sm:%s698] %v707
        $region563: #{tpu_custom_call.1} parent=557 // loop_footer
          %s704 = sadd.s32 1, %s700
        $region564: #{tpu_custom_call.1} parent=557 // loop_footer_branch
          %699 = sbr.rel target = $region560
        $region565: #{tpu_custom_call.1} parent=557 // loop_exit
          _
      $region558: #{tpu_custom_call.1} parent=542 // pred_fallthru
        _
    $region543: #{tpu_custom_call.1} parent=1 // pred_fallthru
      _
    // Predicated region
    $region544: #{tpu_custom_call.1} parent=1 // pred_check
      _
    $region545: #{tpu_custom_call.1} parent=1 // pred_check_branch
      %682 = sbr.rel (0) target = $region547
    $region546: #{tpu_custom_call.1} parent=1 // pred_region
      %s684 = ssub.s32 2, 1
      loop: start=0, step=1, limit=1
      $region548: #{tpu_custom_call.1} parent=546 // loop_pre_header
        _
      $region549: #{tpu_custom_call.1} parent=546 // loop_header
        %s686 = sphi 0, %s690
        %p687 = scmp.ge.s32.totalorder %s686, 1
        %s691 = sphi %s676, %s676
        %s692 = sphi %s677, %s677
      $region550: #{tpu_custom_call.1} parent=546 // loop_header_branch
        %689 = sbr.rel (%p687) target = $region554
      $region551: #{tpu_custom_call.1} parent=546 // loop_body
        %v693 = vld [vmem:[%s691] sm:%s684]
        %694 = vst [vmem:[%s692] sm:%s684] %v693
      $region552: #{tpu_custom_call.1} parent=546 // loop_footer
        %s690 = sadd.s32 1, %s686
      $region553: #{tpu_custom_call.1} parent=546 // loop_footer_branch
        %685 = sbr.rel target = $region549
      $region554: #{tpu_custom_call.1} parent=546 // loop_exit
        _
    $region547: #{tpu_custom_call.1} parent=1 // pred_fallthru
      _
    // Predicated region
    $region566: #{tpu_custom_call.1} parent=1 // pred_check
      _
    $region567: #{tpu_custom_call.1} parent=1 // pred_check_branch
      %711 = sbr.rel (0) target = $region569
    $region568: #{tpu_custom_call.1} parent=1 // pred_region
      %712 = vsyncadd %s678, 16
    $region569: #{tpu_custom_call.1} parent=1 // pred_fallthru
      _
    %s713 = sld [smem:[#allocation6 + $0x9]]
    %s714 = scalar_lea.vmem %s2, %s713
    %s715 = scalar_lea.vmem [#allocation2], 9
    %s716 = scalar_lea.sflag [#allocation4], 9
    // Predicated region
    $region570: #{tpu_custom_call.1} parent=1 // pred_check
      _
    $region571: #{tpu_custom_call.1} parent=1 // pred_check_branch
      %718 = sbr.rel target = $region573
    $region572: #{tpu_custom_call.1} parent=1 // pred_region
      // Predicated region
      $region585: #{tpu_custom_call.1} parent=572 // pred_check
        _
      $region586: #{tpu_custom_call.1} parent=572 // pred_check_branch
        %734 = sbr.rel (0) target = $region588
      $region587: #{tpu_custom_call.1} parent=572 // pred_region
        %s736 = ssub.s32 2, 1
        loop: start=0, step=1, limit=1
        $region589: #{tpu_custom_call.1} parent=587 // loop_pre_header
          _
        $region590: #{tpu_custom_call.1} parent=587 // loop_header
          %s738 = sphi 0, %s742
          %p739 = scmp.ge.s32.totalorder %s738, 1
          %s743 = sphi %s714, %s714
          %s744 = sphi %s715, %s715
        $region591: #{tpu_custom_call.1} parent=587 // loop_header_branch
          %741 = sbr.rel (%p739) target = $region595
        $region592: #{tpu_custom_call.1} parent=587 // loop_body
          %v745 = vld [vmem:[%s743] sm:%s736]
          %746 = vst [vmem:[%s744] sm:%s736] %v745
        $region593: #{tpu_custom_call.1} parent=587 // loop_footer
          %s742 = sadd.s32 1, %s738
        $region594: #{tpu_custom_call.1} parent=587 // loop_footer_branch
          %737 = sbr.rel target = $region590
        $region595: #{tpu_custom_call.1} parent=587 // loop_exit
          _
      $region588: #{tpu_custom_call.1} parent=572 // pred_fallthru
        _
    $region573: #{tpu_custom_call.1} parent=1 // pred_fallthru
      _
    // Predicated region
    $region574: #{tpu_custom_call.1} parent=1 // pred_check
      _
    $region575: #{tpu_custom_call.1} parent=1 // pred_check_branch
      %720 = sbr.rel (0) target = $region577
    $region576: #{tpu_custom_call.1} parent=1 // pred_region
      %s722 = ssub.s32 2, 1
      loop: start=0, step=1, limit=1
      $region578: #{tpu_custom_call.1} parent=576 // loop_pre_header
        _
      $region579: #{tpu_custom_call.1} parent=576 // loop_header
        %s724 = sphi 0, %s728
        %p725 = scmp.ge.s32.totalorder %s724, 1
        %s729 = sphi %s714, %s714
        %s730 = sphi %s715, %s715
      $region580: #{tpu_custom_call.1} parent=576 // loop_header_branch
        %727 = sbr.rel (%p725) target = $region584
      $region581: #{tpu_custom_call.1} parent=576 // loop_body
        %v731 = vld [vmem:[%s729] sm:%s722]
        %732 = vst [vmem:[%s730] sm:%s722] %v731
      $region582: #{tpu_custom_call.1} parent=576 // loop_footer
        %s728 = sadd.s32 1, %s724
      $region583: #{tpu_custom_call.1} parent=576 // loop_footer_branch
        %723 = sbr.rel target = $region579
      $region584: #{tpu_custom_call.1} parent=576 // loop_exit
        _
    $region577: #{tpu_custom_call.1} parent=1 // pred_fallthru
      _
    // Predicated region
    $region596: #{tpu_custom_call.1} parent=1 // pred_check
      _
    $region597: #{tpu_custom_call.1} parent=1 // pred_check_branch
      %749 = sbr.rel (0) target = $region599
    $region598: #{tpu_custom_call.1} parent=1 // pred_region
      %750 = vsyncadd %s716, 16
    $region599: #{tpu_custom_call.1} parent=1 // pred_fallthru
      _
    %s751 = scalar_lea.vmem %s3, %s713
    %s752 = scalar_lea.vmem [#allocation3], 9
    %s753 = scalar_lea.sflag [#allocation4], 25
    // Predicated region
    $region600: #{tpu_custom_call.1} parent=1 // pred_check
      _
    $region601: #{tpu_custom_call.1} parent=1 // pred_check_branch
      %755 = sbr.rel target = $region603
    $region602: #{tpu_custom_call.1} parent=1 // pred_region
      // Predicated region
      $region615: #{tpu_custom_call.1} parent=602 // pred_check
        _
      $region616: #{tpu_custom_call.1} parent=602 // pred_check_branch
        %771 = sbr.rel (0) target = $region618
      $region617: #{tpu_custom_call.1} parent=602 // pred_region
        %s773 = ssub.s32 2, 1
        loop: start=0, step=1, limit=1
        $region619: #{tpu_custom_call.1} parent=617 // loop_pre_header
          _
        $region620: #{tpu_custom_call.1} parent=617 // loop_header
          %s775 = sphi 0, %s779
          %p776 = scmp.ge.s32.totalorder %s775, 1
          %s780 = sphi %s751, %s751
          %s781 = sphi %s752, %s752
        $region621: #{tpu_custom_call.1} parent=617 // loop_header_branch
          %778 = sbr.rel (%p776) target = $region625
        $region622: #{tpu_custom_call.1} parent=617 // loop_body
          %v782 = vld [vmem:[%s780] sm:%s773]
          %783 = vst [vmem:[%s781] sm:%s773] %v782
        $region623: #{tpu_custom_call.1} parent=617 // loop_footer
          %s779 = sadd.s32 1, %s775
        $region624: #{tpu_custom_call.1} parent=617 // loop_footer_branch
          %774 = sbr.rel target = $region620
        $region625: #{tpu_custom_call.1} parent=617 // loop_exit
          _
      $region618: #{tpu_custom_call.1} parent=602 // pred_fallthru
        _
    $region603: #{tpu_custom_call.1} parent=1 // pred_fallthru
      _
    // Predicated region
    $region604: #{tpu_custom_call.1} parent=1 // pred_check
      _
    $region605: #{tpu_custom_call.1} parent=1 // pred_check_branch
      %757 = sbr.rel (0) target = $region607
    $region606: #{tpu_custom_call.1} parent=1 // pred_region
      %s759 = ssub.s32 2, 1
      loop: start=0, step=1, limit=1
      $region608: #{tpu_custom_call.1} parent=606 // loop_pre_header
        _
      $region609: #{tpu_custom_call.1} parent=606 // loop_header
        %s761 = sphi 0, %s765
        %p762 = scmp.ge.s32.totalorder %s761, 1
        %s766 = sphi %s751, %s751
        %s767 = sphi %s752, %s752
      $region610: #{tpu_custom_call.1} parent=606 // loop_header_branch
        %764 = sbr.rel (%p762) target = $region614
      $region611: #{tpu_custom_call.1} parent=606 // loop_body
        %v768 = vld [vmem:[%s766] sm:%s759]
        %769 = vst [vmem:[%s767] sm:%s759] %v768
      $region612: #{tpu_custom_call.1} parent=606 // loop_footer
        %s765 = sadd.s32 1, %s761
      $region613: #{tpu_custom_call.1} parent=606 // loop_footer_branch
        %760 = sbr.rel target = $region609
      $region614: #{tpu_custom_call.1} parent=606 // loop_exit
        _
    $region607: #{tpu_custom_call.1} parent=1 // pred_fallthru
      _
    // Predicated region
    $region626: #{tpu_custom_call.1} parent=1 // pred_check
      _
    $region627: #{tpu_custom_call.1} parent=1 // pred_check_branch
      %786 = sbr.rel (0) target = $region629
    $region628: #{tpu_custom_call.1} parent=1 // pred_region
      %787 = vsyncadd %s753, 16
    $region629: #{tpu_custom_call.1} parent=1 // pred_fallthru
      _
    %s788 = sld [smem:[#allocation6 + $0xa]]
    %s789 = scalar_lea.vmem %s2, %s788
    %s790 = scalar_lea.vmem [#allocation2], 10
    %s791 = scalar_lea.sflag [#allocation4], 10
    // Predicated region
    $region630: #{tpu_custom_call.1} parent=1 // pred_check
      _
    $region631: #{tpu_custom_call.1} parent=1 // pred_check_branch
      %793 = sbr.rel target = $region633
    $region632: #{tpu_custom_call.1} parent=1 // pred_region
      // Predicated region
      $region645: #{tpu_custom_call.1} parent=632 // pred_check
        _
      $region646: #{tpu_custom_call.1} parent=632 // pred_check_branch
        %809 = sbr.rel (0) target = $region648
      $region647: #{tpu_custom_call.1} parent=632 // pred_region
        %s811 = ssub.s32 2, 1
        loop: start=0, step=1, limit=1
        $region649: #{tpu_custom_call.1} parent=647 // loop_pre_header
          _
        $region650: #{tpu_custom_call.1} parent=647 // loop_header
          %s813 = sphi 0, %s817
          %p814 = scmp.ge.s32.totalorder %s813, 1
          %s818 = sphi %s789, %s789
          %s819 = sphi %s790, %s790
        $region651: #{tpu_custom_call.1} parent=647 // loop_header_branch
          %816 = sbr.rel (%p814) target = $region655
        $region652: #{tpu_custom_call.1} parent=647 // loop_body
          %v820 = vld [vmem:[%s818] sm:%s811]
          %821 = vst [vmem:[%s819] sm:%s811] %v820
        $region653: #{tpu_custom_call.1} parent=647 // loop_footer
          %s817 = sadd.s32 1, %s813
        $region654: #{tpu_custom_call.1} parent=647 // loop_footer_branch
          %812 = sbr.rel target = $region650
        $region655: #{tpu_custom_call.1} parent=647 // loop_exit
          _
      $region648: #{tpu_custom_call.1} parent=632 // pred_fallthru
        _
    $region633: #{tpu_custom_call.1} parent=1 // pred_fallthru
      _
    // Predicated region
    $region634: #{tpu_custom_call.1} parent=1 // pred_check
      _
    $region635: #{tpu_custom_call.1} parent=1 // pred_check_branch
      %795 = sbr.rel (0) target = $region637
    $region636: #{tpu_custom_call.1} parent=1 // pred_region
      %s797 = ssub.s32 2, 1
      loop: start=0, step=1, limit=1
      $region638: #{tpu_custom_call.1} parent=636 // loop_pre_header
        _
      $region639: #{tpu_custom_call.1} parent=636 // loop_header
        %s799 = sphi 0, %s803
        %p800 = scmp.ge.s32.totalorder %s799, 1
        %s804 = sphi %s789, %s789
        %s805 = sphi %s790, %s790
      $region640: #{tpu_custom_call.1} parent=636 // loop_header_branch
        %802 = sbr.rel (%p800) target = $region644
      $region641: #{tpu_custom_call.1} parent=636 // loop_body
        %v806 = vld [vmem:[%s804] sm:%s797]
        %807 = vst [vmem:[%s805] sm:%s797] %v806
      $region642: #{tpu_custom_call.1} parent=636 // loop_footer
        %s803 = sadd.s32 1, %s799
      $region643: #{tpu_custom_call.1} parent=636 // loop_footer_branch
        %798 = sbr.rel target = $region639
      $region644: #{tpu_custom_call.1} parent=636 // loop_exit
        _
    $region637: #{tpu_custom_call.1} parent=1 // pred_fallthru
      _
    // Predicated region
    $region656: #{tpu_custom_call.1} parent=1 // pred_check
      _
    $region657: #{tpu_custom_call.1} parent=1 // pred_check_branch
      %824 = sbr.rel (0) target = $region659
    $region658: #{tpu_custom_call.1} parent=1 // pred_region
      %825 = vsyncadd %s791, 16
    $region659: #{tpu_custom_call.1} parent=1 // pred_fallthru
      _
    %s826 = scalar_lea.vmem %s3, %s788
    %s827 = scalar_lea.vmem [#allocation3], 10
    %s828 = scalar_lea.sflag [#allocation4], 26
    // Predicated region
    $region660: #{tpu_custom_call.1} parent=1 // pred_check
      _
    $region661: #{tpu_custom_call.1} parent=1 // pred_check_branch
      %830 = sbr.rel target = $region663
    $region662: #{tpu_custom_call.1} parent=1 // pred_region
      // Predicated region
      $region675: #{tpu_custom_call.1} parent=662 // pred_check
        _
      $region676: #{tpu_custom_call.1} parent=662 // pred_check_branch
        %846 = sbr.rel (0) target = $region678
      $region677: #{tpu_custom_call.1} parent=662 // pred_region
        %s848 = ssub.s32 2, 1
        loop: start=0, step=1, limit=1
        $region679: #{tpu_custom_call.1} parent=677 // loop_pre_header
          _
        $region680: #{tpu_custom_call.1} parent=677 // loop_header
          %s850 = sphi 0, %s854
          %p851 = scmp.ge.s32.totalorder %s850, 1
          %s855 = sphi %s826, %s826
          %s856 = sphi %s827, %s827
        $region681: #{tpu_custom_call.1} parent=677 // loop_header_branch
          %853 = sbr.rel (%p851) target = $region685
        $region682: #{tpu_custom_call.1} parent=677 // loop_body
          %v857 = vld [vmem:[%s855] sm:%s848]
          %858 = vst [vmem:[%s856] sm:%s848] %v857
        $region683: #{tpu_custom_call.1} parent=677 // loop_footer
          %s854 = sadd.s32 1, %s850
        $region684: #{tpu_custom_call.1} parent=677 // loop_footer_branch
          %849 = sbr.rel target = $region680
        $region685: #{tpu_custom_call.1} parent=677 // loop_exit
          _
      $region678: #{tpu_custom_call.1} parent=662 // pred_fallthru
        _
    $region663: #{tpu_custom_call.1} parent=1 // pred_fallthru
      _
    // Predicated region
    $region664: #{tpu_custom_call.1} parent=1 // pred_check
      _
    $region665: #{tpu_custom_call.1} parent=1 // pred_check_branch
      %832 = sbr.rel (0) target = $region667
    $region666: #{tpu_custom_call.1} parent=1 // pred_region
      %s834 = ssub.s32 2, 1
      loop: start=0, step=1, limit=1
      $region668: #{tpu_custom_call.1} parent=666 // loop_pre_header
        _
      $region669: #{tpu_custom_call.1} parent=666 // loop_header
        %s836 = sphi 0, %s840
        %p837 = scmp.ge.s32.totalorder %s836, 1
        %s841 = sphi %s826, %s826
        %s842 = sphi %s827, %s827
      $region670: #{tpu_custom_call.1} parent=666 // loop_header_branch
        %839 = sbr.rel (%p837) target = $region674
      $region671: #{tpu_custom_call.1} parent=666 // loop_body
        %v843 = vld [vmem:[%s841] sm:%s834]
        %844 = vst [vmem:[%s842] sm:%s834] %v843
      $region672: #{tpu_custom_call.1} parent=666 // loop_footer
        %s840 = sadd.s32 1, %s836
      $region673: #{tpu_custom_call.1} parent=666 // loop_footer_branch
        %835 = sbr.rel target = $region669
      $region674: #{tpu_custom_call.1} parent=666 // loop_exit
        _
    $region667: #{tpu_custom_call.1} parent=1 // pred_fallthru
      _
    // Predicated region
    $region686: #{tpu_custom_call.1} parent=1 // pred_check
      _
    $region687: #{tpu_custom_call.1} parent=1 // pred_check_branch
      %861 = sbr.rel (0) target = $region689
    $region688: #{tpu_custom_call.1} parent=1 // pred_region
      %862 = vsyncadd %s828, 16
    $region689: #{tpu_custom_call.1} parent=1 // pred_fallthru
      _
    %s863 = sld [smem:[#allocation6 + $0xb]]
    %s864 = scalar_lea.vmem %s2, %s863
    %s865 = scalar_lea.vmem [#allocation2], 11
    %s866 = scalar_lea.sflag [#allocation4], 11
    // Predicated region
    $region690: #{tpu_custom_call.1} parent=1 // pred_check
      _
    $region691: #{tpu_custom_call.1} parent=1 // pred_check_branch
      %868 = sbr.rel target = $region693
    $region692: #{tpu_custom_call.1} parent=1 // pred_region
      // Predicated region
      $region705: #{tpu_custom_call.1} parent=692 // pred_check
        _
      $region706: #{tpu_custom_call.1} parent=692 // pred_check_branch
        %884 = sbr.rel (0) target = $region708
      $region707: #{tpu_custom_call.1} parent=692 // pred_region
        %s886 = ssub.s32 2, 1
        loop: start=0, step=1, limit=1
        $region709: #{tpu_custom_call.1} parent=707 // loop_pre_header
          _
        $region710: #{tpu_custom_call.1} parent=707 // loop_header
          %s888 = sphi 0, %s892
          %p889 = scmp.ge.s32.totalorder %s888, 1
          %s893 = sphi %s864, %s864
          %s894 = sphi %s865, %s865
        $region711: #{tpu_custom_call.1} parent=707 // loop_header_branch
          %891 = sbr.rel (%p889) target = $region715
        $region712: #{tpu_custom_call.1} parent=707 // loop_body
          %v895 = vld [vmem:[%s893] sm:%s886]
          %896 = vst [vmem:[%s894] sm:%s886] %v895
        $region713: #{tpu_custom_call.1} parent=707 // loop_footer
          %s892 = sadd.s32 1, %s888
        $region714: #{tpu_custom_call.1} parent=707 // loop_footer_branch
          %887 = sbr.rel target = $region710
        $region715: #{tpu_custom_call.1} parent=707 // loop_exit
          _
      $region708: #{tpu_custom_call.1} parent=692 // pred_fallthru
        _
    $region693: #{tpu_custom_call.1} parent=1 // pred_fallthru
      _
    // Predicated region
    $region694: #{tpu_custom_call.1} parent=1 // pred_check
      _
    $region695: #{tpu_custom_call.1} parent=1 // pred_check_branch
      %870 = sbr.rel (0) target = $region697
    $region696: #{tpu_custom_call.1} parent=1 // pred_region
      %s872 = ssub.s32 2, 1
      loop: start=0, step=1, limit=1
      $region698: #{tpu_custom_call.1} parent=696 // loop_pre_header
        _
      $region699: #{tpu_custom_call.1} parent=696 // loop_header
        %s874 = sphi 0, %s878
        %p875 = scmp.ge.s32.totalorder %s874, 1
        %s879 = sphi %s864, %s864
        %s880 = sphi %s865, %s865
      $region700: #{tpu_custom_call.1} parent=696 // loop_header_branch
        %877 = sbr.rel (%p875) target = $region704
      $region701: #{tpu_custom_call.1} parent=696 // loop_body
        %v881 = vld [vmem:[%s879] sm:%s872]
        %882 = vst [vmem:[%s880] sm:%s872] %v881
      $region702: #{tpu_custom_call.1} parent=696 // loop_footer
        %s878 = sadd.s32 1, %s874
      $region703: #{tpu_custom_call.1} parent=696 // loop_footer_branch
        %873 = sbr.rel target = $region699
      $region704: #{tpu_custom_call.1} parent=696 // loop_exit
        _
    $region697: #{tpu_custom_call.1} parent=1 // pred_fallthru
      _
    // Predicated region
    $region716: #{tpu_custom_call.1} parent=1 // pred_check
      _
    $region717: #{tpu_custom_call.1} parent=1 // pred_check_branch
      %899 = sbr.rel (0) target = $region719
    $region718: #{tpu_custom_call.1} parent=1 // pred_region
      %900 = vsyncadd %s866, 16
    $region719: #{tpu_custom_call.1} parent=1 // pred_fallthru
      _
    %s901 = scalar_lea.vmem %s3, %s863
    %s902 = scalar_lea.vmem [#allocation3], 11
    %s903 = scalar_lea.sflag [#allocation4], 27
    // Predicated region
    $region720: #{tpu_custom_call.1} parent=1 // pred_check
      _
    $region721: #{tpu_custom_call.1} parent=1 // pred_check_branch
      %905 = sbr.rel target = $region723
    $region722: #{tpu_custom_call.1} parent=1 // pred_region
      // Predicated region
      $region735: #{tpu_custom_call.1} parent=722 // pred_check
        _
      $region736: #{tpu_custom_call.1} parent=722 // pred_check_branch
        %921 = sbr.rel (0) target = $region738
      $region737: #{tpu_custom_call.1} parent=722 // pred_region
        %s923 = ssub.s32 2, 1
        loop: start=0, step=1, limit=1
        $region739: #{tpu_custom_call.1} parent=737 // loop_pre_header
          _
        $region740: #{tpu_custom_call.1} parent=737 // loop_header
          %s925 = sphi 0, %s929
          %p926 = scmp.ge.s32.totalorder %s925, 1
          %s930 = sphi %s901, %s901
          %s931 = sphi %s902, %s902
        $region741: #{tpu_custom_call.1} parent=737 // loop_header_branch
          %928 = sbr.rel (%p926) target = $region745
        $region742: #{tpu_custom_call.1} parent=737 // loop_body
          %v932 = vld [vmem:[%s930] sm:%s923]
          %933 = vst [vmem:[%s931] sm:%s923] %v932
        $region743: #{tpu_custom_call.1} parent=737 // loop_footer
          %s929 = sadd.s32 1, %s925
        $region744: #{tpu_custom_call.1} parent=737 // loop_footer_branch
          %924 = sbr.rel target = $region740
        $region745: #{tpu_custom_call.1} parent=737 // loop_exit
          _
      $region738: #{tpu_custom_call.1} parent=722 // pred_fallthru
        _
    $region723: #{tpu_custom_call.1} parent=1 // pred_fallthru
      _
    // Predicated region
    $region724: #{tpu_custom_call.1} parent=1 // pred_check
      _
    $region725: #{tpu_custom_call.1} parent=1 // pred_check_branch
      %907 = sbr.rel (0) target = $region727
    $region726: #{tpu_custom_call.1} parent=1 // pred_region
      %s909 = ssub.s32 2, 1
      loop: start=0, step=1, limit=1
      $region728: #{tpu_custom_call.1} parent=726 // loop_pre_header
        _
      $region729: #{tpu_custom_call.1} parent=726 // loop_header
        %s911 = sphi 0, %s915
        %p912 = scmp.ge.s32.totalorder %s911, 1
        %s916 = sphi %s901, %s901
        %s917 = sphi %s902, %s902
      $region730: #{tpu_custom_call.1} parent=726 // loop_header_branch
        %914 = sbr.rel (%p912) target = $region734
      $region731: #{tpu_custom_call.1} parent=726 // loop_body
        %v918 = vld [vmem:[%s916] sm:%s909]
        %919 = vst [vmem:[%s917] sm:%s909] %v918
      $region732: #{tpu_custom_call.1} parent=726 // loop_footer
        %s915 = sadd.s32 1, %s911
      $region733: #{tpu_custom_call.1} parent=726 // loop_footer_branch
        %910 = sbr.rel target = $region729
      $region734: #{tpu_custom_call.1} parent=726 // loop_exit
        _
    $region727: #{tpu_custom_call.1} parent=1 // pred_fallthru
      _
    // Predicated region
    $region746: #{tpu_custom_call.1} parent=1 // pred_check
      _
    $region747: #{tpu_custom_call.1} parent=1 // pred_check_branch
      %936 = sbr.rel (0) target = $region749
    $region748: #{tpu_custom_call.1} parent=1 // pred_region
      %937 = vsyncadd %s903, 16
    $region749: #{tpu_custom_call.1} parent=1 // pred_fallthru
      _
    %s938 = sld [smem:[#allocation6 + $0xc]]
    %s939 = scalar_lea.vmem %s2, %s938
    %s940 = scalar_lea.vmem [#allocation2], 12
    %s941 = scalar_lea.sflag [#allocation4], 12
    // Predicated region
    $region750: #{tpu_custom_call.1} parent=1 // pred_check
      _
    $region751: #{tpu_custom_call.1} parent=1 // pred_check_branch
      %943 = sbr.rel target = $region753
    $region752: #{tpu_custom_call.1} parent=1 // pred_region
      // Predicated region
      $region765: #{tpu_custom_call.1} parent=752 // pred_check
        _
      $region766: #{tpu_custom_call.1} parent=752 // pred_check_branch
        %959 = sbr.rel (0) target = $region768
      $region767: #{tpu_custom_call.1} parent=752 // pred_region
        %s961 = ssub.s32 2, 1
        loop: start=0, step=1, limit=1
        $region769: #{tpu_custom_call.1} parent=767 // loop_pre_header
          _
        $region770: #{tpu_custom_call.1} parent=767 // loop_header
          %s963 = sphi 0, %s967
          %p964 = scmp.ge.s32.totalorder %s963, 1
          %s968 = sphi %s939, %s939
          %s969 = sphi %s940, %s940
        $region771: #{tpu_custom_call.1} parent=767 // loop_header_branch
          %966 = sbr.rel (%p964) target = $region775
        $region772: #{tpu_custom_call.1} parent=767 // loop_body
          %v970 = vld [vmem:[%s968] sm:%s961]
          %971 = vst [vmem:[%s969] sm:%s961] %v970
        $region773: #{tpu_custom_call.1} parent=767 // loop_footer
          %s967 = sadd.s32 1, %s963
        $region774: #{tpu_custom_call.1} parent=767 // loop_footer_branch
          %962 = sbr.rel target = $region770
        $region775: #{tpu_custom_call.1} parent=767 // loop_exit
          _
      $region768: #{tpu_custom_call.1} parent=752 // pred_fallthru
        _
    $region753: #{tpu_custom_call.1} parent=1 // pred_fallthru
      _
    // Predicated region
    $region754: #{tpu_custom_call.1} parent=1 // pred_check
      _
    $region755: #{tpu_custom_call.1} parent=1 // pred_check_branch
      %945 = sbr.rel (0) target = $region757
    $region756: #{tpu_custom_call.1} parent=1 // pred_region
      %s947 = ssub.s32 2, 1
      loop: start=0, step=1, limit=1
      $region758: #{tpu_custom_call.1} parent=756 // loop_pre_header
        _
      $region759: #{tpu_custom_call.1} parent=756 // loop_header
        %s949 = sphi 0, %s953
        %p950 = scmp.ge.s32.totalorder %s949, 1
        %s954 = sphi %s939, %s939
        %s955 = sphi %s940, %s940
      $region760: #{tpu_custom_call.1} parent=756 // loop_header_branch
        %952 = sbr.rel (%p950) target = $region764
      $region761: #{tpu_custom_call.1} parent=756 // loop_body
        %v956 = vld [vmem:[%s954] sm:%s947]
        %957 = vst [vmem:[%s955] sm:%s947] %v956
      $region762: #{tpu_custom_call.1} parent=756 // loop_footer
        %s953 = sadd.s32 1, %s949
      $region763: #{tpu_custom_call.1} parent=756 // loop_footer_branch
        %948 = sbr.rel target = $region759
      $region764: #{tpu_custom_call.1} parent=756 // loop_exit
        _
    $region757: #{tpu_custom_call.1} parent=1 // pred_fallthru
      _
    // Predicated region
    $region776: #{tpu_custom_call.1} parent=1 // pred_check
      _
    $region777: #{tpu_custom_call.1} parent=1 // pred_check_branch
      %974 = sbr.rel (0) target = $region779
    $region778: #{tpu_custom_call.1} parent=1 // pred_region
      %975 = vsyncadd %s941, 16
    $region779: #{tpu_custom_call.1} parent=1 // pred_fallthru
      _
    %s976 = scalar_lea.vmem %s3, %s938
    %s977 = scalar_lea.vmem [#allocation3], 12
    %s978 = scalar_lea.sflag [#allocation4], 28
    // Predicated region
    $region780: #{tpu_custom_call.1} parent=1 // pred_check
      _
    $region781: #{tpu_custom_call.1} parent=1 // pred_check_branch
      %980 = sbr.rel target = $region783
    $region782: #{tpu_custom_call.1} parent=1 // pred_region
      // Predicated region
      $region795: #{tpu_custom_call.1} parent=782 // pred_check
        _
      $region796: #{tpu_custom_call.1} parent=782 // pred_check_branch
        %996 = sbr.rel (0) target = $region798
      $region797: #{tpu_custom_call.1} parent=782 // pred_region
        %s998 = ssub.s32 2, 1
        loop: start=0, step=1, limit=1
        $region799: #{tpu_custom_call.1} parent=797 // loop_pre_header
          _
        $region800: #{tpu_custom_call.1} parent=797 // loop_header
          %s1000 = sphi 0, %s1004
          %p1001 = scmp.ge.s32.totalorder %s1000, 1
          %s1005 = sphi %s976, %s976
          %s1006 = sphi %s977, %s977
        $region801: #{tpu_custom_call.1} parent=797 // loop_header_branch
          %1003 = sbr.rel (%p1001) target = $region805
        $region802: #{tpu_custom_call.1} parent=797 // loop_body
          %v1007 = vld [vmem:[%s1005] sm:%s998]
          %1008 = vst [vmem:[%s1006] sm:%s998] %v1007
        $region803: #{tpu_custom_call.1} parent=797 // loop_footer
          %s1004 = sadd.s32 1, %s1000
        $region804: #{tpu_custom_call.1} parent=797 // loop_footer_branch
          %999 = sbr.rel target = $region800
        $region805: #{tpu_custom_call.1} parent=797 // loop_exit
          _
      $region798: #{tpu_custom_call.1} parent=782 // pred_fallthru
        _
    $region783: #{tpu_custom_call.1} parent=1 // pred_fallthru
      _
    // Predicated region
    $region784: #{tpu_custom_call.1} parent=1 // pred_check
      _
    $region785: #{tpu_custom_call.1} parent=1 // pred_check_branch
      %982 = sbr.rel (0) target = $region787
    $region786: #{tpu_custom_call.1} parent=1 // pred_region
      %s984 = ssub.s32 2, 1
      loop: start=0, step=1, limit=1
      $region788: #{tpu_custom_call.1} parent=786 // loop_pre_header
        _
      $region789: #{tpu_custom_call.1} parent=786 // loop_header
        %s986 = sphi 0, %s990
        %p987 = scmp.ge.s32.totalorder %s986, 1
        %s991 = sphi %s976, %s976
        %s992 = sphi %s977, %s977
      $region790: #{tpu_custom_call.1} parent=786 // loop_header_branch
        %989 = sbr.rel (%p987) target = $region794
      $region791: #{tpu_custom_call.1} parent=786 // loop_body
        %v993 = vld [vmem:[%s991] sm:%s984]
        %994 = vst [vmem:[%s992] sm:%s984] %v993
      $region792: #{tpu_custom_call.1} parent=786 // loop_footer
        %s990 = sadd.s32 1, %s986
      $region793: #{tpu_custom_call.1} parent=786 // loop_footer_branch
        %985 = sbr.rel target = $region789
      $region794: #{tpu_custom_call.1} parent=786 // loop_exit
        _
    $region787: #{tpu_custom_call.1} parent=1 // pred_fallthru
      _
    // Predicated region
    $region806: #{tpu_custom_call.1} parent=1 // pred_check
      _
    $region807: #{tpu_custom_call.1} parent=1 // pred_check_branch
      %1011 = sbr.rel (0) target = $region809
    $region808: #{tpu_custom_call.1} parent=1 // pred_region
      %1012 = vsyncadd %s978, 16
    $region809: #{tpu_custom_call.1} parent=1 // pred_fallthru
      _
    %s1013 = sld [smem:[#allocation6 + $0xd]]
    %s1014 = scalar_lea.vmem %s2, %s1013
    %s1015 = scalar_lea.vmem [#allocation2], 13
    %s1016 = scalar_lea.sflag [#allocation4], 13
    // Predicated region
    $region810: #{tpu_custom_call.1} parent=1 // pred_check
      _
    $region811: #{tpu_custom_call.1} parent=1 // pred_check_branch
      %1018 = sbr.rel target = $region813
    $region812: #{tpu_custom_call.1} parent=1 // pred_region
      // Predicated region
      $region825: #{tpu_custom_call.1} parent=812 // pred_check
        _
      $region826: #{tpu_custom_call.1} parent=812 // pred_check_branch
        %1034 = sbr.rel (0) target = $region828
      $region827: #{tpu_custom_call.1} parent=812 // pred_region
        %s1036 = ssub.s32 2, 1
        loop: start=0, step=1, limit=1
        $region829: #{tpu_custom_call.1} parent=827 // loop_pre_header
          _
        $region830: #{tpu_custom_call.1} parent=827 // loop_header
          %s1038 = sphi 0, %s1042
          %p1039 = scmp.ge.s32.totalorder %s1038, 1
          %s1043 = sphi %s1014, %s1014
          %s1044 = sphi %s1015, %s1015
        $region831: #{tpu_custom_call.1} parent=827 // loop_header_branch
          %1041 = sbr.rel (%p1039) target = $region835
        $region832: #{tpu_custom_call.1} parent=827 // loop_body
          %v1045 = vld [vmem:[%s1043] sm:%s1036]
          %1046 = vst [vmem:[%s1044] sm:%s1036] %v1045
        $region833: #{tpu_custom_call.1} parent=827 // loop_footer
          %s1042 = sadd.s32 1, %s1038
        $region834: #{tpu_custom_call.1} parent=827 // loop_footer_branch
          %1037 = sbr.rel target = $region830
        $region835: #{tpu_custom_call.1} parent=827 // loop_exit
          _
      $region828: #{tpu_custom_call.1} parent=812 // pred_fallthru
        _
    $region813: #{tpu_custom_call.1} parent=1 // pred_fallthru
      _
    // Predicated region
    $region814: #{tpu_custom_call.1} parent=1 // pred_check
      _
    $region815: #{tpu_custom_call.1} parent=1 // pred_check_branch
      %1020 = sbr.rel (0) target = $region817
    $region816: #{tpu_custom_call.1} parent=1 // pred_region
      %s1022 = ssub.s32 2, 1
      loop: start=0, step=1, limit=1
      $region818: #{tpu_custom_call.1} parent=816 // loop_pre_header
        _
      $region819: #{tpu_custom_call.1} parent=816 // loop_header
        %s1024 = sphi 0, %s1028
        %p1025 = scmp.ge.s32.totalorder %s1024, 1
        %s1029 = sphi %s1014, %s1014
        %s1030 = sphi %s1015, %s1015
      $region820: #{tpu_custom_call.1} parent=816 // loop_header_branch
        %1027 = sbr.rel (%p1025) target = $region824
      $region821: #{tpu_custom_call.1} parent=816 // loop_body
        %v1031 = vld [vmem:[%s1029] sm:%s1022]
        %1032 = vst [vmem:[%s1030] sm:%s1022] %v1031
      $region822: #{tpu_custom_call.1} parent=816 // loop_footer
        %s1028 = sadd.s32 1, %s1024
      $region823: #{tpu_custom_call.1} parent=816 // loop_footer_branch
        %1023 = sbr.rel target = $region819
      $region824: #{tpu_custom_call.1} parent=816 // loop_exit
        _
    $region817: #{tpu_custom_call.1} parent=1 // pred_fallthru
      _
    // Predicated region
    $region836: #{tpu_custom_call.1} parent=1 // pred_check
      _
    $region837: #{tpu_custom_call.1} parent=1 // pred_check_branch
      %1049 = sbr.rel (0) target = $region839
    $region838: #{tpu_custom_call.1} parent=1 // pred_region
      %1050 = vsyncadd %s1016, 16
    $region839: #{tpu_custom_call.1} parent=1 // pred_fallthru
      _
    %s1051 = scalar_lea.vmem %s3, %s1013
    %s1052 = scalar_lea.vmem [#allocation3], 13
    %s1053 = scalar_lea.sflag [#allocation4], 29
    // Predicated region
    $region840: #{tpu_custom_call.1} parent=1 // pred_check
      _
    $region841: #{tpu_custom_call.1} parent=1 // pred_check_branch
      %1055 = sbr.rel target = $region843
    $region842: #{tpu_custom_call.1} parent=1 // pred_region
      // Predicated region
      $region855: #{tpu_custom_call.1} parent=842 // pred_check
        _
      $region856: #{tpu_custom_call.1} parent=842 // pred_check_branch
        %1071 = sbr.rel (0) target = $region858
      $region857: #{tpu_custom_call.1} parent=842 // pred_region
        %s1073 = ssub.s32 2, 1
        loop: start=0, step=1, limit=1
        $region859: #{tpu_custom_call.1} parent=857 // loop_pre_header
          _
        $region860: #{tpu_custom_call.1} parent=857 // loop_header
          %s1075 = sphi 0, %s1079
          %p1076 = scmp.ge.s32.totalorder %s1075, 1
          %s1080 = sphi %s1051, %s1051
          %s1081 = sphi %s1052, %s1052
        $region861: #{tpu_custom_call.1} parent=857 // loop_header_branch
          %1078 = sbr.rel (%p1076) target = $region865
        $region862: #{tpu_custom_call.1} parent=857 // loop_body
          %v1082 = vld [vmem:[%s1080] sm:%s1073]
          %1083 = vst [vmem:[%s1081] sm:%s1073] %v1082
        $region863: #{tpu_custom_call.1} parent=857 // loop_footer
          %s1079 = sadd.s32 1, %s1075
        $region864: #{tpu_custom_call.1} parent=857 // loop_footer_branch
          %1074 = sbr.rel target = $region860
        $region865: #{tpu_custom_call.1} parent=857 // loop_exit
          _
      $region858: #{tpu_custom_call.1} parent=842 // pred_fallthru
        _
    $region843: #{tpu_custom_call.1} parent=1 // pred_fallthru
      _
    // Predicated region
    $region844: #{tpu_custom_call.1} parent=1 // pred_check
      _
    $region845: #{tpu_custom_call.1} parent=1 // pred_check_branch
      %1057 = sbr.rel (0) target = $region847
    $region846: #{tpu_custom_call.1} parent=1 // pred_region
      %s1059 = ssub.s32 2, 1
      loop: start=0, step=1, limit=1
      $region848: #{tpu_custom_call.1} parent=846 // loop_pre_header
        _
      $region849: #{tpu_custom_call.1} parent=846 // loop_header
        %s1061 = sphi 0, %s1065
        %p1062 = scmp.ge.s32.totalorder %s1061, 1
        %s1066 = sphi %s1051, %s1051
        %s1067 = sphi %s1052, %s1052
      $region850: #{tpu_custom_call.1} parent=846 // loop_header_branch
        %1064 = sbr.rel (%p1062) target = $region854
      $region851: #{tpu_custom_call.1} parent=846 // loop_body
        %v1068 = vld [vmem:[%s1066] sm:%s1059]
        %1069 = vst [vmem:[%s1067] sm:%s1059] %v1068
      $region852: #{tpu_custom_call.1} parent=846 // loop_footer
        %s1065 = sadd.s32 1, %s1061
      $region853: #{tpu_custom_call.1} parent=846 // loop_footer_branch
        %1060 = sbr.rel target = $region849
      $region854: #{tpu_custom_call.1} parent=846 // loop_exit
        _
    $region847: #{tpu_custom_call.1} parent=1 // pred_fallthru
      _
    // Predicated region
    $region866: #{tpu_custom_call.1} parent=1 // pred_check
      _
    $region867: #{tpu_custom_call.1} parent=1 // pred_check_branch
      %1086 = sbr.rel (0) target = $region869
    $region868: #{tpu_custom_call.1} parent=1 // pred_region
      %1087 = vsyncadd %s1053, 16
    $region869: #{tpu_custom_call.1} parent=1 // pred_fallthru
      _
    %s1088 = sld [smem:[#allocation6 + $0xe]]
    %s1089 = scalar_lea.vmem %s2, %s1088
    %s1090 = scalar_lea.vmem [#allocation2], 14
    %s1091 = scalar_lea.sflag [#allocation4], 14
    // Predicated region
    $region870: #{tpu_custom_call.1} parent=1 // pred_check
      _
    $region871: #{tpu_custom_call.1} parent=1 // pred_check_branch
      %1093 = sbr.rel target = $region873
    $region872: #{tpu_custom_call.1} parent=1 // pred_region
      // Predicated region
      $region885: #{tpu_custom_call.1} parent=872 // pred_check
        _
      $region886: #{tpu_custom_call.1} parent=872 // pred_check_branch
        %1109 = sbr.rel (0) target = $region888
      $region887: #{tpu_custom_call.1} parent=872 // pred_region
        %s1111 = ssub.s32 2, 1
        loop: start=0, step=1, limit=1
        $region889: #{tpu_custom_call.1} parent=887 // loop_pre_header
          _
        $region890: #{tpu_custom_call.1} parent=887 // loop_header
          %s1113 = sphi 0, %s1117
          %p1114 = scmp.ge.s32.totalorder %s1113, 1
          %s1118 = sphi %s1089, %s1089
          %s1119 = sphi %s1090, %s1090
        $region891: #{tpu_custom_call.1} parent=887 // loop_header_branch
          %1116 = sbr.rel (%p1114) target = $region895
        $region892: #{tpu_custom_call.1} parent=887 // loop_body
          %v1120 = vld [vmem:[%s1118] sm:%s1111]
          %1121 = vst [vmem:[%s1119] sm:%s1111] %v1120
        $region893: #{tpu_custom_call.1} parent=887 // loop_footer
          %s1117 = sadd.s32 1, %s1113
        $region894: #{tpu_custom_call.1} parent=887 // loop_footer_branch
          %1112 = sbr.rel target = $region890
        $region895: #{tpu_custom_call.1} parent=887 // loop_exit
          _
      $region888: #{tpu_custom_call.1} parent=872 // pred_fallthru
        _
    $region873: #{tpu_custom_call.1} parent=1 // pred_fallthru
      _
    // Predicated region
    $region874: #{tpu_custom_call.1} parent=1 // pred_check
      _
    $region875: #{tpu_custom_call.1} parent=1 // pred_check_branch
      %1095 = sbr.rel (0) target = $region877
    $region876: #{tpu_custom_call.1} parent=1 // pred_region
      %s1097 = ssub.s32 2, 1
      loop: start=0, step=1, limit=1
      $region878: #{tpu_custom_call.1} parent=876 // loop_pre_header
        _
      $region879: #{tpu_custom_call.1} parent=876 // loop_header
        %s1099 = sphi 0, %s1103
        %p1100 = scmp.ge.s32.totalorder %s1099, 1
        %s1104 = sphi %s1089, %s1089
        %s1105 = sphi %s1090, %s1090
      $region880: #{tpu_custom_call.1} parent=876 // loop_header_branch
        %1102 = sbr.rel (%p1100) target = $region884
      $region881: #{tpu_custom_call.1} parent=876 // loop_body
        %v1106 = vld [vmem:[%s1104] sm:%s1097]
        %1107 = vst [vmem:[%s1105] sm:%s1097] %v1106
      $region882: #{tpu_custom_call.1} parent=876 // loop_footer
        %s1103 = sadd.s32 1, %s1099
      $region883: #{tpu_custom_call.1} parent=876 // loop_footer_branch
        %1098 = sbr.rel target = $region879
      $region884: #{tpu_custom_call.1} parent=876 // loop_exit
        _
    $region877: #{tpu_custom_call.1} parent=1 // pred_fallthru
      _
    // Predicated region
    $region896: #{tpu_custom_call.1} parent=1 // pred_check
      _
    $region897: #{tpu_custom_call.1} parent=1 // pred_check_branch
      %1124 = sbr.rel (0) target = $region899
    $region898: #{tpu_custom_call.1} parent=1 // pred_region
      %1125 = vsyncadd %s1091, 16
    $region899: #{tpu_custom_call.1} parent=1 // pred_fallthru
      _
    %s1126 = scalar_lea.vmem %s3, %s1088
    %s1127 = scalar_lea.vmem [#allocation3], 14
    %s1128 = scalar_lea.sflag [#allocation4], 30
    // Predicated region
    $region900: #{tpu_custom_call.1} parent=1 // pred_check
      _
    $region901: #{tpu_custom_call.1} parent=1 // pred_check_branch
      %1130 = sbr.rel target = $region903
    $region902: #{tpu_custom_call.1} parent=1 // pred_region
      // Predicated region
      $region915: #{tpu_custom_call.1} parent=902 // pred_check
        _
      $region916: #{tpu_custom_call.1} parent=902 // pred_check_branch
        %1146 = sbr.rel (0) target = $region918
      $region917: #{tpu_custom_call.1} parent=902 // pred_region
        %s1148 = ssub.s32 2, 1
        loop: start=0, step=1, limit=1
        $region919: #{tpu_custom_call.1} parent=917 // loop_pre_header
          _
        $region920: #{tpu_custom_call.1} parent=917 // loop_header
          %s1150 = sphi 0, %s1154
          %p1151 = scmp.ge.s32.totalorder %s1150, 1
          %s1155 = sphi %s1126, %s1126
          %s1156 = sphi %s1127, %s1127
        $region921: #{tpu_custom_call.1} parent=917 // loop_header_branch
          %1153 = sbr.rel (%p1151) target = $region925
        $region922: #{tpu_custom_call.1} parent=917 // loop_body
          %v1157 = vld [vmem:[%s1155] sm:%s1148]
          %1158 = vst [vmem:[%s1156] sm:%s1148] %v1157
        $region923: #{tpu_custom_call.1} parent=917 // loop_footer
          %s1154 = sadd.s32 1, %s1150
        $region924: #{tpu_custom_call.1} parent=917 // loop_footer_branch
          %1149 = sbr.rel target = $region920
        $region925: #{tpu_custom_call.1} parent=917 // loop_exit
          _
      $region918: #{tpu_custom_call.1} parent=902 // pred_fallthru
        _
    $region903: #{tpu_custom_call.1} parent=1 // pred_fallthru
      _
    // Predicated region
    $region904: #{tpu_custom_call.1} parent=1 // pred_check
      _
    $region905: #{tpu_custom_call.1} parent=1 // pred_check_branch
      %1132 = sbr.rel (0) target = $region907
    $region906: #{tpu_custom_call.1} parent=1 // pred_region
      %s1134 = ssub.s32 2, 1
      loop: start=0, step=1, limit=1
      $region908: #{tpu_custom_call.1} parent=906 // loop_pre_header
        _
      $region909: #{tpu_custom_call.1} parent=906 // loop_header
        %s1136 = sphi 0, %s1140
        %p1137 = scmp.ge.s32.totalorder %s1136, 1
        %s1141 = sphi %s1126, %s1126
        %s1142 = sphi %s1127, %s1127
      $region910: #{tpu_custom_call.1} parent=906 // loop_header_branch
        %1139 = sbr.rel (%p1137) target = $region914
      $region911: #{tpu_custom_call.1} parent=906 // loop_body
        %v1143 = vld [vmem:[%s1141] sm:%s1134]
        %1144 = vst [vmem:[%s1142] sm:%s1134] %v1143
      $region912: #{tpu_custom_call.1} parent=906 // loop_footer
        %s1140 = sadd.s32 1, %s1136
      $region913: #{tpu_custom_call.1} parent=906 // loop_footer_branch
        %1135 = sbr.rel target = $region909
      $region914: #{tpu_custom_call.1} parent=906 // loop_exit
        _
    $region907: #{tpu_custom_call.1} parent=1 // pred_fallthru
      _
    // Predicated region
    $region926: #{tpu_custom_call.1} parent=1 // pred_check
      _
    $region927: #{tpu_custom_call.1} parent=1 // pred_check_branch
      %1161 = sbr.rel (0) target = $region929
    $region928: #{tpu_custom_call.1} parent=1 // pred_region
      %1162 = vsyncadd %s1128, 16
    $region929: #{tpu_custom_call.1} parent=1 // pred_fallthru
      _
    %s1163 = sld [smem:[#allocation6 + $0xf]]
    %s1164 = scalar_lea.vmem %s2, %s1163
    %s1165 = scalar_lea.vmem [#allocation2], 15
    %s1166 = scalar_lea.sflag [#allocation4], 15
    // Predicated region
    $region930: #{tpu_custom_call.1} parent=1 // pred_check
      _
    $region931: #{tpu_custom_call.1} parent=1 // pred_check_branch
      %1168 = sbr.rel target = $region933
    $region932: #{tpu_custom_call.1} parent=1 // pred_region
      // Predicated region
      $region945: #{tpu_custom_call.1} parent=932 // pred_check
        _
      $region946: #{tpu_custom_call.1} parent=932 // pred_check_branch
        %1184 = sbr.rel (0) target = $region948
      $region947: #{tpu_custom_call.1} parent=932 // pred_region
        %s1186 = ssub.s32 2, 1
        loop: start=0, step=1, limit=1
        $region949: #{tpu_custom_call.1} parent=947 // loop_pre_header
          _
        $region950: #{tpu_custom_call.1} parent=947 // loop_header
          %s1188 = sphi 0, %s1192
          %p1189 = scmp.ge.s32.totalorder %s1188, 1
          %s1193 = sphi %s1164, %s1164
          %s1194 = sphi %s1165, %s1165
        $region951: #{tpu_custom_call.1} parent=947 // loop_header_branch
          %1191 = sbr.rel (%p1189) target = $region955
        $region952: #{tpu_custom_call.1} parent=947 // loop_body
          %v1195 = vld [vmem:[%s1193] sm:%s1186]
          %1196 = vst [vmem:[%s1194] sm:%s1186] %v1195
        $region953: #{tpu_custom_call.1} parent=947 // loop_footer
          %s1192 = sadd.s32 1, %s1188
        $region954: #{tpu_custom_call.1} parent=947 // loop_footer_branch
          %1187 = sbr.rel target = $region950
        $region955: #{tpu_custom_call.1} parent=947 // loop_exit
          _
      $region948: #{tpu_custom_call.1} parent=932 // pred_fallthru
        _
    $region933: #{tpu_custom_call.1} parent=1 // pred_fallthru
      _
    // Predicated region
    $region934: #{tpu_custom_call.1} parent=1 // pred_check
      _
    $region935: #{tpu_custom_call.1} parent=1 // pred_check_branch
      %1170 = sbr.rel (0) target = $region937
    $region936: #{tpu_custom_call.1} parent=1 // pred_region
      %s1172 = ssub.s32 2, 1
      loop: start=0, step=1, limit=1
      $region938: #{tpu_custom_call.1} parent=936 // loop_pre_header
        _
      $region939: #{tpu_custom_call.1} parent=936 // loop_header
        %s1174 = sphi 0, %s1178
        %p1175 = scmp.ge.s32.totalorder %s1174, 1
        %s1179 = sphi %s1164, %s1164
        %s1180 = sphi %s1165, %s1165
      $region940: #{tpu_custom_call.1} parent=936 // loop_header_branch
        %1177 = sbr.rel (%p1175) target = $region944
      $region941: #{tpu_custom_call.1} parent=936 // loop_body
        %v1181 = vld [vmem:[%s1179] sm:%s1172]
        %1182 = vst [vmem:[%s1180] sm:%s1172] %v1181
      $region942: #{tpu_custom_call.1} parent=936 // loop_footer
        %s1178 = sadd.s32 1, %s1174
      $region943: #{tpu_custom_call.1} parent=936 // loop_footer_branch
        %1173 = sbr.rel target = $region939
      $region944: #{tpu_custom_call.1} parent=936 // loop_exit
        _
    $region937: #{tpu_custom_call.1} parent=1 // pred_fallthru
      _
    // Predicated region
    $region956: #{tpu_custom_call.1} parent=1 // pred_check
      _
    $region957: #{tpu_custom_call.1} parent=1 // pred_check_branch
      %1199 = sbr.rel (0) target = $region959
    $region958: #{tpu_custom_call.1} parent=1 // pred_region
      %1200 = vsyncadd %s1166, 16
    $region959: #{tpu_custom_call.1} parent=1 // pred_fallthru
      _
    %s1201 = scalar_lea.vmem %s3, %s1163
    %s1202 = scalar_lea.vmem [#allocation3], 15
    %s1203 = scalar_lea.sflag [#allocation4], 31
    // Predicated region
    $region960: #{tpu_custom_call.1} parent=1 // pred_check
      _
    $region961: #{tpu_custom_call.1} parent=1 // pred_check_branch
      %1205 = sbr.rel target = $region963
    $region962: #{tpu_custom_call.1} parent=1 // pred_region
      // Predicated region
      $region975: #{tpu_custom_call.1} parent=962 // pred_check
        _
      $region976: #{tpu_custom_call.1} parent=962 // pred_check_branch
        %1221 = sbr.rel (0) target = $region978
      $region977: #{tpu_custom_call.1} parent=962 // pred_region
        %s1223 = ssub.s32 2, 1
        loop: start=0, step=1, limit=1
        $region979: #{tpu_custom_call.1} parent=977 // loop_pre_header
          _
        $region980: #{tpu_custom_call.1} parent=977 // loop_header
          %s1225 = sphi 0, %s1229
          %p1226 = scmp.ge.s32.totalorder %s1225, 1
          %s1230 = sphi %s1201, %s1201
          %s1231 = sphi %s1202, %s1202
        $region981: #{tpu_custom_call.1} parent=977 // loop_header_branch
          %1228 = sbr.rel (%p1226) target = $region985
        $region982: #{tpu_custom_call.1} parent=977 // loop_body
          %v1232 = vld [vmem:[%s1230] sm:%s1223]
          %1233 = vst [vmem:[%s1231] sm:%s1223] %v1232
        $region983: #{tpu_custom_call.1} parent=977 // loop_footer
          %s1229 = sadd.s32 1, %s1225
        $region984: #{tpu_custom_call.1} parent=977 // loop_footer_branch
          %1224 = sbr.rel target = $region980
        $region985: #{tpu_custom_call.1} parent=977 // loop_exit
          _
      $region978: #{tpu_custom_call.1} parent=962 // pred_fallthru
        _
    $region963: #{tpu_custom_call.1} parent=1 // pred_fallthru
      _
    // Predicated region
    $region964: #{tpu_custom_call.1} parent=1 // pred_check
      _
    $region965: #{tpu_custom_call.1} parent=1 // pred_check_branch
      %1207 = sbr.rel (0) target = $region967
    $region966: #{tpu_custom_call.1} parent=1 // pred_region
      %s1209 = ssub.s32 2, 1
      loop: start=0, step=1, limit=1
      $region968: #{tpu_custom_call.1} parent=966 // loop_pre_header
        _
      $region969: #{tpu_custom_call.1} parent=966 // loop_header
        %s1211 = sphi 0, %s1215
        %p1212 = scmp.ge.s32.totalorder %s1211, 1
        %s1216 = sphi %s1201, %s1201
        %s1217 = sphi %s1202, %s1202
      $region970: #{tpu_custom_call.1} parent=966 // loop_header_branch
        %1214 = sbr.rel (%p1212) target = $region974
      $region971: #{tpu_custom_call.1} parent=966 // loop_body
        %v1218 = vld [vmem:[%s1216] sm:%s1209]
        %1219 = vst [vmem:[%s1217] sm:%s1209] %v1218
      $region972: #{tpu_custom_call.1} parent=966 // loop_footer
        %s1215 = sadd.s32 1, %s1211
      $region973: #{tpu_custom_call.1} parent=966 // loop_footer_branch
        %1210 = sbr.rel target = $region969
      $region974: #{tpu_custom_call.1} parent=966 // loop_exit
        _
    $region967: #{tpu_custom_call.1} parent=1 // pred_fallthru
      _
    // Predicated region
    $region986: #{tpu_custom_call.1} parent=1 // pred_check
      _
    $region987: #{tpu_custom_call.1} parent=1 // pred_check_branch
      %1236 = sbr.rel (0) target = $region989
    $region988: #{tpu_custom_call.1} parent=1 // pred_region
      %1237 = vsyncadd %s1203, 16
    $region989: #{tpu_custom_call.1} parent=1 // pred_fallthru
      _
    %s1238 = smul.u32 1, 1
    %s1239 = sshll.u32 %s1238, 4
    %1240 = dma.done [#allocation4], %s1239
    %s1241 = sshll.u32 %s1238, 4
    %1242 = dma.done %s78, %s1241
    %s1243 = sshll.u32 %s1238, 4
    %1244 = dma.done %s116, %s1243
    %s1245 = sshll.u32 %s1238, 4
    %1246 = dma.done %s153, %s1245
    %s1247 = sshll.u32 %s1238, 4
    %1248 = dma.done %s191, %s1247
    %s1249 = sshll.u32 %s1238, 4
    %1250 = dma.done %s228, %s1249
    %s1251 = sshll.u32 %s1238, 4
    %1252 = dma.done %s266, %s1251
    %s1253 = sshll.u32 %s1238, 4
    %1254 = dma.done %s303, %s1253
    %s1255 = sshll.u32 %s1238, 4
    %1256 = dma.done %s341, %s1255
    %s1257 = sshll.u32 %s1238, 4
    %1258 = dma.done %s378, %s1257
    %s1259 = sshll.u32 %s1238, 4
    %1260 = dma.done %s416, %s1259
    %s1261 = sshll.u32 %s1238, 4
    %1262 = dma.done %s453, %s1261
    %s1263 = sshll.u32 %s1238, 4
    %1264 = dma.done %s491, %s1263
    %s1265 = sshll.u32 %s1238, 4
    %1266 = dma.done %s528, %s1265
    %s1267 = sshll.u32 %s1238, 4
    %1268 = dma.done %s566, %s1267
    %s1269 = sshll.u32 %s1238, 4
    %1270 = dma.done %s603, %s1269
    %s1271 = sshll.u32 %s1238, 4
    %1272 = dma.done %s641, %s1271
    %s1273 = sshll.u32 %s1238, 4
    %1274 = dma.done %s678, %s1273
    %s1275 = sshll.u32 %s1238, 4
    %1276 = dma.done %s716, %s1275
    %s1277 = sshll.u32 %s1238, 4
    %1278 = dma.done %s753, %s1277
    %s1279 = sshll.u32 %s1238, 4
    %1280 = dma.done %s791, %s1279
    %s1281 = sshll.u32 %s1238, 4
    %1282 = dma.done %s828, %s1281
    %s1283 = sshll.u32 %s1238, 4
    %1284 = dma.done %s866, %s1283
    %s1285 = sshll.u32 %s1238, 4
    %1286 = dma.done %s903, %s1285
    %s1287 = sshll.u32 %s1238, 4
    %1288 = dma.done %s941, %s1287
    %s1289 = sshll.u32 %s1238, 4
    %1290 = dma.done %s978, %s1289
    %s1291 = sshll.u32 %s1238, 4
    %1292 = dma.done %s1016, %s1291
    %s1293 = sshll.u32 %s1238, 4
    %1294 = dma.done %s1053, %s1293
    %s1295 = sshll.u32 %s1238, 4
    %1296 = dma.done %s1091, %s1295
    %s1297 = sshll.u32 %s1238, 4
    %1298 = dma.done %s1128, %s1297
    %s1299 = sshll.u32 %s1238, 4
    %1300 = dma.done %s1166, %s1299
    %s1301 = sshll.u32 %s1238, 4
    %1302 = dma.done %s1203, %s1301
    %v1303 = vld [vmem:[#allocation2] sm:$0xff]
    %v1304 = vld [vmem:[#allocation2 + $0x8] sm:$0xff]
    %v1305 = vld [vmem:[#allocation3] sm:$0xff]
    %v1306 = vld [vmem:[#allocation3 + $0x8] sm:$0xff]
    %v1307 = vld [vmem:[%s4] sm:$0xff]
    %v1308 = vld [vmem:[%s4 + $0x8] sm:$0xff]
    %v1309 = vld [vmem:[%s4 + $0x10] sm:$0xff]
    %v1310 = vld [vmem:[%s4 + $0x18] sm:$0xff]
    %v1311 = vld [vmem:[%s4 + $0x20] sm:$0xff]
    %v1312 = vld [vmem:[%s4 + $0x28] sm:$0xff]
    %v1313 = vld [vmem:[%s5] sm:$0x1]
    %v1315 = vperm.slane %v1313, 0
    %vm1317 = vcmask 261120
    %v1319 = vsel %vm1317, %v1303, 0
    %v1322 = vsel %vm1317, %v1304, 0
    %v1325 = vsel %vm1317, %v1307, 0
    %v1328 = vsel %vm1317, %v1308, 0
    %v1331 = vsel %vm1317, %v1309, 0
    %v1334 = vsel %vm1317, %v1310, 0
    %v1337 = vsel %vm1317, %v1311, 0
    %v1340 = vsel %vm1317, %v1312, 0
    %1342 = vmatpush.xpose.msra.mxu0 0.0
    %1343 = vmatpush.xpose.msra.mxu0 0.0
    %1344 = vmatpush.xpose.msra.mxu0 0.0
    %1345 = vmatpush.xpose.msra.mxu0 0.0
    %1346 = vmatpush.xpose.msra.mxu0 0.0
    %1347 = vmatpush.xpose.msra.mxu0 0.0
    %1348 = vmatpush.xpose.msra.mxu0 0.0
    %1349 = vmatpush.xpose.msra.mxu0 0.0
    %1350 = vmatpush.xpose.msra.mxu0 0.0
    %1351 = vmatpush.xpose.msra.mxu0 0.0
    %1352 = vmatpush.xpose.msra.mxu0 %v1340
    %1353 = vmatpush.xpose.msra.mxu0 %v1337
    %1354 = vmatpush.xpose.msra.mxu0 %v1334
    %1355 = vmatpush.xpose.msra.mxu0 %v1331
    %1356 = vmatpush.xpose.msra.mxu0 %v1328
    %1357 = vmatpush.xpose.msra.mxu0 %v1325
    %1358 = vmatmul.f32.gmra.mxu0 %v1319
    %v1359 = vpop.f32.mrf.mxu0
    %v1360 = vadd.f32 %v1315, %v1359
    %1361 = vmatmul.f32.gmra.mxu0 %v1322
    %v1362 = vpop.f32.mrf.mxu0
    %v1363 = vadd.f32 %v1315, %v1362
    %1364 = vdwg.mxu0
    %v1365 = vstv %s40
    %v1366 = vmul.f32 %v1365, %v1360
    %v1367 = vmul.f32 %v1365, %v1363
    %v1368 = vtanh.pop %v1366
    %v1369 = vtanh.pop %v1367
    %v1370 = vld [vmem:[%s6] sm:$0xff]
    %v1371 = vld [vmem:[%s6 + $0x8] sm:$0xff]
    %v1372 = vld [vmem:[%s6 + $0x10] sm:$0xff]
    %v1373 = vld [vmem:[%s6 + $0x18] sm:$0xff]
    %v1374 = vld [vmem:[%s6 + $0x20] sm:$0xff]
    %v1375 = vld [vmem:[%s6 + $0x28] sm:$0xff]
    %v1376 = vld [vmem:[%s7] sm:$0x1]
    %v1378 = vperm.slane %v1376, 0
    %v1381 = vsel %vm1317, %v1305, 0
    %v1384 = vsel %vm1317, %v1306, 0
    %v1387 = vsel %vm1317, %v1370, 0
    %v1390 = vsel %vm1317, %v1371, 0
    %v1393 = vsel %vm1317, %v1372, 0
    %v1396 = vsel %vm1317, %v1373, 0
    %v1399 = vsel %vm1317, %v1374, 0
    %v1402 = vsel %vm1317, %v1375, 0
    %1404 = vmatpush.xpose.msra.mxu0 0.0
    %1405 = vmatpush.xpose.msra.mxu0 0.0
    %1406 = vmatpush.xpose.msra.mxu0 0.0
    %1407 = vmatpush.xpose.msra.mxu0 0.0
    %1408 = vmatpush.xpose.msra.mxu0 0.0
    %1409 = vmatpush.xpose.msra.mxu0 0.0
    %1410 = vmatpush.xpose.msra.mxu0 0.0
    %1411 = vmatpush.xpose.msra.mxu0 0.0
    %1412 = vmatpush.xpose.msra.mxu0 0.0
    %1413 = vmatpush.xpose.msra.mxu0 0.0
    %1414 = vmatpush.xpose.msra.mxu0 %v1402
    %1415 = vmatpush.xpose.msra.mxu0 %v1399
    %1416 = vmatpush.xpose.msra.mxu0 %v1396
    %1417 = vmatpush.xpose.msra.mxu0 %v1393
    %1418 = vmatpush.xpose.msra.mxu0 %v1390
    %1419 = vmatpush.xpose.msra.mxu0 %v1387
    %1420 = vmatmul.f32.gmra.mxu0 %v1381
    %v1421 = vpop.f32.mrf.mxu0
    %v1422 = vadd.f32 %v1378, %v1421
    %1423 = vmatmul.f32.gmra.mxu0 %v1384
    %v1424 = vpop.f32.mrf.mxu0
    %v1425 = vadd.f32 %v1378, %v1424
    %1426 = vdwg.mxu0
    %v1427 = vmul.f32 %v1365, %v1422
    %v1428 = vmul.f32 %v1365, %v1425
    %v1429 = vtanh.pop %v1427
    %v1430 = vtanh.pop %v1428
    %vm1431 = vcmask 392192
    %v1433 = vsel %vm1431, %v1368, 0
    %v1436 = vsel %vm1431, %v1369, 0
    %v1439 = vsel %vm1431, %v1429, 0
    %v1442 = vsel %vm1431, %v1430, 0
    %1444 = vmatpush.xpose.msra.mxu0 0.0
    %1445 = vmatpush.xpose.msra.mxu0 0.0
    %1446 = vmatpush.xpose.msra.mxu0 0.0
    %1447 = vmatpush.xpose.msra.mxu0 0.0
    %1448 = vmatpush.xpose.msra.mxu0 0.0
    %1449 = vmatpush.xpose.msra.mxu0 0.0
    %1450 = vmatpush.xpose.msra.mxu0 0.0
    %1451 = vmatpush.xpose.msra.mxu0 0.0
    %1452 = vmatpush.xpose.msra.mxu0 0.0
    %1453 = vmatpush.xpose.msra.mxu0 0.0
    %1454 = vmatpush.xpose.msra.mxu0 0.0
    %1455 = vmatpush.xpose.msra.mxu0 0.0
    %1456 = vmatpush.xpose.msra.mxu0 0.0
    %1457 = vmatpush.xpose.msra.mxu0 0.0
    %1458 = vmatpush.xpose.msra.mxu0 %v1442
    %1459 = vmatpush.xpose.msra.mxu0 %v1439
    %1460 = vmatmul.f32.gmra.mxu0 %v1433
    %v1461 = vpop.f32.mrf.mxu0
    %v1462 = vadd.f32 0.0, %v1461
    %1463 = vmatmul.f32.gmra.mxu0 %v1436
    %v1464 = vpop.f32.mrf.mxu0
    %v1465 = vadd.f32 0.0, %v1464
    %1466 = vdwg.mxu0
    %1467 = vxpose.xlu0.b32.start [1/16] %v1462, 128
    %1468 = vxpose.xlu0.b32.cont [2/16] %v1465, 128
    %1469 = vxpose.xlu0.b32.cont [3/16] 0.0, 128
    %1470 = vxpose.xlu0.b32.cont [4/16] 0.0, 128
    %1471 = vxpose.xlu0.b32.cont [5/16] 0.0, 128
    %1472 = vxpose.xlu0.b32.cont [6/16] 0.0, 128
    %1473 = vxpose.xlu0.b32.cont [7/16] 0.0, 128
    %1474 = vxpose.xlu0.b32.cont [8/16] 0.0, 128
    %1475 = vxpose.xlu0.b32.cont [9/16] 0.0, 128
    %1476 = vxpose.xlu0.b32.cont [10/16] 0.0, 128
    %1477 = vxpose.xlu0.b32.cont [11/16] 0.0, 128
    %1478 = vxpose.xlu0.b32.cont [12/16] 0.0, 128
    %1479 = vxpose.xlu0.b32.cont [13/16] 0.0, 128
    %1480 = vxpose.xlu0.b32.cont [14/16] 0.0, 128
    %1481 = vxpose.xlu0.b32.cont [15/16] 0.0, 128
    %1482 = vxpose.xlu0.b32.end [16/16] 0.0, 128
    %v1483 = vpop.trf.xlu0
    %v1484 = vpop.trf.xlu0
    %v1485 = vpop.trf.xlu0
    %v1486 = vpop.trf.xlu0
    %v1487 = vpop.trf.xlu0
    %v1488 = vpop.trf.xlu0
    %v1489 = vpop.trf.xlu0
    %v1490 = vpop.trf.xlu0
    %v1491 = vpop.trf.xlu0
    %v1492 = vpop.trf.xlu0
    %v1493 = vpop.trf.xlu0
    %v1494 = vpop.trf.xlu0
    %v1495 = vpop.trf.xlu0
    %v1496 = vpop.trf.xlu0
    %v1497 = vpop.trf.xlu0
    %v1498 = vpop.trf.xlu0
    %v1499 = vsub.f32 %v1462, %v1483
    %v1500 = vsub.f32 %v1465, %v1484
    %v1501 = vmul.f32 %v1365, %v1499
    %v1502 = vmul.f32 %v1365, %v1500
    %v1503 = vtanh.pop %v1501
    %v1504 = vtanh.pop %v1502
    %v1505 = vmax.f32 %v1503, 0.0
    %v1506 = vmax.f32 %v1504, 0.0
    %vm1507 = vcmask 130048
    %1508 = vst.msk [vmem:[#allocation9] sm:$0xff] %vm1507, %v1505
    %1509 = vst.msk [vmem:[#allocation9 + $0x8] sm:$0xff] %vm1507, %v1506
    // Predicated region
    $region990: #{tpu_custom_call.1} parent=1 // pred_check
      _
    $region991: #{tpu_custom_call.1} parent=1 // pred_check_branch
      %1511 = sbr.rel (0) target = $region993
    $region992: #{tpu_custom_call.1} parent=1 // pred_region
      %1513 = vsyncadd [#allocation7], 0
      %s1514 = sshll.u32 [#allocation9], 4
      %s1515 = int_to_ptr.vmem [resolvable:$true] %s1514
      %s1516 = sshll.u32 %s8, 4
      %s1517 = int_to_ptr.hbm [resolvable:$true] %s1516
      %1522 = dma.vmem_to_hbm [thread:$0]  %s1515, 256, %s1517, [#allocation7], 128, 128, 8
    $region993: #{tpu_custom_call.1} parent=1 // pred_fallthru
      _
    // Predicated region
    $region994: #{tpu_custom_call.1} parent=1 // pred_check
      _
    $region995: #{tpu_custom_call.1} parent=1 // pred_check_branch
      %1524 = sbr.rel (0) target = $region997
    $region996: #{tpu_custom_call.1} parent=1 // pred_region
      %1526 = dma.done [#allocation7], 256
    $region997: #{tpu_custom_call.1} parent=1 // pred_fallthru
      _
    %1527 = vsyncpa [#allocation7], 1
    %1528 = vsyncpa [#allocation8], 1
  %1529 = vsyncmov [#allocation4]
  %s1530 = vpop.sfrf %1529
  %p1531 = scmp.eq.s32.totalorder %s1530, 0
  %p1532 = pneg %p1531
  %1534 = shalt.err (%p1532)
  %s1535 = scalar_lea.sflag [#allocation4], 1
  %1536 = vsyncmov %s1535
  %s1537 = vpop.sfrf %1536
  %p1538 = scmp.eq.s32.totalorder %s1537, 0
  %p1539 = pneg %p1538
  %1541 = shalt.err (%p1539)
  %s1542 = scalar_lea.sflag [#allocation4], 2
  %1543 = vsyncmov %s1542
  %s1544 = vpop.sfrf %1543
  %p1545 = scmp.eq.s32.totalorder %s1544, 0
  %p1546 = pneg %p1545
  %1548 = shalt.err (%p1546)
  %s1549 = scalar_lea.sflag [#allocation4], 3
  %1550 = vsyncmov %s1549
  %s1551 = vpop.sfrf %1550
  %p1552 = scmp.eq.s32.totalorder %s1551, 0
  %p1553 = pneg %p1552
  %1555 = shalt.err (%p1553)
  %s1556 = scalar_lea.sflag [#allocation4], 4
  %1557 = vsyncmov %s1556
  %s1558 = vpop.sfrf %1557
  %p1559 = scmp.eq.s32.totalorder %s1558, 0
  %p1560 = pneg %p1559
  %1562 = shalt.err (%p1560)
  %s1563 = scalar_lea.sflag [#allocation4], 5
  %1564 = vsyncmov %s1563
  %s1565 = vpop.sfrf %1564
  %p1566 = scmp.eq.s32.totalorder %s1565, 0
  %p1567 = pneg %p1566
  %1569 = shalt.err (%p1567)
  %s1570 = scalar_lea.sflag [#allocation4], 6
  %1571 = vsyncmov %s1570
  %s1572 = vpop.sfrf %1571
  %p1573 = scmp.eq.s32.totalorder %s1572, 0
  %p1574 = pneg %p1573
  %1576 = shalt.err (%p1574)
  %s1577 = scalar_lea.sflag [#allocation4], 7
  %1578 = vsyncmov %s1577
  %s1579 = vpop.sfrf %1578
  %p1580 = scmp.eq.s32.totalorder %s1579, 0
  %p1581 = pneg %p1580
  %1583 = shalt.err (%p1581)
  %s1584 = scalar_lea.sflag [#allocation4], 8
  %1585 = vsyncmov %s1584
  %s1586 = vpop.sfrf %1585
  %p1587 = scmp.eq.s32.totalorder %s1586, 0
  %p1588 = pneg %p1587
  %1590 = shalt.err (%p1588)
  %s1591 = scalar_lea.sflag [#allocation4], 9
  %1592 = vsyncmov %s1591
  %s1593 = vpop.sfrf %1592
  %p1594 = scmp.eq.s32.totalorder %s1593, 0
  %p1595 = pneg %p1594
  %1597 = shalt.err (%p1595)
  %s1598 = scalar_lea.sflag [#allocation4], 10
  %1599 = vsyncmov %s1598
  %s1600 = vpop.sfrf %1599
  %p1601 = scmp.eq.s32.totalorder %s1600, 0
  %p1602 = pneg %p1601
  %1604 = shalt.err (%p1602)
  %s1605 = scalar_lea.sflag [#allocation4], 11
  %1606 = vsyncmov %s1605
  %s1607 = vpop.sfrf %1606
  %p1608 = scmp.eq.s32.totalorder %s1607, 0
  %p1609 = pneg %p1608
  %1611 = shalt.err (%p1609)
  %s1612 = scalar_lea.sflag [#allocation4], 12
  %1613 = vsyncmov %s1612
  %s1614 = vpop.sfrf %1613
  %p1615 = scmp.eq.s32.totalorder %s1614, 0
  %p1616 = pneg %p1615
  %1618 = shalt.err (%p1616)
  %s1619 = scalar_lea.sflag [#allocation4], 13
  %1620 = vsyncmov %s1619
  %s1621 = vpop.sfrf %1620
  %p1622 = scmp.eq.s32.totalorder %s1621, 0
  %p1623 = pneg %p1622
  %1625 = shalt.err (%p1623)
  %s1626 = scalar_lea.sflag [#allocation4], 14
  %1627 = vsyncmov %s1626
  %s1628 = vpop.sfrf %1627
  %p1629 = scmp.eq.s32.totalorder %s1628, 0
  %p1630 = pneg %p1629
  %1632 = shalt.err (%p1630)
  %s1633 = scalar_lea.sflag [#allocation4], 15
  %1634 = vsyncmov %s1633
  %s1635 = vpop.sfrf %1634
  %p1636 = scmp.eq.s32.totalorder %s1635, 0
  %p1637 = pneg %p1636
  %1639 = shalt.err (%p1637)
  %s1640 = scalar_lea.sflag [#allocation4], 16
  %1641 = vsyncmov %s1640
  %s1642 = vpop.sfrf %1641
  %p1643 = scmp.eq.s32.totalorder %s1642, 0
  %p1644 = pneg %p1643
  %1646 = shalt.err (%p1644)
  %s1647 = scalar_lea.sflag [#allocation4], 17
  %1648 = vsyncmov %s1647
  %s1649 = vpop.sfrf %1648
  %p1650 = scmp.eq.s32.totalorder %s1649, 0
  %p1651 = pneg %p1650
  %1653 = shalt.err (%p1651)
  %s1654 = scalar_lea.sflag [#allocation4], 18
  %1655 = vsyncmov %s1654
  %s1656 = vpop.sfrf %1655
  %p1657 = scmp.eq.s32.totalorder %s1656, 0
  %p1658 = pneg %p1657
  %1660 = shalt.err (%p1658)
  %s1661 = scalar_lea.sflag [#allocation4], 19
  %1662 = vsyncmov %s1661
  %s1663 = vpop.sfrf %1662
  %p1664 = scmp.eq.s32.totalorder %s1663, 0
  %p1665 = pneg %p1664
  %1667 = shalt.err (%p1665)
  %s1668 = scalar_lea.sflag [#allocation4], 20
  %1669 = vsyncmov %s1668
  %s1670 = vpop.sfrf %1669
  %p1671 = scmp.eq.s32.totalorder %s1670, 0
  %p1672 = pneg %p1671
  %1674 = shalt.err (%p1672)
  %s1675 = scalar_lea.sflag [#allocation4], 21
  %1676 = vsyncmov %s1675
  %s1677 = vpop.sfrf %1676
  %p1678 = scmp.eq.s32.totalorder %s1677, 0
  %p1679 = pneg %p1678
  %1681 = shalt.err (%p1679)
  %s1682 = scalar_lea.sflag [#allocation4], 22
  %1683 = vsyncmov %s1682
  %s1684 = vpop.sfrf %1683
  %p1685 = scmp.eq.s32.totalorder %s1684, 0
  %p1686 = pneg %p1685
  %1688 = shalt.err (%p1686)
  %s1689 = scalar_lea.sflag [#allocation4], 23
  %1690 = vsyncmov %s1689
  %s1691 = vpop.sfrf %1690
  %p1692 = scmp.eq.s32.totalorder %s1691, 0
  %p1693 = pneg %p1692
  %1695 = shalt.err (%p1693)
  %s1696 = scalar_lea.sflag [#allocation4], 24
  %1697 = vsyncmov %s1696
  %s1698 = vpop.sfrf %1697
  %p1699 = scmp.eq.s32.totalorder %s1698, 0
  %p1700 = pneg %p1699
  %1702 = shalt.err (%p1700)
  %s1703 = scalar_lea.sflag [#allocation4], 25
  %1704 = vsyncmov %s1703
  %s1705 = vpop.sfrf %1704
  %p1706 = scmp.eq.s32.totalorder %s1705, 0
  %p1707 = pneg %p1706
  %1709 = shalt.err (%p1707)
  %s1710 = scalar_lea.sflag [#allocation4], 26
  %1711 = vsyncmov %s1710
  %s1712 = vpop.sfrf %1711
  %p1713 = scmp.eq.s32.totalorder %s1712, 0
  %p1714 = pneg %p1713
  %1716 = shalt.err (%p1714)
  %s1717 = scalar_lea.sflag [#allocation4], 27
  %1718 = vsyncmov %s1717
  %s1719 = vpop.sfrf %1718
  %p1720 = scmp.eq.s32.totalorder %s1719, 0
  %p1721 = pneg %p1720
  %1723 = shalt.err (%p1721)
  %s1724 = scalar_lea.sflag [#allocation4], 28
  %1725 = vsyncmov %s1724
  %s1726 = vpop.sfrf %1725
  %p1727 = scmp.eq.s32.totalorder %s1726, 0
  %p1728 = pneg %p1727
  %1730 = shalt.err (%p1728)
  %s1731 = scalar_lea.sflag [#allocation4], 29
  %1732 = vsyncmov %s1731
  %s1733 = vpop.sfrf %1732
  %p1734 = scmp.eq.s32.totalorder %s1733, 0
  %p1735 = pneg %p1734
  %1737 = shalt.err (%p1735)
  %s1738 = scalar_lea.sflag [#allocation4], 30
  %1739 = vsyncmov %s1738
  %s1740 = vpop.sfrf %1739
  %p1741 = scmp.eq.s32.totalorder %s1740, 0
  %p1742 = pneg %p1741
  %1744 = shalt.err (%p1742)
  %s1745 = scalar_lea.sflag [#allocation4], 31
  %1746 = vsyncmov %s1745
  %s1747 = vpop.sfrf %1746
  %p1748 = scmp.eq.s32.totalorder %s1747, 0
  %p1749 = pneg %p1748
  %1751 = shalt.err (%p1749)

</llo_original>
